<compile_context>
chip_gen: v6e
topology: v6e:2x2x1
jax: 0.10.0
libtpu: 0.0.40
codegen_flags: <defaults>
</compile_context>

<pallas_src>
import jax
import jax.numpy as jnp
from jax.experimental import pallas as pl
from jax.experimental.pallas import tpu as pltpu


def vqa_kernel(x_ref, img_ref,
               wih0_ref, whh0_ref, b0_ref,
               w1_ref, b1_ref,
               wstate_ref, bstate_ref,
               wimg_ref, bimg_ref,
               ws1_ref, bs1_ref,
               ws2_ref, bs2_ref,
               out_ref):
    T, Bb, E = x_ref.shape                 # time-major question block: (T, block_b, E)
    H = whh0_ref.shape[0]                  # whh0 is (H, 4H)
    f32 = jnp.float32
    cdt = whh0_ref.dtype                   # matmul compute dtype (bf16)

    # tanh(Embedding(ques)) -- gather done in wrapper glue, tanh (EUP, fp32) here.
    x = jnp.tanh(x_ref[...].astype(f32))                                  # (T, Bb, E)

    # Hoisted layer-0 input projection: one big MXU matmul over all timesteps.
    # Bb % 8 == 0 (enforced in wrapper) so the reshape is a tile-aligned free view.
    # Stored in bf16 to halve the live footprint; bias added per step in f32.
    x_flat = x.reshape(T * Bb, E).astype(cdt)                             # (T*Bb, E)
    x0 = jnp.dot(x_flat, wih0_ref[...],
                 preferred_element_type=f32).astype(cdt)                  # (T*Bb, 4H)

    whh0 = whh0_ref[...]                   # (H, 4H)   bf16   layer-0 recurrent
    w1 = w1_ref[...]                       # (2H, 4H)  bf16   fused [wih1; whh1]

    # Broadcast biases ONCE (JAX doesn't CSE broadcast_in_dim inside the unrolled loop).
    b0b = jnp.broadcast_to(b0_ref[...].astype(f32), (Bb, 4 * H))          # (Bb, 4H)
    b1b = jnp.broadcast_to(b1_ref[...].astype(f32), (Bb, 4 * H))          # (Bb, 4H)

    if H % 128 == 0:
        # Gate slices are vreg-aligned: plain sub-slices are fine.
        def gates_to_hc(gates, c):
            i = jax.nn.sigmoid(gates[:, 0 * H:1 * H])
            f = jax.nn.sigmoid(gates[:, 1 * H:2 * H])
            g = jnp.tanh(gates[:, 2 * H:3 * H])
            o = jax.nn.sigmoid(gates[:, 3 * H:4 * H])
            c_new = f * c + i * g
            return o * jnp.tanh(c_new), c_new
    else:
        # H < 128 (or non-multiple): do the EUP work on the FULL (Bb, 4H) vreg with a
        # lane mask (1 sigmoid + 1 tanh + select) instead of 5 masked sub-vreg ops.
        # TODO(synk): roll-based i/f/g/o alignment (XLU) instead of sub-vreg slices.
        lane = jax.lax.broadcasted_iota(jnp.int32, (Bb, 4 * H), 1)
        g_mask = (lane >= 2 * H) & (lane < 3 * H)

        def gates_to_hc(gates, c):
            act = jnp.where(g_mask, jnp.tanh(gates), jax.nn.sigmoid(gates))
            i = act[:, 0 * H:1 * H]
            f = act[:, 1 * H:2 * H]
            g = act[:, 2 * H:3 * H]
            o = act[:, 3 * H:4 * H]
            c_new = f * c + i * g
            return o * jnp.tanh(c_new), c_new

    zeros = jnp.zeros((Bb, H), f32)
    h0, c0, h1, c1 = zeros, zeros, zeros, zeros

    # Fully unrolled recurrence: 2 serially dependent MXU matmuls per timestep.
    # TODO(synk): hold whh0/w1 in MXU weight registers across the loop
    # (pltpu.matmul_push_rhs / matmul_acc_lhs / matmul_pop) to drop the per-step
    # RHS push from the serial critical path.
    for t in range(T):
        # static row-slice of the precomputed projection (no dynamic mid-axis slice)
        g0 = (x0[t * Bb:(t + 1) * Bb, :].astype(f32) + b0b
              + jnp.dot(h0.astype(cdt), whh0, preferred_element_type=f32))
        h0, c0 = gates_to_hc(g0, c0)
        # inter-layer dropout (p=0.5) is identity in eval mode
        hcat = jnp.concatenate([h0, h1], axis=1).astype(cdt)              # (Bb, 2H)
        g1 = jnp.dot(hcat, w1, preferred_element_type=f32) + b1b
        h1, c1 = gates_to_hc(g1, c1)

    # state = [h_layer0 | h_layer1 | c_layer0 | c_layer1]  (PyTorch h_n/c_n order)
    state = jnp.concatenate([h0, h1, c0, c1], axis=1)                     # (Bb, 4H)

    # Fused heads (state_dp/img_dp/score*_dp dropouts are identity in eval mode).
    # TODO(synk): train-mode dropout (RNG Bernoulli masks) intentionally out of scope.
    state_emb = jnp.tanh(jnp.dot(state.astype(cdt), wstate_ref[...],
                                 preferred_element_type=f32) + bstate_ref[...])
    img_emb = jnp.tanh(jnp.dot(img_ref[...].astype(cdt), wimg_ref[...],
                               preferred_element_type=f32) + bimg_ref[...])
    fused = state_emb * img_emb
    s1 = jnp.tanh(jnp.dot(fused.astype(cdt), ws1_ref[...],
                          preferred_element_type=f32) + bs1_ref[...])
    # ws2/bs2 columns are zero-padded to a 128 multiple -> lane-dense output stores.
    out = jnp.dot(s1.astype(cdt), ws2_ref[...],
                  preferred_element_type=f32) + bs2_ref[...]
    out_ref[...] = out.astype(out_ref.dtype)


def vqa_forward_pallas(ques_emb_tbe, img_feat, kp, output_size, *, block_b=None):
    """ques_emb_tbe: (T, B, E) time-major gathered embeddings; img_feat: (B, D_img).
    Returns (B, output_size) logits (padding added internally is sliced away)."""
    T, B, E = ques_emb_tbe.shape
    D_img = img_feat.shape[1]
    H = kp["whh0"].shape[0]
    emb_size = kp["wstate"].shape[1]
    O_pad = kp["ws2"].shape[1]             # lane-padded output width (multiple of 128)
    O = output_size

    weight_args = (kp["wih0"], kp["whh0"], kp["b0"],
                   kp["w1"], kp["b1"],
                   kp["wstate"], kp["bstate"],
                   kp["wimg"], kp["bimg"],
                   kp["ws1"], kp["bs1"],
                   kp["ws2"], kp["bs2"])

    # ------------- generation-aware VMEM budget & batch-block selection -------------
    try:
        vmem_cap = int(pltpu.get_tpu_info().vmem_capacity_bytes)
    except Exception:
        vmem_cap = 64 * 1024 * 1024        # conservative default (v7x per-TC VMEM)
    vmem_limit = int(vmem_cap * 0.75)      # ~48 MiB on v7x, ~96 MiB on v5e/v6e
    budget = int(vmem_limit * 0.8)         # headroom for compiler temporaries

    weight_bytes = sum(int(a.size) * a.dtype.itemsize for a in weight_args)  # x1: Buffered(1)

    def est_bytes(bb):
        inb = 2 * (T * bb * E * ques_emb_tbe.dtype.itemsize          # double-buffered x
                   + bb * D_img * img_feat.dtype.itemsize)           # double-buffered img
        outb = 2 * bb * O_pad * 4                                    # double-buffered out
        live = T * bb * 4 * H * 2          # bf16 x0, live across the whole recurrence
        live += T * bb * E * 4             # tanh'd activations feeding the projection
        live += bb * 4 * H * 4 * 6         # gates / h / c / bias working set (f32)
        live += bb * (emb_size + O_pad) * 4 * 2
        return weight_bytes + inb + outb + live

    # Pad batch to a sublane multiple so the (T,Bb,E)->(T*Bb,E) merge is a free view.
    B_pad8 = max(8, ((B + 7) // 8) * 8)
    two_cores = vmem_cap <= 64 * 1024 * 1024    # 64 MiB VMEM/TC -> v7x (2 TensorCores)

    if block_b is None:
        block_b = 8
        for bb in (512, 256, 128, 64, 32, 16, 8):
            if bb > B_pad8:
                continue
            if est_bytes(bb) > budget:
                continue
            if two_cores and B_pad8 >= 16:
                half = ((B_pad8 // 2 + 7) // 8) * 8   # keep >=2 grid steps on 2-TC chips
                if bb > half:
                    continue
            block_b = bb
            break
    assert block_b % 8 == 0

    B_full = ((B + block_b - 1) // block_b) * block_b
    ques_p = ques_emb_tbe
    img_p = img_feat
    if B_full != B:
        ques_p = jnp.pad(ques_emb_tbe, ((0, 0), (0, B_full - B), (0, 0)))
        img_p = jnp.pad(img_feat, ((0, B_full - B), (0, 0)))
    grid = (B_full // block_b,)

    # Advisory cost hint so XLA schedules neighbouring ops around this
    # latency-bound custom call.
    flops = 2 * B_full * T * (E * 4 * H + H * 4 * H + 2 * H * 4 * H)
    flops += 2 * B_full * (4 * H * emb_size + D_img * emb_size
                           + emb_size * O_pad + O_pad * O_pad)
    transcendentals = B_full * T * (E + 10 * H) + B_full * (2 * emb_size + O_pad)
    bytes_accessed = (weight_bytes
                      + int(ques_p.size) * ques_p.dtype.itemsize
                      + int(img_p.size) * img_p.dtype.itemsize
                      + B_full * O_pad * 4)

    def run(single_buffer_weights):
        w_kwargs = ({"pipeline_mode": pl.Buffered(1)} if single_buffer_weights else {})
        in_specs = [
            pl.BlockSpec((T, block_b, E), lambda b: (0, b, 0)),
            pl.BlockSpec((block_b, D_img), lambda b: (b, 0)),
        ] + [pl.BlockSpec(w.shape, lambda b: (0, 0), **w_kwargs) for w in weight_args]
        out_specs = pl.BlockSpec((block_b, O_pad), lambda b: (b, 0))
        return pl.pallas_call(
            vqa_kernel,
            out_shape=jax.ShapeDtypeStruct((B_full, O_pad), jnp.float32),
            grid=grid,
            in_specs=in_specs,
            out_specs=out_specs,
            compiler_params=pltpu.CompilerParams(
                dimension_semantics=("parallel",),
                vmem_limit_bytes=vmem_limit),
            cost_estimate=pl.CostEstimate(flops=int(flops),
                                          transcendentals=int(transcendentals),
                                          bytes_accessed=int(bytes_accessed)),
        )(ques_p, img_p, *weight_args)

    try:
        out = run(True)
    except Exception:
        # Safety net: fall back to default double-buffering if pipeline_mode /
        # Buffered(1) is rejected by this jax/Mosaic version.
        out = run(False)

    return out[:B, :O]


# ----------------------------- parameter plumbing ------------------------------

def make_params(key, dict_size, E, H, D_img, emb_size, O):
    """Parameters in PyTorch conventions (nn.Embedding / nn.LSTM / nn.Linear shapes)."""
    ks = jax.random.split(key, 20)
    u = lambda k, shape: jax.random.uniform(k, shape, jnp.float32, -0.1, 0.1)
    emb_table = u(ks[0], (dict_size, E)).at[0].set(0.0)     # padding_idx=0
    return {
        "emb_table": emb_table,
        "w_ih_l0": u(ks[1], (4 * H, E)), "w_hh_l0": u(ks[2], (4 * H, H)),
        "b_ih_l0": u(ks[3], (4 * H,)),   "b_hh_l0": u(ks[4], (4 * H,)),
        "w_ih_l1": u(ks[5], (4 * H, H)), "w_hh_l1": u(ks[6], (4 * H, H)),
        "b_ih_l1": u(ks[7], (4 * H,)),   "b_hh_l1": u(ks[8], (4 * H,)),
        "state_emb_w": u(ks[9], (emb_size, 4 * H)), "state_emb_b": u(ks[10], (emb_size,)),
        "img_emb_w": u(ks[11], (emb_size, D_img)),  "img_emb_b": u(ks[12], (emb_size,)),
        "score1_w": u(ks[13], (O, emb_size)),       "score1_b": u(ks[14], (O,)),
        "score2_w": u(ks[15], (O, O)),              "score2_b": u(ks[16], (O,)),
    }


def prep_kernel_params(p, weight_dtype=jnp.bfloat16):
    """Kernel layout: weights pre-transposed to (in, out) and cast to bf16 for the MXU;
    LSTM biases folded (b_ih+b_hh); layer-1 ih/hh weights concatenated for one matmul;
    score-head columns zero-padded to a multiple of 128 for lane-dense output stores."""
    f32 = jnp.float32
    O = p["score1_w"].shape[0]
    emb = p["state_emb_w"].shape[0]
    O_pad = ((O + 127) // 128) * 128

    ws1 = jnp.zeros((emb, O_pad), f32).at[:, :O].set(p["score1_w"].T)
    bs1 = jnp.zeros((1, O_pad), f32).at[:, :O].set(p["score1_b"])
    ws2 = jnp.zeros((O_pad, O_pad), f32).at[:O, :O].set(p["score2_w"].T)
    bs2 = jnp.zeros((1, O_pad), f32).at[:, :O].set(p["score2_b"])

    return {
        "wih0": p["w_ih_l0"].T.astype(weight_dtype),                   # (E, 4H)
        "whh0": p["w_hh_l0"].T.astype(weight_dtype),                   # (H, 4H)
        "b0": (p["b_ih_l0"] + p["b_hh_l0"])[None, :].astype(f32),      # (1, 4H)
        "w1": jnp.concatenate([p["w_ih_l1"].T, p["w_hh_l1"].T],
                              axis=0).astype(weight_dtype),            # (2H, 4H)
        "b1": (p["b_ih_l1"] + p["b_hh_l1"])[None, :].astype(f32),      # (1, 4H)
        "wstate": p["state_emb_w"].T.astype(weight_dtype),             # (4H, emb)
        "bstate": p["state_emb_b"][None, :].astype(f32),
        "wimg": p["img_emb_w"].T.astype(weight_dtype),                 # (D_img, emb)
        "bimg": p["img_emb_b"][None, :].astype(f32),
        "ws1": ws1.astype(weight_dtype),                               # (emb, O_pad)
        "bs1": bs1,
        "ws2": ws2.astype(weight_dtype),                               # (O_pad, O_pad)
        "bs2": bs2,
    }


def reference_forward(img_feat, ques, p):
    """Pure-JAX fp32 reference using un-transposed PyTorch-convention params and
    separate b_ih/b_hh, mirroring nn.LSTM / nn.Linear semantics (eval mode)."""
    B, T = ques.shape
    H = p["w_hh_l0"].shape[1]
    x_all = jnp.tanh(jnp.take(p["emb_table"], ques, axis=0))          # (B, T, E)

    def cell(x, h, c, w_ih, w_hh, b_ih, b_hh):
        gates = x @ w_ih.T + b_ih + h @ w_hh.T + b_hh
        i = jax.nn.sigmoid(gates[:, 0 * H:1 * H])
        f = jax.nn.sigmoid(gates[:, 1 * H:2 * H])
        g = jnp.tanh(gates[:, 2 * H:3 * H])
        o = jax.nn.sigmoid(gates[:, 3 * H:4 * H])
        c_new = f * c + i * g
        return o * jnp.tanh(c_new), c_new

    h0 = c0 = h1 = c1 = jnp.zeros((B, H), jnp.float32)
    for t in range(T):
        h0, c0 = cell(x_all[:, t, :], h0, c0,
                      p["w_ih_l0"], p["w_hh_l0"], p["b_ih_l0"], p["b_hh_l0"])
        h1, c1 = cell(h0, h1, c1,
                      p["w_ih_l1"], p["w_hh_l1"], p["b_ih_l1"], p["b_hh_l1"])

    state = jnp.concatenate([h0, h1, c0, c1], axis=1)
    state_emb = jnp.tanh(state @ p["state_emb_w"].T + p["state_emb_b"])
    img_emb = jnp.tanh(img_feat @ p["img_emb_w"].T + p["img_emb_b"])
    s1 = jnp.tanh((state_emb * img_emb) @ p["score1_w"].T + p["score1_b"])
    return s1 @ p["score2_w"].T + p["score2_b"]


if __name__ == "__main__":
    # small, module-consistent shapes
    dict_size, E, H, D_img, emb_size, O = 50, 32, 32, 64, 32, 16
    B, T = 2, 8

    key = jax.random.PRNGKey(0)
    k_param, k_ques, k_img = jax.random.split(key, 3)

    params = make_params(k_param, dict_size, E, H, D_img, emb_size, O)
    kparams = prep_kernel_params(params)

    ques = jax.random.randint(k_ques, (B, T), 0, dict_size, dtype=jnp.int32)
    img_feat = jax.random.uniform(k_img, (B, D_img), jnp.float32, -1.0, 1.0)

    # Embedding gather in plain-JAX glue; pass time-major (T, B, E) so the hoisted
    # layer-0 projection is one contiguous matmul and per-step slices are static.
    ques_emb_tbe = jnp.transpose(jnp.take(params["emb_table"], ques, axis=0), (1, 0, 2))

    out = vqa_forward_pallas(ques_emb_tbe, img_feat, kparams, O)
    out = jax.block_until_ready(out)

    ref = reference_forward(img_feat, ques, params)
    assert out.shape == (B, O)
    max_err = float(jnp.max(jnp.abs(out - ref)))
    assert jnp.allclose(out, ref, rtol=2e-2, atol=2e-2), f"mismatch vs reference: {max_err}"

    print("KERNEL_OK")
</pallas_src>

<mosaic_0001>
module attributes {stable_mosaic.version = 11 : i64} {
  func.func @vqa_kernel(%arg0: i32, %arg1: memref<8x8x32xf32, #tpu.memory_space<vmem>>, %arg2: memref<8x64xf32, #tpu.memory_space<vmem>>, %arg3: memref<32x128xbf16, #tpu.memory_space<vmem>>, %arg4: memref<32x128xbf16, #tpu.memory_space<vmem>>, %arg5: memref<1x128xf32, #tpu.memory_space<vmem>>, %arg6: memref<64x128xbf16, #tpu.memory_space<vmem>>, %arg7: memref<1x128xf32, #tpu.memory_space<vmem>>, %arg8: memref<128x32xbf16, #tpu.memory_space<vmem>>, %arg9: memref<1x32xf32, #tpu.memory_space<vmem>>, %arg10: memref<64x32xbf16, #tpu.memory_space<vmem>>, %arg11: memref<1x32xf32, #tpu.memory_space<vmem>>, %arg12: memref<32x128xbf16, #tpu.memory_space<vmem>>, %arg13: memref<1x128xf32, #tpu.memory_space<vmem>>, %arg14: memref<128x128xbf16, #tpu.memory_space<vmem>>, %arg15: memref<1x128xf32, #tpu.memory_space<vmem>>, %arg16: memref<8x128xf32, #tpu.memory_space<vmem>>) attributes {dimension_semantics = [#tpu.dimension_semantics<parallel>], iteration_bounds = array<i64: 1>, scalar_prefetch = 0 : i64, scratch_operands = 0 : i64, tpu.core_type = #tpu.core_type<tc>, window_params = [{transform_indices = @transform_0, window_bounds = array<i64: 8, 8, 32>}, {transform_indices = @transform_1, window_bounds = array<i64: 8, 64>}, {pipeline_mode = #tpu.pipeline_mode<synchronous>, transform_indices = @transform_2, window_bounds = array<i64: 32, 128>}, {pipeline_mode = #tpu.pipeline_mode<synchronous>, transform_indices = @transform_3, window_bounds = array<i64: 32, 128>}, {pipeline_mode = #tpu.pipeline_mode<synchronous>, transform_indices = @transform_4, window_bounds = array<i64: 1, 128>}, {pipeline_mode = #tpu.pipeline_mode<synchronous>, transform_indices = @transform_5, window_bounds = array<i64: 64, 128>}, {pipeline_mode = #tpu.pipeline_mode<synchronous>, transform_indices = @transform_6, window_bounds = array<i64: 1, 128>}, {pipeline_mode = #tpu.pipeline_mode<synchronous>, transform_indices = @transform_7, window_bounds = array<i64: 128, 32>}, {pipeline_mode = #tpu.pipeline_mode<synchronous>, transform_indices = @transform_8, window_bounds = array<i64: 1, 32>}, {pipeline_mode = #tpu.pipeline_mode<synchronous>, transform_indices = @transform_9, window_bounds = array<i64: 64, 32>}, {pipeline_mode = #tpu.pipeline_mode<synchronous>, transform_indices = @transform_10, window_bounds = array<i64: 1, 32>}, {pipeline_mode = #tpu.pipeline_mode<synchronous>, transform_indices = @transform_11, window_bounds = array<i64: 32, 128>}, {pipeline_mode = #tpu.pipeline_mode<synchronous>, transform_indices = @transform_12, window_bounds = array<i64: 1, 128>}, {pipeline_mode = #tpu.pipeline_mode<synchronous>, transform_indices = @transform_13, window_bounds = array<i64: 128, 128>}, {pipeline_mode = #tpu.pipeline_mode<synchronous>, transform_indices = @transform_14, window_bounds = array<i64: 1, 128>}, {transform_indices = @transform_15, window_bounds = array<i64: 8, 128>}]} {
    %c0 = arith.constant 0 : index
    %c0_0 = arith.constant 0 : index
    %c0_1 = arith.constant 0 : index
    %0 = vector.load %arg1[%c0, %c0_0, %c0_1] : memref<8x8x32xf32, #tpu.memory_space<vmem>>, vector<8x8x32xf32>
    %1 = math.tanh %0 : vector<8x8x32xf32>
    %2 = vector.shape_cast %1 : vector<8x8x32xf32> to vector<64x32xf32>
    %3 = arith.truncf %2 : vector<64x32xf32> to vector<64x32xbf16>
    %c0_2 = arith.constant 0 : index
    %c0_3 = arith.constant 0 : index
    %4 = vector.load %arg3[%c0_2, %c0_3] : memref<32x128xbf16, #tpu.memory_space<vmem>>, vector<32x128xbf16>
    %cst = arith.constant dense<0.000000e+00> : vector<64x128xf32>
    %5 = tpu.matmul %3, %4, %cst {dimension_numbers = #tpu.dot_dimension_numbers<[1], [0], [0], [1], [0, 0, 1, 1], [], []>} : vector<64x32xbf16>, vector<32x128xbf16>, vector<64x128xf32> -> vector<64x128xf32>
    %6 = arith.truncf %5 : vector<64x128xf32> to vector<64x128xbf16>
    %c0_4 = arith.constant 0 : index
    %c0_5 = arith.constant 0 : index
    %7 = vector.load %arg4[%c0_4, %c0_5] : memref<32x128xbf16, #tpu.memory_space<vmem>>, vector<32x128xbf16>
    %c0_6 = arith.constant 0 : index
    %c0_7 = arith.constant 0 : index
    %8 = vector.load %arg6[%c0_6, %c0_7] : memref<64x128xbf16, #tpu.memory_space<vmem>>, vector<64x128xbf16>
    %c0_8 = arith.constant 0 : index
    %c0_9 = arith.constant 0 : index
    %9 = vector.load %arg5[%c0_8, %c0_9] : memref<1x128xf32, #tpu.memory_space<vmem>>, vector<1x128xf32>
    %10 = vector.shape_cast %9 : vector<1x128xf32> to vector<1x128xf32>
    %11 = vector.broadcast %10 : vector<1x128xf32> to vector<8x128xf32>
    %c0_10 = arith.constant 0 : index
    %c0_11 = arith.constant 0 : index
    %12 = vector.load %arg7[%c0_10, %c0_11] : memref<1x128xf32, #tpu.memory_space<vmem>>, vector<1x128xf32>
    %13 = vector.shape_cast %12 : vector<1x128xf32> to vector<1x128xf32>
    %14 = vector.broadcast %13 : vector<1x128xf32> to vector<8x128xf32>
    %15 = tpu.iota {dimensions = array<i32: 1>} : vector<8x128xi32>
    %c64_i32 = arith.constant 64 : i32
    %16 = vector.broadcast %c64_i32 : i32 to vector<8x128xi32>
    %17 = arith.cmpi sge, %15, %16 : vector<8x128xi32>
    %c96_i32 = arith.constant 96 : i32
    %18 = vector.broadcast %c96_i32 : i32 to vector<8x128xi32>
    %19 = arith.cmpi slt, %15, %18 : vector<8x128xi32>
    %20 = arith.andi %17, %19 : vector<8x128xi1>
    %cst_12 = arith.constant 0.000000e+00 : f32
    %21 = vector.broadcast %cst_12 : f32 to vector<8x32xf32>
    %22 = vector.extract_strided_slice %6 {offsets = [0, 0], sizes = [8, 128], strides = [1, 1]} : vector<64x128xbf16> to vector<8x128xbf16>
    %23 = arith.extf %22 : vector<8x128xbf16> to vector<8x128xf32>
    %24 = arith.addf %23, %11 : vector<8x128xf32>
    %25 = arith.truncf %21 : vector<8x32xf32> to vector<8x32xbf16>
    %cst_13 = arith.constant dense<0.000000e+00> : vector<8x128xf32>
    %26 = tpu.matmul %25, %7, %cst_13 {dimension_numbers = #tpu.dot_dimension_numbers<[1], [0], [0], [1], [0, 0, 1, 1], [], []>} : vector<8x32xbf16>, vector<32x128xbf16>, vector<8x128xf32> -> vector<8x128xf32>
    %27 = arith.addf %24, %26 : vector<8x128xf32>
    %28 = math.tanh %27 : vector<8x128xf32>
    %29 = arith.negf %27 : vector<8x128xf32>
    %30 = math.exp %29 : vector<8x128xf32>
    %cst_14 = arith.constant 1.000000e+00 : f32
    %31 = vector.broadcast %cst_14 : f32 to vector<8x128xf32>
    %32 = arith.addf %31, %30 : vector<8x128xf32>
    %33 = arith.divf %31, %32 : vector<8x128xf32>
    %34 = arith.select %20, %28, %33 : vector<8x128xi1>, vector<8x128xf32>
    %35 = vector.extract_strided_slice %34 {offsets = [0, 0], sizes = [8, 32], strides = [1, 1]} : vector<8x128xf32> to vector<8x32xf32>
    %36 = vector.extract_strided_slice %34 {offsets = [0, 32], sizes = [8, 32], strides = [1, 1]} : vector<8x128xf32> to vector<8x32xf32>
    %37 = vector.extract_strided_slice %34 {offsets = [0, 64], sizes = [8, 32], strides = [1, 1]} : vector<8x128xf32> to vector<8x32xf32>
    %38 = vector.extract_strided_slice %34 {offsets = [0, 96], sizes = [8, 32], strides = [1, 1]} : vector<8x128xf32> to vector<8x32xf32>
    %39 = arith.mulf %36, %21 : vector<8x32xf32>
    %40 = arith.mulf %35, %37 : vector<8x32xf32>
    %41 = arith.addf %39, %40 : vector<8x32xf32>
    %42 = math.tanh %41 : vector<8x32xf32>
    %43 = arith.mulf %38, %42 : vector<8x32xf32>
    %44 = tpu.concatenate %43, %21 in 1 : vector<8x32xf32>, vector<8x32xf32> -> vector<8x64xf32>
    %45 = arith.truncf %44 : vector<8x64xf32> to vector<8x64xbf16>
    %cst_15 = arith.constant dense<0.000000e+00> : vector<8x128xf32>
    %46 = tpu.matmul %45, %8, %cst_15 {dimension_numbers = #tpu.dot_dimension_numbers<[1], [0], [0], [1], [0, 0, 1, 1], [], []>} : vector<8x64xbf16>, vector<64x128xbf16>, vector<8x128xf32> -> vector<8x128xf32>
    %47 = arith.addf %46, %14 : vector<8x128xf32>
    %48 = math.tanh %47 : vector<8x128xf32>
    %49 = arith.negf %47 : vector<8x128xf32>
    %50 = math.exp %49 : vector<8x128xf32>
    %cst_16 = arith.constant 1.000000e+00 : f32
    %51 = vector.broadcast %cst_16 : f32 to vector<8x128xf32>
    %52 = arith.addf %51, %50 : vector<8x128xf32>
    %53 = arith.divf %51, %52 : vector<8x128xf32>
    %54 = arith.select %20, %48, %53 : vector<8x128xi1>, vector<8x128xf32>
    %55 = vector.extract_strided_slice %54 {offsets = [0, 0], sizes = [8, 32], strides = [1, 1]} : vector<8x128xf32> to vector<8x32xf32>
    %56 = vector.extract_strided_slice %54 {offsets = [0, 32], sizes = [8, 32], strides = [1, 1]} : vector<8x128xf32> to vector<8x32xf32>
    %57 = vector.extract_strided_slice %54 {offsets = [0, 64], sizes = [8, 32], strides = [1, 1]} : vector<8x128xf32> to vector<8x32xf32>
    %58 = vector.extract_strided_slice %54 {offsets = [0, 96], sizes = [8, 32], strides = [1, 1]} : vector<8x128xf32> to vector<8x32xf32>
    %59 = arith.mulf %56, %21 : vector<8x32xf32>
    %60 = arith.mulf %55, %57 : vector<8x32xf32>
    %61 = arith.addf %59, %60 : vector<8x32xf32>
    %62 = math.tanh %61 : vector<8x32xf32>
    %63 = arith.mulf %58, %62 : vector<8x32xf32>
    %64 = vector.extract_strided_slice %6 {offsets = [8, 0], sizes = [8, 128], strides = [1, 1]} : vector<64x128xbf16> to vector<8x128xbf16>
    %65 = arith.extf %64 : vector<8x128xbf16> to vector<8x128xf32>
    %66 = arith.addf %65, %11 : vector<8x128xf32>
    %67 = arith.truncf %43 : vector<8x32xf32> to vector<8x32xbf16>
    %cst_17 = arith.constant dense<0.000000e+00> : vector<8x128xf32>
    %68 = tpu.matmul %67, %7, %cst_17 {dimension_numbers = #tpu.dot_dimension_numbers<[1], [0], [0], [1], [0, 0, 1, 1], [], []>} : vector<8x32xbf16>, vector<32x128xbf16>, vector<8x128xf32> -> vector<8x128xf32>
    %69 = arith.addf %66, %68 : vector<8x128xf32>
    %70 = math.tanh %69 : vector<8x128xf32>
    %71 = arith.negf %69 : vector<8x128xf32>
    %72 = math.exp %71 : vector<8x128xf32>
    %cst_18 = arith.constant 1.000000e+00 : f32
    %73 = vector.broadcast %cst_18 : f32 to vector<8x128xf32>
    %74 = arith.addf %73, %72 : vector<8x128xf32>
    %75 = arith.divf %73, %74 : vector<8x128xf32>
    %76 = arith.select %20, %70, %75 : vector<8x128xi1>, vector<8x128xf32>
    %77 = vector.extract_strided_slice %76 {offsets = [0, 0], sizes = [8, 32], strides = [1, 1]} : vector<8x128xf32> to vector<8x32xf32>
    %78 = vector.extract_strided_slice %76 {offsets = [0, 32], sizes = [8, 32], strides = [1, 1]} : vector<8x128xf32> to vector<8x32xf32>
    %79 = vector.extract_strided_slice %76 {offsets = [0, 64], sizes = [8, 32], strides = [1, 1]} : vector<8x128xf32> to vector<8x32xf32>
    %80 = vector.extract_strided_slice %76 {offsets = [0, 96], sizes = [8, 32], strides = [1, 1]} : vector<8x128xf32> to vector<8x32xf32>
    %81 = arith.mulf %78, %41 : vector<8x32xf32>
    %82 = arith.mulf %77, %79 : vector<8x32xf32>
    %83 = arith.addf %81, %82 : vector<8x32xf32>
    %84 = math.tanh %83 : vector<8x32xf32>
    %85 = arith.mulf %80, %84 : vector<8x32xf32>
    %86 = tpu.concatenate %85, %63 in 1 : vector<8x32xf32>, vector<8x32xf32> -> vector<8x64xf32>
    %87 = arith.truncf %86 : vector<8x64xf32> to vector<8x64xbf16>
    %cst_19 = arith.constant dense<0.000000e+00> : vector<8x128xf32>
    %88 = tpu.matmul %87, %8, %cst_19 {dimension_numbers = #tpu.dot_dimension_numbers<[1], [0], [0], [1], [0, 0, 1, 1], [], []>} : vector<8x64xbf16>, vector<64x128xbf16>, vector<8x128xf32> -> vector<8x128xf32>
    %89 = arith.addf %88, %14 : vector<8x128xf32>
    %90 = math.tanh %89 : vector<8x128xf32>
    %91 = arith.negf %89 : vector<8x128xf32>
    %92 = math.exp %91 : vector<8x128xf32>
    %cst_20 = arith.constant 1.000000e+00 : f32
    %93 = vector.broadcast %cst_20 : f32 to vector<8x128xf32>
    %94 = arith.addf %93, %92 : vector<8x128xf32>
    %95 = arith.divf %93, %94 : vector<8x128xf32>
    %96 = arith.select %20, %90, %95 : vector<8x128xi1>, vector<8x128xf32>
    %97 = vector.extract_strided_slice %96 {offsets = [0, 0], sizes = [8, 32], strides = [1, 1]} : vector<8x128xf32> to vector<8x32xf32>
    %98 = vector.extract_strided_slice %96 {offsets = [0, 32], sizes = [8, 32], strides = [1, 1]} : vector<8x128xf32> to vector<8x32xf32>
    %99 = vector.extract_strided_slice %96 {offsets = [0, 64], sizes = [8, 32], strides = [1, 1]} : vector<8x128xf32> to vector<8x32xf32>
    %100 = vector.extract_strided_slice %96 {offsets = [0, 96], sizes = [8, 32], strides = [1, 1]} : vector<8x128xf32> to vector<8x32xf32>
    %101 = arith.mulf %98, %61 : vector<8x32xf32>
    %102 = arith.mulf %97, %99 : vector<8x32xf32>
    %103 = arith.addf %101, %102 : vector<8x32xf32>
    %104 = math.tanh %103 : vector<8x32xf32>
    %105 = arith.mulf %100, %104 : vector<8x32xf32>
    %106 = vector.extract_strided_slice %6 {offsets = [16, 0], sizes = [8, 128], strides = [1, 1]} : vector<64x128xbf16> to vector<8x128xbf16>
    %107 = arith.extf %106 : vector<8x128xbf16> to vector<8x128xf32>
    %108 = arith.addf %107, %11 : vector<8x128xf32>
    %109 = arith.truncf %85 : vector<8x32xf32> to vector<8x32xbf16>
    %cst_21 = arith.constant dense<0.000000e+00> : vector<8x128xf32>
    %110 = tpu.matmul %109, %7, %cst_21 {dimension_numbers = #tpu.dot_dimension_numbers<[1], [0], [0], [1], [0, 0, 1, 1], [], []>} : vector<8x32xbf16>, vector<32x128xbf16>, vector<8x128xf32> -> vector<8x128xf32>
    %111 = arith.addf %108, %110 : vector<8x128xf32>
    %112 = math.tanh %111 : vector<8x128xf32>
    %113 = arith.negf %111 : vector<8x128xf32>
    %114 = math.exp %113 : vector<8x128xf32>
    %cst_22 = arith.constant 1.000000e+00 : f32
    %115 = vector.broadcast %cst_22 : f32 to vector<8x128xf32>
    %116 = arith.addf %115, %114 : vector<8x128xf32>
    %117 = arith.divf %115, %116 : vector<8x128xf32>
    %118 = arith.select %20, %112, %117 : vector<8x128xi1>, vector<8x128xf32>
    %119 = vector.extract_strided_slice %118 {offsets = [0, 0], sizes = [8, 32], strides = [1, 1]} : vector<8x128xf32> to vector<8x32xf32>
    %120 = vector.extract_strided_slice %118 {offsets = [0, 32], sizes = [8, 32], strides = [1, 1]} : vector<8x128xf32> to vector<8x32xf32>
    %121 = vector.extract_strided_slice %118 {offsets = [0, 64], sizes = [8, 32], strides = [1, 1]} : vector<8x128xf32> to vector<8x32xf32>
    %122 = vector.extract_strided_slice %118 {offsets = [0, 96], sizes = [8, 32], strides = [1, 1]} : vector<8x128xf32> to vector<8x32xf32>
    %123 = arith.mulf %120, %83 : vector<8x32xf32>
    %124 = arith.mulf %119, %121 : vector<8x32xf32>
    %125 = arith.addf %123, %124 : vector<8x32xf32>
    %126 = math.tanh %125 : vector<8x32xf32>
    %127 = arith.mulf %122, %126 : vector<8x32xf32>
    %128 = tpu.concatenate %127, %105 in 1 : vector<8x32xf32>, vector<8x32xf32> -> vector<8x64xf32>
    %129 = arith.truncf %128 : vector<8x64xf32> to vector<8x64xbf16>
    %cst_23 = arith.constant dense<0.000000e+00> : vector<8x128xf32>
    %130 = tpu.matmul %129, %8, %cst_23 {dimension_numbers = #tpu.dot_dimension_numbers<[1], [0], [0], [1], [0, 0, 1, 1], [], []>} : vector<8x64xbf16>, vector<64x128xbf16>, vector<8x128xf32> -> vector<8x128xf32>
    %131 = arith.addf %130, %14 : vector<8x128xf32>
    %132 = math.tanh %131 : vector<8x128xf32>
    %133 = arith.negf %131 : vector<8x128xf32>
    %134 = math.exp %133 : vector<8x128xf32>
    %cst_24 = arith.constant 1.000000e+00 : f32
    %135 = vector.broadcast %cst_24 : f32 to vector<8x128xf32>
    %136 = arith.addf %135, %134 : vector<8x128xf32>
    %137 = arith.divf %135, %136 : vector<8x128xf32>
    %138 = arith.select %20, %132, %137 : vector<8x128xi1>, vector<8x128xf32>
    %139 = vector.extract_strided_slice %138 {offsets = [0, 0], sizes = [8, 32], strides = [1, 1]} : vector<8x128xf32> to vector<8x32xf32>
    %140 = vector.extract_strided_slice %138 {offsets = [0, 32], sizes = [8, 32], strides = [1, 1]} : vector<8x128xf32> to vector<8x32xf32>
    %141 = vector.extract_strided_slice %138 {offsets = [0, 64], sizes = [8, 32], strides = [1, 1]} : vector<8x128xf32> to vector<8x32xf32>
    %142 = vector.extract_strided_slice %138 {offsets = [0, 96], sizes = [8, 32], strides = [1, 1]} : vector<8x128xf32> to vector<8x32xf32>
    %143 = arith.mulf %140, %103 : vector<8x32xf32>
    %144 = arith.mulf %139, %141 : vector<8x32xf32>
    %145 = arith.addf %143, %144 : vector<8x32xf32>
    %146 = math.tanh %145 : vector<8x32xf32>
    %147 = arith.mulf %142, %146 : vector<8x32xf32>
    %148 = vector.extract_strided_slice %6 {offsets = [24, 0], sizes = [8, 128], strides = [1, 1]} : vector<64x128xbf16> to vector<8x128xbf16>
    %149 = arith.extf %148 : vector<8x128xbf16> to vector<8x128xf32>
    %150 = arith.addf %149, %11 : vector<8x128xf32>
    %151 = arith.truncf %127 : vector<8x32xf32> to vector<8x32xbf16>
    %cst_25 = arith.constant dense<0.000000e+00> : vector<8x128xf32>
    %152 = tpu.matmul %151, %7, %cst_25 {dimension_numbers = #tpu.dot_dimension_numbers<[1], [0], [0], [1], [0, 0, 1, 1], [], []>} : vector<8x32xbf16>, vector<32x128xbf16>, vector<8x128xf32> -> vector<8x128xf32>
    %153 = arith.addf %150, %152 : vector<8x128xf32>
    %154 = math.tanh %153 : vector<8x128xf32>
    %155 = arith.negf %153 : vector<8x128xf32>
    %156 = math.exp %155 : vector<8x128xf32>
    %cst_26 = arith.constant 1.000000e+00 : f32
    %157 = vector.broadcast %cst_26 : f32 to vector<8x128xf32>
    %158 = arith.addf %157, %156 : vector<8x128xf32>
    %159 = arith.divf %157, %158 : vector<8x128xf32>
    %160 = arith.select %20, %154, %159 : vector<8x128xi1>, vector<8x128xf32>
    %161 = vector.extract_strided_slice %160 {offsets = [0, 0], sizes = [8, 32], strides = [1, 1]} : vector<8x128xf32> to vector<8x32xf32>
    %162 = vector.extract_strided_slice %160 {offsets = [0, 32], sizes = [8, 32], strides = [1, 1]} : vector<8x128xf32> to vector<8x32xf32>
    %163 = vector.extract_strided_slice %160 {offsets = [0, 64], sizes = [8, 32], strides = [1, 1]} : vector<8x128xf32> to vector<8x32xf32>
    %164 = vector.extract_strided_slice %160 {offsets = [0, 96], sizes = [8, 32], strides = [1, 1]} : vector<8x128xf32> to vector<8x32xf32>
    %165 = arith.mulf %162, %125 : vector<8x32xf32>
    %166 = arith.mulf %161, %163 : vector<8x32xf32>
    %167 = arith.addf %165, %166 : vector<8x32xf32>
    %168 = math.tanh %167 : vector<8x32xf32>
    %169 = arith.mulf %164, %168 : vector<8x32xf32>
    %170 = tpu.concatenate %169, %147 in 1 : vector<8x32xf32>, vector<8x32xf32> -> vector<8x64xf32>
    %171 = arith.truncf %170 : vector<8x64xf32> to vector<8x64xbf16>
    %cst_27 = arith.constant dense<0.000000e+00> : vector<8x128xf32>
    %172 = tpu.matmul %171, %8, %cst_27 {dimension_numbers = #tpu.dot_dimension_numbers<[1], [0], [0], [1], [0, 0, 1, 1], [], []>} : vector<8x64xbf16>, vector<64x128xbf16>, vector<8x128xf32> -> vector<8x128xf32>
    %173 = arith.addf %172, %14 : vector<8x128xf32>
    %174 = math.tanh %173 : vector<8x128xf32>
    %175 = arith.negf %173 : vector<8x128xf32>
    %176 = math.exp %175 : vector<8x128xf32>
    %cst_28 = arith.constant 1.000000e+00 : f32
    %177 = vector.broadcast %cst_28 : f32 to vector<8x128xf32>
    %178 = arith.addf %177, %176 : vector<8x128xf32>
    %179 = arith.divf %177, %178 : vector<8x128xf32>
    %180 = arith.select %20, %174, %179 : vector<8x128xi1>, vector<8x128xf32>
    %181 = vector.extract_strided_slice %180 {offsets = [0, 0], sizes = [8, 32], strides = [1, 1]} : vector<8x128xf32> to vector<8x32xf32>
    %182 = vector.extract_strided_slice %180 {offsets = [0, 32], sizes = [8, 32], strides = [1, 1]} : vector<8x128xf32> to vector<8x32xf32>
    %183 = vector.extract_strided_slice %180 {offsets = [0, 64], sizes = [8, 32], strides = [1, 1]} : vector<8x128xf32> to vector<8x32xf32>
    %184 = vector.extract_strided_slice %180 {offsets = [0, 96], sizes = [8, 32], strides = [1, 1]} : vector<8x128xf32> to vector<8x32xf32>
    %185 = arith.mulf %182, %145 : vector<8x32xf32>
    %186 = arith.mulf %181, %183 : vector<8x32xf32>
    %187 = arith.addf %185, %186 : vector<8x32xf32>
    %188 = math.tanh %187 : vector<8x32xf32>
    %189 = arith.mulf %184, %188 : vector<8x32xf32>
    %190 = vector.extract_strided_slice %6 {offsets = [32, 0], sizes = [8, 128], strides = [1, 1]} : vector<64x128xbf16> to vector<8x128xbf16>
    %191 = arith.extf %190 : vector<8x128xbf16> to vector<8x128xf32>
    %192 = arith.addf %191, %11 : vector<8x128xf32>
    %193 = arith.truncf %169 : vector<8x32xf32> to vector<8x32xbf16>
    %cst_29 = arith.constant dense<0.000000e+00> : vector<8x128xf32>
    %194 = tpu.matmul %193, %7, %cst_29 {dimension_numbers = #tpu.dot_dimension_numbers<[1], [0], [0], [1], [0, 0, 1, 1], [], []>} : vector<8x32xbf16>, vector<32x128xbf16>, vector<8x128xf32> -> vector<8x128xf32>
    %195 = arith.addf %192, %194 : vector<8x128xf32>
    %196 = math.tanh %195 : vector<8x128xf32>
    %197 = arith.negf %195 : vector<8x128xf32>
    %198 = math.exp %197 : vector<8x128xf32>
    %cst_30 = arith.constant 1.000000e+00 : f32
    %199 = vector.broadcast %cst_30 : f32 to vector<8x128xf32>
    %200 = arith.addf %199, %198 : vector<8x128xf32>
    %201 = arith.divf %199, %200 : vector<8x128xf32>
    %202 = arith.select %20, %196, %201 : vector<8x128xi1>, vector<8x128xf32>
    %203 = vector.extract_strided_slice %202 {offsets = [0, 0], sizes = [8, 32], strides = [1, 1]} : vector<8x128xf32> to vector<8x32xf32>
    %204 = vector.extract_strided_slice %202 {offsets = [0, 32], sizes = [8, 32], strides = [1, 1]} : vector<8x128xf32> to vector<8x32xf32>
    %205 = vector.extract_strided_slice %202 {offsets = [0, 64], sizes = [8, 32], strides = [1, 1]} : vector<8x128xf32> to vector<8x32xf32>
    %206 = vector.extract_strided_slice %202 {offsets = [0, 96], sizes = [8, 32], strides = [1, 1]} : vector<8x128xf32> to vector<8x32xf32>
    %207 = arith.mulf %204, %167 : vector<8x32xf32>
    %208 = arith.mulf %203, %205 : vector<8x32xf32>
    %209 = arith.addf %207, %208 : vector<8x32xf32>
    %210 = math.tanh %209 : vector<8x32xf32>
    %211 = arith.mulf %206, %210 : vector<8x32xf32>
    %212 = tpu.concatenate %211, %189 in 1 : vector<8x32xf32>, vector<8x32xf32> -> vector<8x64xf32>
    %213 = arith.truncf %212 : vector<8x64xf32> to vector<8x64xbf16>
    %cst_31 = arith.constant dense<0.000000e+00> : vector<8x128xf32>
    %214 = tpu.matmul %213, %8, %cst_31 {dimension_numbers = #tpu.dot_dimension_numbers<[1], [0], [0], [1], [0, 0, 1, 1], [], []>} : vector<8x64xbf16>, vector<64x128xbf16>, vector<8x128xf32> -> vector<8x128xf32>
    %215 = arith.addf %214, %14 : vector<8x128xf32>
    %216 = math.tanh %215 : vector<8x128xf32>
    %217 = arith.negf %215 : vector<8x128xf32>
    %218 = math.exp %217 : vector<8x128xf32>
    %cst_32 = arith.constant 1.000000e+00 : f32
    %219 = vector.broadcast %cst_32 : f32 to vector<8x128xf32>
    %220 = arith.addf %219, %218 : vector<8x128xf32>
    %221 = arith.divf %219, %220 : vector<8x128xf32>
    %222 = arith.select %20, %216, %221 : vector<8x128xi1>, vector<8x128xf32>
    %223 = vector.extract_strided_slice %222 {offsets = [0, 0], sizes = [8, 32], strides = [1, 1]} : vector<8x128xf32> to vector<8x32xf32>
    %224 = vector.extract_strided_slice %222 {offsets = [0, 32], sizes = [8, 32], strides = [1, 1]} : vector<8x128xf32> to vector<8x32xf32>
    %225 = vector.extract_strided_slice %222 {offsets = [0, 64], sizes = [8, 32], strides = [1, 1]} : vector<8x128xf32> to vector<8x32xf32>
    %226 = vector.extract_strided_slice %222 {offsets = [0, 96], sizes = [8, 32], strides = [1, 1]} : vector<8x128xf32> to vector<8x32xf32>
    %227 = arith.mulf %224, %187 : vector<8x32xf32>
    %228 = arith.mulf %223, %225 : vector<8x32xf32>
    %229 = arith.addf %227, %228 : vector<8x32xf32>
    %230 = math.tanh %229 : vector<8x32xf32>
    %231 = arith.mulf %226, %230 : vector<8x32xf32>
    %232 = vector.extract_strided_slice %6 {offsets = [40, 0], sizes = [8, 128], strides = [1, 1]} : vector<64x128xbf16> to vector<8x128xbf16>
    %233 = arith.extf %232 : vector<8x128xbf16> to vector<8x128xf32>
    %234 = arith.addf %233, %11 : vector<8x128xf32>
    %235 = arith.truncf %211 : vector<8x32xf32> to vector<8x32xbf16>
    %cst_33 = arith.constant dense<0.000000e+00> : vector<8x128xf32>
    %236 = tpu.matmul %235, %7, %cst_33 {dimension_numbers = #tpu.dot_dimension_numbers<[1], [0], [0], [1], [0, 0, 1, 1], [], []>} : vector<8x32xbf16>, vector<32x128xbf16>, vector<8x128xf32> -> vector<8x128xf32>
    %237 = arith.addf %234, %236 : vector<8x128xf32>
    %238 = math.tanh %237 : vector<8x128xf32>
    %239 = arith.negf %237 : vector<8x128xf32>
    %240 = math.exp %239 : vector<8x128xf32>
    %cst_34 = arith.constant 1.000000e+00 : f32
    %241 = vector.broadcast %cst_34 : f32 to vector<8x128xf32>
    %242 = arith.addf %241, %240 : vector<8x128xf32>
    %243 = arith.divf %241, %242 : vector<8x128xf32>
    %244 = arith.select %20, %238, %243 : vector<8x128xi1>, vector<8x128xf32>
    %245 = vector.extract_strided_slice %244 {offsets = [0, 0], sizes = [8, 32], strides = [1, 1]} : vector<8x128xf32> to vector<8x32xf32>
    %246 = vector.extract_strided_slice %244 {offsets = [0, 32], sizes = [8, 32], strides = [1, 1]} : vector<8x128xf32> to vector<8x32xf32>
    %247 = vector.extract_strided_slice %244 {offsets = [0, 64], sizes = [8, 32], strides = [1, 1]} : vector<8x128xf32> to vector<8x32xf32>
    %248 = vector.extract_strided_slice %244 {offsets = [0, 96], sizes = [8, 32], strides = [1, 1]} : vector<8x128xf32> to vector<8x32xf32>
    %249 = arith.mulf %246, %209 : vector<8x32xf32>
    %250 = arith.mulf %245, %247 : vector<8x32xf32>
    %251 = arith.addf %249, %250 : vector<8x32xf32>
    %252 = math.tanh %251 : vector<8x32xf32>
    %253 = arith.mulf %248, %252 : vector<8x32xf32>
    %254 = tpu.concatenate %253, %231 in 1 : vector<8x32xf32>, vector<8x32xf32> -> vector<8x64xf32>
    %255 = arith.truncf %254 : vector<8x64xf32> to vector<8x64xbf16>
    %cst_35 = arith.constant dense<0.000000e+00> : vector<8x128xf32>
    %256 = tpu.matmul %255, %8, %cst_35 {dimension_numbers = #tpu.dot_dimension_numbers<[1], [0], [0], [1], [0, 0, 1, 1], [], []>} : vector<8x64xbf16>, vector<64x128xbf16>, vector<8x128xf32> -> vector<8x128xf32>
    %257 = arith.addf %256, %14 : vector<8x128xf32>
    %258 = math.tanh %257 : vector<8x128xf32>
    %259 = arith.negf %257 : vector<8x128xf32>
    %260 = math.exp %259 : vector<8x128xf32>
    %cst_36 = arith.constant 1.000000e+00 : f32
    %261 = vector.broadcast %cst_36 : f32 to vector<8x128xf32>
    %262 = arith.addf %261, %260 : vector<8x128xf32>
    %263 = arith.divf %261, %262 : vector<8x128xf32>
    %264 = arith.select %20, %258, %263 : vector<8x128xi1>, vector<8x128xf32>
    %265 = vector.extract_strided_slice %264 {offsets = [0, 0], sizes = [8, 32], strides = [1, 1]} : vector<8x128xf32> to vector<8x32xf32>
    %266 = vector.extract_strided_slice %264 {offsets = [0, 32], sizes = [8, 32], strides = [1, 1]} : vector<8x128xf32> to vector<8x32xf32>
    %267 = vector.extract_strided_slice %264 {offsets = [0, 64], sizes = [8, 32], strides = [1, 1]} : vector<8x128xf32> to vector<8x32xf32>
    %268 = vector.extract_strided_slice %264 {offsets = [0, 96], sizes = [8, 32], strides = [1, 1]} : vector<8x128xf32> to vector<8x32xf32>
    %269 = arith.mulf %266, %229 : vector<8x32xf32>
    %270 = arith.mulf %265, %267 : vector<8x32xf32>
    %271 = arith.addf %269, %270 : vector<8x32xf32>
    %272 = math.tanh %271 : vector<8x32xf32>
    %273 = arith.mulf %268, %272 : vector<8x32xf32>
    %274 = vector.extract_strided_slice %6 {offsets = [48, 0], sizes = [8, 128], strides = [1, 1]} : vector<64x128xbf16> to vector<8x128xbf16>
    %275 = arith.extf %274 : vector<8x128xbf16> to vector<8x128xf32>
    %276 = arith.addf %275, %11 : vector<8x128xf32>
    %277 = arith.truncf %253 : vector<8x32xf32> to vector<8x32xbf16>
    %cst_37 = arith.constant dense<0.000000e+00> : vector<8x128xf32>
    %278 = tpu.matmul %277, %7, %cst_37 {dimension_numbers = #tpu.dot_dimension_numbers<[1], [0], [0], [1], [0, 0, 1, 1], [], []>} : vector<8x32xbf16>, vector<32x128xbf16>, vector<8x128xf32> -> vector<8x128xf32>
    %279 = arith.addf %276, %278 : vector<8x128xf32>
    %280 = math.tanh %279 : vector<8x128xf32>
    %281 = arith.negf %279 : vector<8x128xf32>
    %282 = math.exp %281 : vector<8x128xf32>
    %cst_38 = arith.constant 1.000000e+00 : f32
    %283 = vector.broadcast %cst_38 : f32 to vector<8x128xf32>
    %284 = arith.addf %283, %282 : vector<8x128xf32>
    %285 = arith.divf %283, %284 : vector<8x128xf32>
    %286 = arith.select %20, %280, %285 : vector<8x128xi1>, vector<8x128xf32>
    %287 = vector.extract_strided_slice %286 {offsets = [0, 0], sizes = [8, 32], strides = [1, 1]} : vector<8x128xf32> to vector<8x32xf32>
    %288 = vector.extract_strided_slice %286 {offsets = [0, 32], sizes = [8, 32], strides = [1, 1]} : vector<8x128xf32> to vector<8x32xf32>
    %289 = vector.extract_strided_slice %286 {offsets = [0, 64], sizes = [8, 32], strides = [1, 1]} : vector<8x128xf32> to vector<8x32xf32>
    %290 = vector.extract_strided_slice %286 {offsets = [0, 96], sizes = [8, 32], strides = [1, 1]} : vector<8x128xf32> to vector<8x32xf32>
    %291 = arith.mulf %288, %251 : vector<8x32xf32>
    %292 = arith.mulf %287, %289 : vector<8x32xf32>
    %293 = arith.addf %291, %292 : vector<8x32xf32>
    %294 = math.tanh %293 : vector<8x32xf32>
    %295 = arith.mulf %290, %294 : vector<8x32xf32>
    %296 = tpu.concatenate %295, %273 in 1 : vector<8x32xf32>, vector<8x32xf32> -> vector<8x64xf32>
    %297 = arith.truncf %296 : vector<8x64xf32> to vector<8x64xbf16>
    %cst_39 = arith.constant dense<0.000000e+00> : vector<8x128xf32>
    %298 = tpu.matmul %297, %8, %cst_39 {dimension_numbers = #tpu.dot_dimension_numbers<[1], [0], [0], [1], [0, 0, 1, 1], [], []>} : vector<8x64xbf16>, vector<64x128xbf16>, vector<8x128xf32> -> vector<8x128xf32>
    %299 = arith.addf %298, %14 : vector<8x128xf32>
    %300 = math.tanh %299 : vector<8x128xf32>
    %301 = arith.negf %299 : vector<8x128xf32>
    %302 = math.exp %301 : vector<8x128xf32>
    %cst_40 = arith.constant 1.000000e+00 : f32
    %303 = vector.broadcast %cst_40 : f32 to vector<8x128xf32>
    %304 = arith.addf %303, %302 : vector<8x128xf32>
    %305 = arith.divf %303, %304 : vector<8x128xf32>
    %306 = arith.select %20, %300, %305 : vector<8x128xi1>, vector<8x128xf32>
    %307 = vector.extract_strided_slice %306 {offsets = [0, 0], sizes = [8, 32], strides = [1, 1]} : vector<8x128xf32> to vector<8x32xf32>
    %308 = vector.extract_strided_slice %306 {offsets = [0, 32], sizes = [8, 32], strides = [1, 1]} : vector<8x128xf32> to vector<8x32xf32>
    %309 = vector.extract_strided_slice %306 {offsets = [0, 64], sizes = [8, 32], strides = [1, 1]} : vector<8x128xf32> to vector<8x32xf32>
    %310 = vector.extract_strided_slice %306 {offsets = [0, 96], sizes = [8, 32], strides = [1, 1]} : vector<8x128xf32> to vector<8x32xf32>
    %311 = arith.mulf %308, %271 : vector<8x32xf32>
    %312 = arith.mulf %307, %309 : vector<8x32xf32>
    %313 = arith.addf %311, %312 : vector<8x32xf32>
    %314 = math.tanh %313 : vector<8x32xf32>
    %315 = arith.mulf %310, %314 : vector<8x32xf32>
    %316 = vector.extract_strided_slice %6 {offsets = [56, 0], sizes = [8, 128], strides = [1, 1]} : vector<64x128xbf16> to vector<8x128xbf16>
    %317 = arith.extf %316 : vector<8x128xbf16> to vector<8x128xf32>
    %318 = arith.addf %317, %11 : vector<8x128xf32>
    %319 = arith.truncf %295 : vector<8x32xf32> to vector<8x32xbf16>
    %cst_41 = arith.constant dense<0.000000e+00> : vector<8x128xf32>
    %320 = tpu.matmul %319, %7, %cst_41 {dimension_numbers = #tpu.dot_dimension_numbers<[1], [0], [0], [1], [0, 0, 1, 1], [], []>} : vector<8x32xbf16>, vector<32x128xbf16>, vector<8x128xf32> -> vector<8x128xf32>
    %321 = arith.addf %318, %320 : vector<8x128xf32>
    %322 = math.tanh %321 : vector<8x128xf32>
    %323 = arith.negf %321 : vector<8x128xf32>
    %324 = math.exp %323 : vector<8x128xf32>
    %cst_42 = arith.constant 1.000000e+00 : f32
    %325 = vector.broadcast %cst_42 : f32 to vector<8x128xf32>
    %326 = arith.addf %325, %324 : vector<8x128xf32>
    %327 = arith.divf %325, %326 : vector<8x128xf32>
    %328 = arith.select %20, %322, %327 : vector<8x128xi1>, vector<8x128xf32>
    %329 = vector.extract_strided_slice %328 {offsets = [0, 0], sizes = [8, 32], strides = [1, 1]} : vector<8x128xf32> to vector<8x32xf32>
    %330 = vector.extract_strided_slice %328 {offsets = [0, 32], sizes = [8, 32], strides = [1, 1]} : vector<8x128xf32> to vector<8x32xf32>
    %331 = vector.extract_strided_slice %328 {offsets = [0, 64], sizes = [8, 32], strides = [1, 1]} : vector<8x128xf32> to vector<8x32xf32>
    %332 = vector.extract_strided_slice %328 {offsets = [0, 96], sizes = [8, 32], strides = [1, 1]} : vector<8x128xf32> to vector<8x32xf32>
    %333 = arith.mulf %330, %293 : vector<8x32xf32>
    %334 = arith.mulf %329, %331 : vector<8x32xf32>
    %335 = arith.addf %333, %334 : vector<8x32xf32>
    %336 = math.tanh %335 : vector<8x32xf32>
    %337 = arith.mulf %332, %336 : vector<8x32xf32>
    %338 = tpu.concatenate %337, %315 in 1 : vector<8x32xf32>, vector<8x32xf32> -> vector<8x64xf32>
    %339 = arith.truncf %338 : vector<8x64xf32> to vector<8x64xbf16>
    %cst_43 = arith.constant dense<0.000000e+00> : vector<8x128xf32>
    %340 = tpu.matmul %339, %8, %cst_43 {dimension_numbers = #tpu.dot_dimension_numbers<[1], [0], [0], [1], [0, 0, 1, 1], [], []>} : vector<8x64xbf16>, vector<64x128xbf16>, vector<8x128xf32> -> vector<8x128xf32>
    %341 = arith.addf %340, %14 : vector<8x128xf32>
    %342 = math.tanh %341 : vector<8x128xf32>
    %343 = arith.negf %341 : vector<8x128xf32>
    %344 = math.exp %343 : vector<8x128xf32>
    %cst_44 = arith.constant 1.000000e+00 : f32
    %345 = vector.broadcast %cst_44 : f32 to vector<8x128xf32>
    %346 = arith.addf %345, %344 : vector<8x128xf32>
    %347 = arith.divf %345, %346 : vector<8x128xf32>
    %348 = arith.select %20, %342, %347 : vector<8x128xi1>, vector<8x128xf32>
    %349 = vector.extract_strided_slice %348 {offsets = [0, 0], sizes = [8, 32], strides = [1, 1]} : vector<8x128xf32> to vector<8x32xf32>
    %350 = vector.extract_strided_slice %348 {offsets = [0, 32], sizes = [8, 32], strides = [1, 1]} : vector<8x128xf32> to vector<8x32xf32>
    %351 = vector.extract_strided_slice %348 {offsets = [0, 64], sizes = [8, 32], strides = [1, 1]} : vector<8x128xf32> to vector<8x32xf32>
    %352 = vector.extract_strided_slice %348 {offsets = [0, 96], sizes = [8, 32], strides = [1, 1]} : vector<8x128xf32> to vector<8x32xf32>
    %353 = arith.mulf %350, %313 : vector<8x32xf32>
    %354 = arith.mulf %349, %351 : vector<8x32xf32>
    %355 = arith.addf %353, %354 : vector<8x32xf32>
    %356 = math.tanh %355 : vector<8x32xf32>
    %357 = arith.mulf %352, %356 : vector<8x32xf32>
    %358 = tpu.concatenate %337, %357, %335, %355 in 1 : vector<8x32xf32>, vector<8x32xf32>, vector<8x32xf32>, vector<8x32xf32> -> vector<8x128xf32>
    %359 = arith.truncf %358 : vector<8x128xf32> to vector<8x128xbf16>
    %c0_45 = arith.constant 0 : index
    %c0_46 = arith.constant 0 : index
    %360 = vector.load %arg8[%c0_45, %c0_46] : memref<128x32xbf16, #tpu.memory_space<vmem>>, vector<128x32xbf16>
    %cst_47 = arith.constant dense<0.000000e+00> : vector<8x32xf32>
    %361 = tpu.matmul %359, %360, %cst_47 {dimension_numbers = #tpu.dot_dimension_numbers<[1], [0], [0], [1], [0, 0, 1, 1], [], []>} : vector<8x128xbf16>, vector<128x32xbf16>, vector<8x32xf32> -> vector<8x32xf32>
    %c0_48 = arith.constant 0 : index
    %c0_49 = arith.constant 0 : index
    %362 = vector.load %arg9[%c0_48, %c0_49] : memref<1x32xf32, #tpu.memory_space<vmem>>, vector<1x32xf32>
    %363 = vector.broadcast %362 : vector<1x32xf32> to vector<8x32xf32>
    %364 = arith.addf %361, %363 : vector<8x32xf32>
    %365 = math.tanh %364 : vector<8x32xf32>
    %c0_50 = arith.constant 0 : index
    %c0_51 = arith.constant 0 : index
    %366 = vector.load %arg2[%c0_50, %c0_51] : memref<8x64xf32, #tpu.memory_space<vmem>>, vector<8x64xf32>
    %367 = arith.truncf %366 : vector<8x64xf32> to vector<8x64xbf16>
    %c0_52 = arith.constant 0 : index
    %c0_53 = arith.constant 0 : index
    %368 = vector.load %arg10[%c0_52, %c0_53] : memref<64x32xbf16, #tpu.memory_space<vmem>>, vector<64x32xbf16>
    %cst_54 = arith.constant dense<0.000000e+00> : vector<8x32xf32>
    %369 = tpu.matmul %367, %368, %cst_54 {dimension_numbers = #tpu.dot_dimension_numbers<[1], [0], [0], [1], [0, 0, 1, 1], [], []>} : vector<8x64xbf16>, vector<64x32xbf16>, vector<8x32xf32> -> vector<8x32xf32>
    %c0_55 = arith.constant 0 : index
    %c0_56 = arith.constant 0 : index
    %370 = vector.load %arg11[%c0_55, %c0_56] : memref<1x32xf32, #tpu.memory_space<vmem>>, vector<1x32xf32>
    %371 = vector.broadcast %370 : vector<1x32xf32> to vector<8x32xf32>
    %372 = arith.addf %369, %371 : vector<8x32xf32>
    %373 = math.tanh %372 : vector<8x32xf32>
    %374 = arith.mulf %365, %373 : vector<8x32xf32>
    %375 = arith.truncf %374 : vector<8x32xf32> to vector<8x32xbf16>
    %c0_57 = arith.constant 0 : index
    %c0_58 = arith.constant 0 : index
    %376 = vector.load %arg12[%c0_57, %c0_58] : memref<32x128xbf16, #tpu.memory_space<vmem>>, vector<32x128xbf16>
    %cst_59 = arith.constant dense<0.000000e+00> : vector<8x128xf32>
    %377 = tpu.matmul %375, %376, %cst_59 {dimension_numbers = #tpu.dot_dimension_numbers<[1], [0], [0], [1], [0, 0, 1, 1], [], []>} : vector<8x32xbf16>, vector<32x128xbf16>, vector<8x128xf32> -> vector<8x128xf32>
    %c0_60 = arith.constant 0 : index
    %c0_61 = arith.constant 0 : index
    %378 = vector.load %arg13[%c0_60, %c0_61] : memref<1x128xf32, #tpu.memory_space<vmem>>, vector<1x128xf32>
    %379 = vector.broadcast %378 : vector<1x128xf32> to vector<8x128xf32>
    %380 = arith.addf %377, %379 : vector<8x128xf32>
    %381 = math.tanh %380 : vector<8x128xf32>
    %382 = arith.truncf %381 : vector<8x128xf32> to vector<8x128xbf16>
    %c0_62 = arith.constant 0 : index
    %c0_63 = arith.constant 0 : index
    %383 = vector.load %arg14[%c0_62, %c0_63] : memref<128x128xbf16, #tpu.memory_space<vmem>>, vector<128x128xbf16>
    %cst_64 = arith.constant dense<0.000000e+00> : vector<8x128xf32>
    %384 = tpu.matmul %382, %383, %cst_64 {dimension_numbers = #tpu.dot_dimension_numbers<[1], [0], [0], [1], [0, 0, 1, 1], [], []>} : vector<8x128xbf16>, vector<128x128xbf16>, vector<8x128xf32> -> vector<8x128xf32>
    %c0_65 = arith.constant 0 : index
    %c0_66 = arith.constant 0 : index
    %385 = vector.load %arg15[%c0_65, %c0_66] : memref<1x128xf32, #tpu.memory_space<vmem>>, vector<1x128xf32>
    %386 = vector.broadcast %385 : vector<1x128xf32> to vector<8x128xf32>
    %387 = arith.addf %384, %386 : vector<8x128xf32>
    %c0_67 = arith.constant 0 : index
    %c0_68 = arith.constant 0 : index
    %388 = vector.load %arg16[%c0_67, %c0_68] : memref<8x128xf32, #tpu.memory_space<vmem>>, vector<8x128xf32>
    tpu.vector_store %arg16[%c0_67, %c0_68], %387 {strides = array<i32>} : memref<8x128xf32, #tpu.memory_space<vmem>>, vector<8x128xf32>,
    return
  }
  func.func @transform_0(%arg0: i32) -> (i32, i32, i32) {
    %c0_i32 = arith.constant 0 : i32
    %c0_i32_0 = arith.constant 0 : i32
    %c0_i32_1 = arith.constant 0 : i32
    return %c0_i32, %arg0, %c0_i32_0 : i32, i32, i32
  }
  func.func @transform_1(%arg0: i32) -> (i32, i32) {
    %c0_i32 = arith.constant 0 : i32
    %c0_i32_0 = arith.constant 0 : i32
    return %arg0, %c0_i32 : i32, i32
  }
  func.func @transform_2(%arg0: i32) -> (i32, i32) {
    %c0_i32 = arith.constant 0 : i32
    %c0_i32_0 = arith.constant 0 : i32
    %c0_i32_1 = arith.constant 0 : i32
    return %c0_i32, %c0_i32_0 : i32, i32
  }
  func.func @transform_3(%arg0: i32) -> (i32, i32) {
    %c0_i32 = arith.constant 0 : i32
    %c0_i32_0 = arith.constant 0 : i32
    %c0_i32_1 = arith.constant 0 : i32
    return %c0_i32, %c0_i32_0 : i32, i32
  }
  func.func @transform_4(%arg0: i32) -> (i32, i32) {
    %c0_i32 = arith.constant 0 : i32
    %c0_i32_0 = arith.constant 0 : i32
    %c0_i32_1 = arith.constant 0 : i32
    return %c0_i32, %c0_i32_0 : i32, i32
  }
  func.func @transform_5(%arg0: i32) -> (i32, i32) {
    %c0_i32 = arith.constant 0 : i32
    %c0_i32_0 = arith.constant 0 : i32
    %c0_i32_1 = arith.constant 0 : i32
    return %c0_i32, %c0_i32_0 : i32, i32
  }
  func.func @transform_6(%arg0: i32) -> (i32, i32) {
    %c0_i32 = arith.constant 0 : i32
    %c0_i32_0 = arith.constant 0 : i32
    %c0_i32_1 = arith.constant 0 : i32
    return %c0_i32, %c0_i32_0 : i32, i32
  }
  func.func @transform_7(%arg0: i32) -> (i32, i32) {
    %c0_i32 = arith.constant 0 : i32
    %c0_i32_0 = arith.constant 0 : i32
    %c0_i32_1 = arith.constant 0 : i32
    return %c0_i32, %c0_i32_0 : i32, i32
  }
  func.func @transform_8(%arg0: i32) -> (i32, i32) {
    %c0_i32 = arith.constant 0 : i32
    %c0_i32_0 = arith.constant 0 : i32
    %c0_i32_1 = arith.constant 0 : i32
    return %c0_i32, %c0_i32_0 : i32, i32
  }
  func.func @transform_9(%arg0: i32) -> (i32, i32) {
    %c0_i32 = arith.constant 0 : i32
    %c0_i32_0 = arith.constant 0 : i32
    %c0_i32_1 = arith.constant 0 : i32
    return %c0_i32, %c0_i32_0 : i32, i32
  }
  func.func @transform_10(%arg0: i32) -> (i32, i32) {
    %c0_i32 = arith.constant 0 : i32
    %c0_i32_0 = arith.constant 0 : i32
    %c0_i32_1 = arith.constant 0 : i32
    return %c0_i32, %c0_i32_0 : i32, i32
  }
  func.func @transform_11(%arg0: i32) -> (i32, i32) {
    %c0_i32 = arith.constant 0 : i32
    %c0_i32_0 = arith.constant 0 : i32
    %c0_i32_1 = arith.constant 0 : i32
    return %c0_i32, %c0_i32_0 : i32, i32
  }
  func.func @transform_12(%arg0: i32) -> (i32, i32) {
    %c0_i32 = arith.constant 0 : i32
    %c0_i32_0 = arith.constant 0 : i32
    %c0_i32_1 = arith.constant 0 : i32
    return %c0_i32, %c0_i32_0 : i32, i32
  }
  func.func @transform_13(%arg0: i32) -> (i32, i32) {
    %c0_i32 = arith.constant 0 : i32
    %c0_i32_0 = arith.constant 0 : i32
    %c0_i32_1 = arith.constant 0 : i32
    return %c0_i32, %c0_i32_0 : i32, i32
  }
  func.func @transform_14(%arg0: i32) -> (i32, i32) {
    %c0_i32 = arith.constant 0 : i32
    %c0_i32_0 = arith.constant 0 : i32
    %c0_i32_1 = arith.constant 0 : i32
    return %c0_i32, %c0_i32_0 : i32, i32
  }
  func.func @transform_15(%arg0: i32) -> (i32, i32) {
    %c0_i32 = arith.constant 0 : i32
    %c0_i32_0 = arith.constant 0 : i32
    return %arg0, %c0_i32 : i32, i32
  }
}

module attributes {stable_mosaic.version = 11 : i64} {
  func.func @vqa_kernel(%arg0: i32, %arg1: memref<8x8x32xf32, #tpu.memory_space<vmem>>, %arg2: memref<8x64xf32, #tpu.memory_space<vmem>>, %arg3: memref<32x128xbf16, #tpu.memory_space<vmem>>, %arg4: memref<32x128xbf16, #tpu.memory_space<vmem>>, %arg5: memref<1x128xf32, #tpu.memory_space<vmem>>, %arg6: memref<64x128xbf16, #tpu.memory_space<vmem>>, %arg7: memref<1x128xf32, #tpu.memory_space<vmem>>, %arg8: memref<128x32xbf16, #tpu.memory_space<vmem>>, %arg9: memref<1x32xf32, #tpu.memory_space<vmem>>, %arg10: memref<64x32xbf16, #tpu.memory_space<vmem>>, %arg11: memref<1x32xf32, #tpu.memory_space<vmem>>, %arg12: memref<32x128xbf16, #tpu.memory_space<vmem>>, %arg13: memref<1x128xf32, #tpu.memory_space<vmem>>, %arg14: memref<128x128xbf16, #tpu.memory_space<vmem>>, %arg15: memref<1x128xf32, #tpu.memory_space<vmem>>, %arg16: memref<8x128xf32, #tpu.memory_space<vmem>>) attributes {dimension_semantics = [#tpu.dimension_semantics<parallel>], iteration_bounds = array<i64: 1>, scalar_prefetch = 0 : i64, scratch_operands = 0 : i64, tpu.core_type = #tpu.core_type<tc>, window_params = [{transform_indices = @transform_0, window_bounds = array<i64: 8, 8, 32>}, {transform_indices = @transform_1, window_bounds = array<i64: 8, 64>}, {pipeline_mode = #tpu.pipeline_mode<synchronous>, transform_indices = @transform_2, window_bounds = array<i64: 32, 128>}, {pipeline_mode = #tpu.pipeline_mode<synchronous>, transform_indices = @transform_3, window_bounds = array<i64: 32, 128>}, {pipeline_mode = #tpu.pipeline_mode<synchronous>, transform_indices = @transform_4, window_bounds = array<i64: 1, 128>}, {pipeline_mode = #tpu.pipeline_mode<synchronous>, transform_indices = @transform_5, window_bounds = array<i64: 64, 128>}, {pipeline_mode = #tpu.pipeline_mode<synchronous>, transform_indices = @transform_6, window_bounds = array<i64: 1, 128>}, {pipeline_mode = #tpu.pipeline_mode<synchronous>, transform_indices = @transform_7, window_bounds = array<i64: 128, 32>}, {pipeline_mode = #tpu.pipeline_mode<synchronous>, transform_indices = @transform_8, window_bounds = array<i64: 1, 32>}, {pipeline_mode = #tpu.pipeline_mode<synchronous>, transform_indices = @transform_9, window_bounds = array<i64: 64, 32>}, {pipeline_mode = #tpu.pipeline_mode<synchronous>, transform_indices = @transform_10, window_bounds = array<i64: 1, 32>}, {pipeline_mode = #tpu.pipeline_mode<synchronous>, transform_indices = @transform_11, window_bounds = array<i64: 32, 128>}, {pipeline_mode = #tpu.pipeline_mode<synchronous>, transform_indices = @transform_12, window_bounds = array<i64: 1, 128>}, {pipeline_mode = #tpu.pipeline_mode<synchronous>, transform_indices = @transform_13, window_bounds = array<i64: 128, 128>}, {pipeline_mode = #tpu.pipeline_mode<synchronous>, transform_indices = @transform_14, window_bounds = array<i64: 1, 128>}, {transform_indices = @transform_15, window_bounds = array<i64: 8, 128>}]} {
    %c0 = arith.constant 0 : index
    %c0_0 = arith.constant 0 : index
    %c0_1 = arith.constant 0 : index
    %0 = vector.load %arg1[%c0, %c0_0, %c0_1] : memref<8x8x32xf32, #tpu.memory_space<vmem>>, vector<8x8x32xf32>
    %1 = math.tanh %0 : vector<8x8x32xf32>
    %2 = vector.shape_cast %1 : vector<8x8x32xf32> to vector<64x32xf32>
    %3 = arith.truncf %2 : vector<64x32xf32> to vector<64x32xbf16>
    %c0_2 = arith.constant 0 : index
    %c0_3 = arith.constant 0 : index
    %4 = vector.load %arg3[%c0_2, %c0_3] : memref<32x128xbf16, #tpu.memory_space<vmem>>, vector<32x128xbf16>
    %cst = arith.constant dense<0.000000e+00> : vector<64x128xf32>
    %5 = tpu.matmul %3, %4, %cst {dimension_numbers = #tpu.dot_dimension_numbers<[1], [0], [0], [1], [0, 0, 1, 1], [], []>} : vector<64x32xbf16>, vector<32x128xbf16>, vector<64x128xf32> -> vector<64x128xf32>
    %6 = arith.truncf %5 : vector<64x128xf32> to vector<64x128xbf16>
    %c0_4 = arith.constant 0 : index
    %c0_5 = arith.constant 0 : index
    %7 = vector.load %arg4[%c0_4, %c0_5] : memref<32x128xbf16, #tpu.memory_space<vmem>>, vector<32x128xbf16>
    %c0_6 = arith.constant 0 : index
    %c0_7 = arith.constant 0 : index
    %8 = vector.load %arg6[%c0_6, %c0_7] : memref<64x128xbf16, #tpu.memory_space<vmem>>, vector<64x128xbf16>
    %c0_8 = arith.constant 0 : index
    %c0_9 = arith.constant 0 : index
    %9 = vector.load %arg5[%c0_8, %c0_9] : memref<1x128xf32, #tpu.memory_space<vmem>>, vector<1x128xf32>
    %10 = vector.shape_cast %9 : vector<1x128xf32> to vector<1x128xf32>
    %11 = vector.broadcast %10 : vector<1x128xf32> to vector<8x128xf32>
    %c0_10 = arith.constant 0 : index
    %c0_11 = arith.constant 0 : index
    %12 = vector.load %arg7[%c0_10, %c0_11] : memref<1x128xf32, #tpu.memory_space<vmem>>, vector<1x128xf32>
    %13 = vector.shape_cast %12 : vector<1x128xf32> to vector<1x128xf32>
    %14 = vector.broadcast %13 : vector<1x128xf32> to vector<8x128xf32>
    %15 = tpu.iota {dimensions = array<i32: 1>} : vector<8x128xi32>
    %c64_i32 = arith.constant 64 : i32
    %16 = vector.broadcast %c64_i32 : i32 to vector<8x128xi32>
    %17 = arith.cmpi sge, %15, %16 : vector<8x128xi32>
    %c96_i32 = arith.constant 96 : i32
    %18 = vector.broadcast %c96_i32 : i32 to vector<8x128xi32>
    %19 = arith.cmpi slt, %15, %18 : vector<8x128xi32>
    %20 = arith.andi %17, %19 : vector<8x128xi1>
    %cst_12 = arith.constant 0.000000e+00 : f32
    %21 = vector.broadcast %cst_12 : f32 to vector<8x32xf32>
    %22 = vector.extract_strided_slice %6 {offsets = [0, 0], sizes = [8, 128], strides = [1, 1]} : vector<64x128xbf16> to vector<8x128xbf16>
    %23 = arith.extf %22 : vector<8x128xbf16> to vector<8x128xf32>
    %24 = arith.addf %23, %11 : vector<8x128xf32>
    %25 = arith.truncf %21 : vector<8x32xf32> to vector<8x32xbf16>
    %cst_13 = arith.constant dense<0.000000e+00> : vector<8x128xf32>
    %26 = tpu.matmul %25, %7, %cst_13 {dimension_numbers = #tpu.dot_dimension_numbers<[1], [0], [0], [1], [0, 0, 1, 1], [], []>} : vector<8x32xbf16>, vector<32x128xbf16>, vector<8x128xf32> -> vector<8x128xf32>
    %27 = arith.addf %24, %26 : vector<8x128xf32>
    %28 = math.tanh %27 : vector<8x128xf32>
    %29 = arith.negf %27 : vector<8x128xf32>
    %30 = math.exp %29 : vector<8x128xf32>
    %cst_14 = arith.constant 1.000000e+00 : f32
    %31 = vector.broadcast %cst_14 : f32 to vector<8x128xf32>
    %32 = arith.addf %31, %30 : vector<8x128xf32>
    %33 = arith.divf %31, %32 : vector<8x128xf32>
    %34 = arith.select %20, %28, %33 : vector<8x128xi1>, vector<8x128xf32>
    %35 = vector.extract_strided_slice %34 {offsets = [0, 0], sizes = [8, 32], strides = [1, 1]} : vector<8x128xf32> to vector<8x32xf32>
    %36 = vector.extract_strided_slice %34 {offsets = [0, 32], sizes = [8, 32], strides = [1, 1]} : vector<8x128xf32> to vector<8x32xf32>
    %37 = vector.extract_strided_slice %34 {offsets = [0, 64], sizes = [8, 32], strides = [1, 1]} : vector<8x128xf32> to vector<8x32xf32>
    %38 = vector.extract_strided_slice %34 {offsets = [0, 96], sizes = [8, 32], strides = [1, 1]} : vector<8x128xf32> to vector<8x32xf32>
    %39 = arith.mulf %36, %21 : vector<8x32xf32>
    %40 = arith.mulf %35, %37 : vector<8x32xf32>
    %41 = arith.addf %39, %40 : vector<8x32xf32>
    %42 = math.tanh %41 : vector<8x32xf32>
    %43 = arith.mulf %38, %42 : vector<8x32xf32>
    %44 = tpu.concatenate %43, %21 in 1 : vector<8x32xf32>, vector<8x32xf32> -> vector<8x64xf32>
    %45 = arith.truncf %44 : vector<8x64xf32> to vector<8x64xbf16>
    %cst_15 = arith.constant dense<0.000000e+00> : vector<8x128xf32>
    %46 = tpu.matmul %45, %8, %cst_15 {dimension_numbers = #tpu.dot_dimension_numbers<[1], [0], [0], [1], [0, 0, 1, 1], [], []>} : vector<8x64xbf16>, vector<64x128xbf16>, vector<8x128xf32> -> vector<8x128xf32>
    %47 = arith.addf %46, %14 : vector<8x128xf32>
    %48 = math.tanh %47 : vector<8x128xf32>
    %49 = arith.negf %47 : vector<8x128xf32>
    %50 = math.exp %49 : vector<8x128xf32>
    %cst_16 = arith.constant 1.000000e+00 : f32
    %51 = vector.broadcast %cst_16 : f32 to vector<8x128xf32>
    %52 = arith.addf %51, %50 : vector<8x128xf32>
    %53 = arith.divf %51, %52 : vector<8x128xf32>
    %54 = arith.select %20, %48, %53 : vector<8x128xi1>, vector<8x128xf32>
    %55 = vector.extract_strided_slice %54 {offsets = [0, 0], sizes = [8, 32], strides = [1, 1]} : vector<8x128xf32> to vector<8x32xf32>
    %56 = vector.extract_strided_slice %54 {offsets = [0, 32], sizes = [8, 32], strides = [1, 1]} : vector<8x128xf32> to vector<8x32xf32>
    %57 = vector.extract_strided_slice %54 {offsets = [0, 64], sizes = [8, 32], strides = [1, 1]} : vector<8x128xf32> to vector<8x32xf32>
    %58 = vector.extract_strided_slice %54 {offsets = [0, 96], sizes = [8, 32], strides = [1, 1]} : vector<8x128xf32> to vector<8x32xf32>
    %59 = arith.mulf %56, %21 : vector<8x32xf32>
    %60 = arith.mulf %55, %57 : vector<8x32xf32>
    %61 = arith.addf %59, %60 : vector<8x32xf32>
    %62 = math.tanh %61 : vector<8x32xf32>
    %63 = arith.mulf %58, %62 : vector<8x32xf32>
    %64 = vector.extract_strided_slice %6 {offsets = [8, 0], sizes = [8, 128], strides = [1, 1]} : vector<64x128xbf16> to vector<8x128xbf16>
    %65 = arith.extf %64 : vector<8x128xbf16> to vector<8x128xf32>
    %66 = arith.addf %65, %11 : vector<8x128xf32>
    %67 = arith.truncf %43 : vector<8x32xf32> to vector<8x32xbf16>
    %cst_17 = arith.constant dense<0.000000e+00> : vector<8x128xf32>
    %68 = tpu.matmul %67, %7, %cst_17 {dimension_numbers = #tpu.dot_dimension_numbers<[1], [0], [0], [1], [0, 0, 1, 1], [], []>} : vector<8x32xbf16>, vector<32x128xbf16>, vector<8x128xf32> -> vector<8x128xf32>
    %69 = arith.addf %66, %68 : vector<8x128xf32>
    %70 = math.tanh %69 : vector<8x128xf32>
    %71 = arith.negf %69 : vector<8x128xf32>
    %72 = math.exp %71 : vector<8x128xf32>
    %cst_18 = arith.constant 1.000000e+00 : f32
    %73 = vector.broadcast %cst_18 : f32 to vector<8x128xf32>
    %74 = arith.addf %73, %72 : vector<8x128xf32>
    %75 = arith.divf %73, %74 : vector<8x128xf32>
    %76 = arith.select %20, %70, %75 : vector<8x128xi1>, vector<8x128xf32>
    %77 = vector.extract_strided_slice %76 {offsets = [0, 0], sizes = [8, 32], strides = [1, 1]} : vector<8x128xf32> to vector<8x32xf32>
    %78 = vector.extract_strided_slice %76 {offsets = [0, 32], sizes = [8, 32], strides = [1, 1]} : vector<8x128xf32> to vector<8x32xf32>
    %79 = vector.extract_strided_slice %76 {offsets = [0, 64], sizes = [8, 32], strides = [1, 1]} : vector<8x128xf32> to vector<8x32xf32>
    %80 = vector.extract_strided_slice %76 {offsets = [0, 96], sizes = [8, 32], strides = [1, 1]} : vector<8x128xf32> to vector<8x32xf32>
    %81 = arith.mulf %78, %41 : vector<8x32xf32>
    %82 = arith.mulf %77, %79 : vector<8x32xf32>
    %83 = arith.addf %81, %82 : vector<8x32xf32>
    %84 = math.tanh %83 : vector<8x32xf32>
    %85 = arith.mulf %80, %84 : vector<8x32xf32>
    %86 = tpu.concatenate %85, %63 in 1 : vector<8x32xf32>, vector<8x32xf32> -> vector<8x64xf32>
    %87 = arith.truncf %86 : vector<8x64xf32> to vector<8x64xbf16>
    %cst_19 = arith.constant dense<0.000000e+00> : vector<8x128xf32>
    %88 = tpu.matmul %87, %8, %cst_19 {dimension_numbers = #tpu.dot_dimension_numbers<[1], [0], [0], [1], [0, 0, 1, 1], [], []>} : vector<8x64xbf16>, vector<64x128xbf16>, vector<8x128xf32> -> vector<8x128xf32>
    %89 = arith.addf %88, %14 : vector<8x128xf32>
    %90 = math.tanh %89 : vector<8x128xf32>
    %91 = arith.negf %89 : vector<8x128xf32>
    %92 = math.exp %91 : vector<8x128xf32>
    %cst_20 = arith.constant 1.000000e+00 : f32
    %93 = vector.broadcast %cst_20 : f32 to vector<8x128xf32>
    %94 = arith.addf %93, %92 : vector<8x128xf32>
    %95 = arith.divf %93, %94 : vector<8x128xf32>
    %96 = arith.select %20, %90, %95 : vector<8x128xi1>, vector<8x128xf32>
    %97 = vector.extract_strided_slice %96 {offsets = [0, 0], sizes = [8, 32], strides = [1, 1]} : vector<8x128xf32> to vector<8x32xf32>
    %98 = vector.extract_strided_slice %96 {offsets = [0, 32], sizes = [8, 32], strides = [1, 1]} : vector<8x128xf32> to vector<8x32xf32>
    %99 = vector.extract_strided_slice %96 {offsets = [0, 64], sizes = [8, 32], strides = [1, 1]} : vector<8x128xf32> to vector<8x32xf32>
    %100 = vector.extract_strided_slice %96 {offsets = [0, 96], sizes = [8, 32], strides = [1, 1]} : vector<8x128xf32> to vector<8x32xf32>
    %101 = arith.mulf %98, %61 : vector<8x32xf32>
    %102 = arith.mulf %97, %99 : vector<8x32xf32>
    %103 = arith.addf %101, %102 : vector<8x32xf32>
    %104 = math.tanh %103 : vector<8x32xf32>
    %105 = arith.mulf %100, %104 : vector<8x32xf32>
    %106 = vector.extract_strided_slice %6 {offsets = [16, 0], sizes = [8, 128], strides = [1, 1]} : vector<64x128xbf16> to vector<8x128xbf16>
    %107 = arith.extf %106 : vector<8x128xbf16> to vector<8x128xf32>
    %108 = arith.addf %107, %11 : vector<8x128xf32>
    %109 = arith.truncf %85 : vector<8x32xf32> to vector<8x32xbf16>
    %cst_21 = arith.constant dense<0.000000e+00> : vector<8x128xf32>
    %110 = tpu.matmul %109, %7, %cst_21 {dimension_numbers = #tpu.dot_dimension_numbers<[1], [0], [0], [1], [0, 0, 1, 1], [], []>} : vector<8x32xbf16>, vector<32x128xbf16>, vector<8x128xf32> -> vector<8x128xf32>
    %111 = arith.addf %108, %110 : vector<8x128xf32>
    %112 = math.tanh %111 : vector<8x128xf32>
    %113 = arith.negf %111 : vector<8x128xf32>
    %114 = math.exp %113 : vector<8x128xf32>
    %cst_22 = arith.constant 1.000000e+00 : f32
    %115 = vector.broadcast %cst_22 : f32 to vector<8x128xf32>
    %116 = arith.addf %115, %114 : vector<8x128xf32>
    %117 = arith.divf %115, %116 : vector<8x128xf32>
    %118 = arith.select %20, %112, %117 : vector<8x128xi1>, vector<8x128xf32>
    %119 = vector.extract_strided_slice %118 {offsets = [0, 0], sizes = [8, 32], strides = [1, 1]} : vector<8x128xf32> to vector<8x32xf32>
    %120 = vector.extract_strided_slice %118 {offsets = [0, 32], sizes = [8, 32], strides = [1, 1]} : vector<8x128xf32> to vector<8x32xf32>
    %121 = vector.extract_strided_slice %118 {offsets = [0, 64], sizes = [8, 32], strides = [1, 1]} : vector<8x128xf32> to vector<8x32xf32>
    %122 = vector.extract_strided_slice %118 {offsets = [0, 96], sizes = [8, 32], strides = [1, 1]} : vector<8x128xf32> to vector<8x32xf32>
    %123 = arith.mulf %120, %83 : vector<8x32xf32>
    %124 = arith.mulf %119, %121 : vector<8x32xf32>
    %125 = arith.addf %123, %124 : vector<8x32xf32>
    %126 = math.tanh %125 : vector<8x32xf32>
    %127 = arith.mulf %122, %126 : vector<8x32xf32>
    %128 = tpu.concatenate %127, %105 in 1 : vector<8x32xf32>, vector<8x32xf32> -> vector<8x64xf32>
    %129 = arith.truncf %128 : vector<8x64xf32> to vector<8x64xbf16>
    %cst_23 = arith.constant dense<0.000000e+00> : vector<8x128xf32>
    %130 = tpu.matmul %129, %8, %cst_23 {dimension_numbers = #tpu.dot_dimension_numbers<[1], [0], [0], [1], [0, 0, 1, 1], [], []>} : vector<8x64xbf16>, vector<64x128xbf16>, vector<8x128xf32> -> vector<8x128xf32>
    %131 = arith.addf %130, %14 : vector<8x128xf32>
    %132 = math.tanh %131 : vector<8x128xf32>
    %133 = arith.negf %131 : vector<8x128xf32>
    %134 = math.exp %133 : vector<8x128xf32>
    %cst_24 = arith.constant 1.000000e+00 : f32
    %135 = vector.broadcast %cst_24 : f32 to vector<8x128xf32>
    %136 = arith.addf %135, %134 : vector<8x128xf32>
    %137 = arith.divf %135, %136 : vector<8x128xf32>
    %138 = arith.select %20, %132, %137 : vector<8x128xi1>, vector<8x128xf32>
    %139 = vector.extract_strided_slice %138 {offsets = [0, 0], sizes = [8, 32], strides = [1, 1]} : vector<8x128xf32> to vector<8x32xf32>
    %140 = vector.extract_strided_slice %138 {offsets = [0, 32], sizes = [8, 32], strides = [1, 1]} : vector<8x128xf32> to vector<8x32xf32>
    %141 = vector.extract_strided_slice %138 {offsets = [0, 64], sizes = [8, 32], strides = [1, 1]} : vector<8x128xf32> to vector<8x32xf32>
    %142 = vector.extract_strided_slice %138 {offsets = [0, 96], sizes = [8, 32], strides = [1, 1]} : vector<8x128xf32> to vector<8x32xf32>
    %143 = arith.mulf %140, %103 : vector<8x32xf32>
    %144 = arith.mulf %139, %141 : vector<8x32xf32>
    %145 = arith.addf %143, %144 : vector<8x32xf32>
    %146 = math.tanh %145 : vector<8x32xf32>
    %147 = arith.mulf %142, %146 : vector<8x32xf32>
    %148 = vector.extract_strided_slice %6 {offsets = [24, 0], sizes = [8, 128], strides = [1, 1]} : vector<64x128xbf16> to vector<8x128xbf16>
    %149 = arith.extf %148 : vector<8x128xbf16> to vector<8x128xf32>
    %150 = arith.addf %149, %11 : vector<8x128xf32>
    %151 = arith.truncf %127 : vector<8x32xf32> to vector<8x32xbf16>
    %cst_25 = arith.constant dense<0.000000e+00> : vector<8x128xf32>
    %152 = tpu.matmul %151, %7, %cst_25 {dimension_numbers = #tpu.dot_dimension_numbers<[1], [0], [0], [1], [0, 0, 1, 1], [], []>} : vector<8x32xbf16>, vector<32x128xbf16>, vector<8x128xf32> -> vector<8x128xf32>
    %153 = arith.addf %150, %152 : vector<8x128xf32>
    %154 = math.tanh %153 : vector<8x128xf32>
    %155 = arith.negf %153 : vector<8x128xf32>
    %156 = math.exp %155 : vector<8x128xf32>
    %cst_26 = arith.constant 1.000000e+00 : f32
    %157 = vector.broadcast %cst_26 : f32 to vector<8x128xf32>
    %158 = arith.addf %157, %156 : vector<8x128xf32>
    %159 = arith.divf %157, %158 : vector<8x128xf32>
    %160 = arith.select %20, %154, %159 : vector<8x128xi1>, vector<8x128xf32>
    %161 = vector.extract_strided_slice %160 {offsets = [0, 0], sizes = [8, 32], strides = [1, 1]} : vector<8x128xf32> to vector<8x32xf32>
    %162 = vector.extract_strided_slice %160 {offsets = [0, 32], sizes = [8, 32], strides = [1, 1]} : vector<8x128xf32> to vector<8x32xf32>
    %163 = vector.extract_strided_slice %160 {offsets = [0, 64], sizes = [8, 32], strides = [1, 1]} : vector<8x128xf32> to vector<8x32xf32>
    %164 = vector.extract_strided_slice %160 {offsets = [0, 96], sizes = [8, 32], strides = [1, 1]} : vector<8x128xf32> to vector<8x32xf32>
    %165 = arith.mulf %162, %125 : vector<8x32xf32>
    %166 = arith.mulf %161, %163 : vector<8x32xf32>
    %167 = arith.addf %165, %166 : vector<8x32xf32>
    %168 = math.tanh %167 : vector<8x32xf32>
    %169 = arith.mulf %164, %168 : vector<8x32xf32>
    %170 = tpu.concatenate %169, %147 in 1 : vector<8x32xf32>, vector<8x32xf32> -> vector<8x64xf32>
    %171 = arith.truncf %170 : vector<8x64xf32> to vector<8x64xbf16>
    %cst_27 = arith.constant dense<0.000000e+00> : vector<8x128xf32>
    %172 = tpu.matmul %171, %8, %cst_27 {dimension_numbers = #tpu.dot_dimension_numbers<[1], [0], [0], [1], [0, 0, 1, 1], [], []>} : vector<8x64xbf16>, vector<64x128xbf16>, vector<8x128xf32> -> vector<8x128xf32>
    %173 = arith.addf %172, %14 : vector<8x128xf32>
    %174 = math.tanh %173 : vector<8x128xf32>
    %175 = arith.negf %173 : vector<8x128xf32>
    %176 = math.exp %175 : vector<8x128xf32>
    %cst_28 = arith.constant 1.000000e+00 : f32
    %177 = vector.broadcast %cst_28 : f32 to vector<8x128xf32>
    %178 = arith.addf %177, %176 : vector<8x128xf32>
    %179 = arith.divf %177, %178 : vector<8x128xf32>
    %180 = arith.select %20, %174, %179 : vector<8x128xi1>, vector<8x128xf32>
    %181 = vector.extract_strided_slice %180 {offsets = [0, 0], sizes = [8, 32], strides = [1, 1]} : vector<8x128xf32> to vector<8x32xf32>
    %182 = vector.extract_strided_slice %180 {offsets = [0, 32], sizes = [8, 32], strides = [1, 1]} : vector<8x128xf32> to vector<8x32xf32>
    %183 = vector.extract_strided_slice %180 {offsets = [0, 64], sizes = [8, 32], strides = [1, 1]} : vector<8x128xf32> to vector<8x32xf32>
    %184 = vector.extract_strided_slice %180 {offsets = [0, 96], sizes = [8, 32], strides = [1, 1]} : vector<8x128xf32> to vector<8x32xf32>
    %185 = arith.mulf %182, %145 : vector<8x32xf32>
    %186 = arith.mulf %181, %183 : vector<8x32xf32>
    %187 = arith.addf %185, %186 : vector<8x32xf32>
    %188 = math.tanh %187 : vector<8x32xf32>
    %189 = arith.mulf %184, %188 : vector<8x32xf32>
    %190 = vector.extract_strided_slice %6 {offsets = [32, 0], sizes = [8, 128], strides = [1, 1]} : vector<64x128xbf16> to vector<8x128xbf16>
    %191 = arith.extf %190 : vector<8x128xbf16> to vector<8x128xf32>
    %192 = arith.addf %191, %11 : vector<8x128xf32>
    %193 = arith.truncf %169 : vector<8x32xf32> to vector<8x32xbf16>
    %cst_29 = arith.constant dense<0.000000e+00> : vector<8x128xf32>
    %194 = tpu.matmul %193, %7, %cst_29 {dimension_numbers = #tpu.dot_dimension_numbers<[1], [0], [0], [1], [0, 0, 1, 1], [], []>} : vector<8x32xbf16>, vector<32x128xbf16>, vector<8x128xf32> -> vector<8x128xf32>
    %195 = arith.addf %192, %194 : vector<8x128xf32>
    %196 = math.tanh %195 : vector<8x128xf32>
    %197 = arith.negf %195 : vector<8x128xf32>
    %198 = math.exp %197 : vector<8x128xf32>
    %cst_30 = arith.constant 1.000000e+00 : f32
    %199 = vector.broadcast %cst_30 : f32 to vector<8x128xf32>
    %200 = arith.addf %199, %198 : vector<8x128xf32>
    %201 = arith.divf %199, %200 : vector<8x128xf32>
    %202 = arith.select %20, %196, %201 : vector<8x128xi1>, vector<8x128xf32>
    %203 = vector.extract_strided_slice %202 {offsets = [0, 0], sizes = [8, 32], strides = [1, 1]} : vector<8x128xf32> to vector<8x32xf32>
    %204 = vector.extract_strided_slice %202 {offsets = [0, 32], sizes = [8, 32], strides = [1, 1]} : vector<8x128xf32> to vector<8x32xf32>
    %205 = vector.extract_strided_slice %202 {offsets = [0, 64], sizes = [8, 32], strides = [1, 1]} : vector<8x128xf32> to vector<8x32xf32>
    %206 = vector.extract_strided_slice %202 {offsets = [0, 96], sizes = [8, 32], strides = [1, 1]} : vector<8x128xf32> to vector<8x32xf32>
    %207 = arith.mulf %204, %167 : vector<8x32xf32>
    %208 = arith.mulf %203, %205 : vector<8x32xf32>
    %209 = arith.addf %207, %208 : vector<8x32xf32>
    %210 = math.tanh %209 : vector<8x32xf32>
    %211 = arith.mulf %206, %210 : vector<8x32xf32>
    %212 = tpu.concatenate %211, %189 in 1 : vector<8x32xf32>, vector<8x32xf32> -> vector<8x64xf32>
    %213 = arith.truncf %212 : vector<8x64xf32> to vector<8x64xbf16>
    %cst_31 = arith.constant dense<0.000000e+00> : vector<8x128xf32>
    %214 = tpu.matmul %213, %8, %cst_31 {dimension_numbers = #tpu.dot_dimension_numbers<[1], [0], [0], [1], [0, 0, 1, 1], [], []>} : vector<8x64xbf16>, vector<64x128xbf16>, vector<8x128xf32> -> vector<8x128xf32>
    %215 = arith.addf %214, %14 : vector<8x128xf32>
    %216 = math.tanh %215 : vector<8x128xf32>
    %217 = arith.negf %215 : vector<8x128xf32>
    %218 = math.exp %217 : vector<8x128xf32>
    %cst_32 = arith.constant 1.000000e+00 : f32
    %219 = vector.broadcast %cst_32 : f32 to vector<8x128xf32>
    %220 = arith.addf %219, %218 : vector<8x128xf32>
    %221 = arith.divf %219, %220 : vector<8x128xf32>
    %222 = arith.select %20, %216, %221 : vector<8x128xi1>, vector<8x128xf32>
    %223 = vector.extract_strided_slice %222 {offsets = [0, 0], sizes = [8, 32], strides = [1, 1]} : vector<8x128xf32> to vector<8x32xf32>
    %224 = vector.extract_strided_slice %222 {offsets = [0, 32], sizes = [8, 32], strides = [1, 1]} : vector<8x128xf32> to vector<8x32xf32>
    %225 = vector.extract_strided_slice %222 {offsets = [0, 64], sizes = [8, 32], strides = [1, 1]} : vector<8x128xf32> to vector<8x32xf32>
    %226 = vector.extract_strided_slice %222 {offsets = [0, 96], sizes = [8, 32], strides = [1, 1]} : vector<8x128xf32> to vector<8x32xf32>
    %227 = arith.mulf %224, %187 : vector<8x32xf32>
    %228 = arith.mulf %223, %225 : vector<8x32xf32>
    %229 = arith.addf %227, %228 : vector<8x32xf32>
    %230 = math.tanh %229 : vector<8x32xf32>
    %231 = arith.mulf %226, %230 : vector<8x32xf32>
    %232 = vector.extract_strided_slice %6 {offsets = [40, 0], sizes = [8, 128], strides = [1, 1]} : vector<64x128xbf16> to vector<8x128xbf16>
    %233 = arith.extf %232 : vector<8x128xbf16> to vector<8x128xf32>
    %234 = arith.addf %233, %11 : vector<8x128xf32>
    %235 = arith.truncf %211 : vector<8x32xf32> to vector<8x32xbf16>
    %cst_33 = arith.constant dense<0.000000e+00> : vector<8x128xf32>
    %236 = tpu.matmul %235, %7, %cst_33 {dimension_numbers = #tpu.dot_dimension_numbers<[1], [0], [0], [1], [0, 0, 1, 1], [], []>} : vector<8x32xbf16>, vector<32x128xbf16>, vector<8x128xf32> -> vector<8x128xf32>
    %237 = arith.addf %234, %236 : vector<8x128xf32>
    %238 = math.tanh %237 : vector<8x128xf32>
    %239 = arith.negf %237 : vector<8x128xf32>
    %240 = math.exp %239 : vector<8x128xf32>
    %cst_34 = arith.constant 1.000000e+00 : f32
    %241 = vector.broadcast %cst_34 : f32 to vector<8x128xf32>
    %242 = arith.addf %241, %240 : vector<8x128xf32>
    %243 = arith.divf %241, %242 : vector<8x128xf32>
    %244 = arith.select %20, %238, %243 : vector<8x128xi1>, vector<8x128xf32>
    %245 = vector.extract_strided_slice %244 {offsets = [0, 0], sizes = [8, 32], strides = [1, 1]} : vector<8x128xf32> to vector<8x32xf32>
    %246 = vector.extract_strided_slice %244 {offsets = [0, 32], sizes = [8, 32], strides = [1, 1]} : vector<8x128xf32> to vector<8x32xf32>
    %247 = vector.extract_strided_slice %244 {offsets = [0, 64], sizes = [8, 32], strides = [1, 1]} : vector<8x128xf32> to vector<8x32xf32>
    %248 = vector.extract_strided_slice %244 {offsets = [0, 96], sizes = [8, 32], strides = [1, 1]} : vector<8x128xf32> to vector<8x32xf32>
    %249 = arith.mulf %246, %209 : vector<8x32xf32>
    %250 = arith.mulf %245, %247 : vector<8x32xf32>
    %251 = arith.addf %249, %250 : vector<8x32xf32>
    %252 = math.tanh %251 : vector<8x32xf32>
    %253 = arith.mulf %248, %252 : vector<8x32xf32>
    %254 = tpu.concatenate %253, %231 in 1 : vector<8x32xf32>, vector<8x32xf32> -> vector<8x64xf32>
    %255 = arith.truncf %254 : vector<8x64xf32> to vector<8x64xbf16>
    %cst_35 = arith.constant dense<0.000000e+00> : vector<8x128xf32>
    %256 = tpu.matmul %255, %8, %cst_35 {dimension_numbers = #tpu.dot_dimension_numbers<[1], [0], [0], [1], [0, 0, 1, 1], [], []>} : vector<8x64xbf16>, vector<64x128xbf16>, vector<8x128xf32> -> vector<8x128xf32>
    %257 = arith.addf %256, %14 : vector<8x128xf32>
    %258 = math.tanh %257 : vector<8x128xf32>
    %259 = arith.negf %257 : vector<8x128xf32>
    %260 = math.exp %259 : vector<8x128xf32>
    %cst_36 = arith.constant 1.000000e+00 : f32
    %261 = vector.broadcast %cst_36 : f32 to vector<8x128xf32>
    %262 = arith.addf %261, %260 : vector<8x128xf32>
    %263 = arith.divf %261, %262 : vector<8x128xf32>
    %264 = arith.select %20, %258, %263 : vector<8x128xi1>, vector<8x128xf32>
    %265 = vector.extract_strided_slice %264 {offsets = [0, 0], sizes = [8, 32], strides = [1, 1]} : vector<8x128xf32> to vector<8x32xf32>
    %266 = vector.extract_strided_slice %264 {offsets = [0, 32], sizes = [8, 32], strides = [1, 1]} : vector<8x128xf32> to vector<8x32xf32>
    %267 = vector.extract_strided_slice %264 {offsets = [0, 64], sizes = [8, 32], strides = [1, 1]} : vector<8x128xf32> to vector<8x32xf32>
    %268 = vector.extract_strided_slice %264 {offsets = [0, 96], sizes = [8, 32], strides = [1, 1]} : vector<8x128xf32> to vector<8x32xf32>
    %269 = arith.mulf %266, %229 : vector<8x32xf32>
    %270 = arith.mulf %265, %267 : vector<8x32xf32>
    %271 = arith.addf %269, %270 : vector<8x32xf32>
    %272 = math.tanh %271 : vector<8x32xf32>
    %273 = arith.mulf %268, %272 : vector<8x32xf32>
    %274 = vector.extract_strided_slice %6 {offsets = [48, 0], sizes = [8, 128], strides = [1, 1]} : vector<64x128xbf16> to vector<8x128xbf16>
    %275 = arith.extf %274 : vector<8x128xbf16> to vector<8x128xf32>
    %276 = arith.addf %275, %11 : vector<8x128xf32>
    %277 = arith.truncf %253 : vector<8x32xf32> to vector<8x32xbf16>
    %cst_37 = arith.constant dense<0.000000e+00> : vector<8x128xf32>
    %278 = tpu.matmul %277, %7, %cst_37 {dimension_numbers = #tpu.dot_dimension_numbers<[1], [0], [0], [1], [0, 0, 1, 1], [], []>} : vector<8x32xbf16>, vector<32x128xbf16>, vector<8x128xf32> -> vector<8x128xf32>
    %279 = arith.addf %276, %278 : vector<8x128xf32>
    %280 = math.tanh %279 : vector<8x128xf32>
    %281 = arith.negf %279 : vector<8x128xf32>
    %282 = math.exp %281 : vector<8x128xf32>
    %cst_38 = arith.constant 1.000000e+00 : f32
    %283 = vector.broadcast %cst_38 : f32 to vector<8x128xf32>
    %284 = arith.addf %283, %282 : vector<8x128xf32>
    %285 = arith.divf %283, %284 : vector<8x128xf32>
    %286 = arith.select %20, %280, %285 : vector<8x128xi1>, vector<8x128xf32>
    %287 = vector.extract_strided_slice %286 {offsets = [0, 0], sizes = [8, 32], strides = [1, 1]} : vector<8x128xf32> to vector<8x32xf32>
    %288 = vector.extract_strided_slice %286 {offsets = [0, 32], sizes = [8, 32], strides = [1, 1]} : vector<8x128xf32> to vector<8x32xf32>
    %289 = vector.extract_strided_slice %286 {offsets = [0, 64], sizes = [8, 32], strides = [1, 1]} : vector<8x128xf32> to vector<8x32xf32>
    %290 = vector.extract_strided_slice %286 {offsets = [0, 96], sizes = [8, 32], strides = [1, 1]} : vector<8x128xf32> to vector<8x32xf32>
    %291 = arith.mulf %288, %251 : vector<8x32xf32>
    %292 = arith.mulf %287, %289 : vector<8x32xf32>
    %293 = arith.addf %291, %292 : vector<8x32xf32>
    %294 = math.tanh %293 : vector<8x32xf32>
    %295 = arith.mulf %290, %294 : vector<8x32xf32>
    %296 = tpu.concatenate %295, %273 in 1 : vector<8x32xf32>, vector<8x32xf32> -> vector<8x64xf32>
    %297 = arith.truncf %296 : vector<8x64xf32> to vector<8x64xbf16>
    %cst_39 = arith.constant dense<0.000000e+00> : vector<8x128xf32>
    %298 = tpu.matmul %297, %8, %cst_39 {dimension_numbers = #tpu.dot_dimension_numbers<[1], [0], [0], [1], [0, 0, 1, 1], [], []>} : vector<8x64xbf16>, vector<64x128xbf16>, vector<8x128xf32> -> vector<8x128xf32>
    %299 = arith.addf %298, %14 : vector<8x128xf32>
    %300 = math.tanh %299 : vector<8x128xf32>
    %301 = arith.negf %299 : vector<8x128xf32>
    %302 = math.exp %301 : vector<8x128xf32>
    %cst_40 = arith.constant 1.000000e+00 : f32
    %303 = vector.broadcast %cst_40 : f32 to vector<8x128xf32>
    %304 = arith.addf %303, %302 : vector<8x128xf32>
    %305 = arith.divf %303, %304 : vector<8x128xf32>
    %306 = arith.select %20, %300, %305 : vector<8x128xi1>, vector<8x128xf32>
    %307 = vector.extract_strided_slice %306 {offsets = [0, 0], sizes = [8, 32], strides = [1, 1]} : vector<8x128xf32> to vector<8x32xf32>
    %308 = vector.extract_strided_slice %306 {offsets = [0, 32], sizes = [8, 32], strides = [1, 1]} : vector<8x128xf32> to vector<8x32xf32>
    %309 = vector.extract_strided_slice %306 {offsets = [0, 64], sizes = [8, 32], strides = [1, 1]} : vector<8x128xf32> to vector<8x32xf32>
    %310 = vector.extract_strided_slice %306 {offsets = [0, 96], sizes = [8, 32], strides = [1, 1]} : vector<8x128xf32> to vector<8x32xf32>
    %311 = arith.mulf %308, %271 : vector<8x32xf32>
    %312 = arith.mulf %307, %309 : vector<8x32xf32>
    %313 = arith.addf %311, %312 : vector<8x32xf32>
    %314 = math.tanh %313 : vector<8x32xf32>
    %315 = arith.mulf %310, %314 : vector<8x32xf32>
    %316 = vector.extract_strided_slice %6 {offsets = [56, 0], sizes = [8, 128], strides = [1, 1]} : vector<64x128xbf16> to vector<8x128xbf16>
    %317 = arith.extf %316 : vector<8x128xbf16> to vector<8x128xf32>
    %318 = arith.addf %317, %11 : vector<8x128xf32>
    %319 = arith.truncf %295 : vector<8x32xf32> to vector<8x32xbf16>
    %cst_41 = arith.constant dense<0.000000e+00> : vector<8x128xf32>
    %320 = tpu.matmul %319, %7, %cst_41 {dimension_numbers = #tpu.dot_dimension_numbers<[1], [0], [0], [1], [0, 0, 1, 1], [], []>} : vector<8x32xbf16>, vector<32x128xbf16>, vector<8x128xf32> -> vector<8x128xf32>
    %321 = arith.addf %318, %320 : vector<8x128xf32>
    %322 = math.tanh %321 : vector<8x128xf32>
    %323 = arith.negf %321 : vector<8x128xf32>
    %324 = math.exp %323 : vector<8x128xf32>
    %cst_42 = arith.constant 1.000000e+00 : f32
    %325 = vector.broadcast %cst_42 : f32 to vector<8x128xf32>
    %326 = arith.addf %325, %324 : vector<8x128xf32>
    %327 = arith.divf %325, %326 : vector<8x128xf32>
    %328 = arith.select %20, %322, %327 : vector<8x128xi1>, vector<8x128xf32>
    %329 = vector.extract_strided_slice %328 {offsets = [0, 0], sizes = [8, 32], strides = [1, 1]} : vector<8x128xf32> to vector<8x32xf32>
    %330 = vector.extract_strided_slice %328 {offsets = [0, 32], sizes = [8, 32], strides = [1, 1]} : vector<8x128xf32> to vector<8x32xf32>
    %331 = vector.extract_strided_slice %328 {offsets = [0, 64], sizes = [8, 32], strides = [1, 1]} : vector<8x128xf32> to vector<8x32xf32>
    %332 = vector.extract_strided_slice %328 {offsets = [0, 96], sizes = [8, 32], strides = [1, 1]} : vector<8x128xf32> to vector<8x32xf32>
    %333 = arith.mulf %330, %293 : vector<8x32xf32>
    %334 = arith.mulf %329, %331 : vector<8x32xf32>
    %335 = arith.addf %333, %334 : vector<8x32xf32>
    %336 = math.tanh %335 : vector<8x32xf32>
    %337 = arith.mulf %332, %336 : vector<8x32xf32>
    %338 = tpu.concatenate %337, %315 in 1 : vector<8x32xf32>, vector<8x32xf32> -> vector<8x64xf32>
    %339 = arith.truncf %338 : vector<8x64xf32> to vector<8x64xbf16>
    %cst_43 = arith.constant dense<0.000000e+00> : vector<8x128xf32>
    %340 = tpu.matmul %339, %8, %cst_43 {dimension_numbers = #tpu.dot_dimension_numbers<[1], [0], [0], [1], [0, 0, 1, 1], [], []>} : vector<8x64xbf16>, vector<64x128xbf16>, vector<8x128xf32> -> vector<8x128xf32>
    %341 = arith.addf %340, %14 : vector<8x128xf32>
    %342 = math.tanh %341 : vector<8x128xf32>
    %343 = arith.negf %341 : vector<8x128xf32>
    %344 = math.exp %343 : vector<8x128xf32>
    %cst_44 = arith.constant 1.000000e+00 : f32
    %345 = vector.broadcast %cst_44 : f32 to vector<8x128xf32>
    %346 = arith.addf %345, %344 : vector<8x128xf32>
    %347 = arith.divf %345, %346 : vector<8x128xf32>
    %348 = arith.select %20, %342, %347 : vector<8x128xi1>, vector<8x128xf32>
    %349 = vector.extract_strided_slice %348 {offsets = [0, 0], sizes = [8, 32], strides = [1, 1]} : vector<8x128xf32> to vector<8x32xf32>
    %350 = vector.extract_strided_slice %348 {offsets = [0, 32], sizes = [8, 32], strides = [1, 1]} : vector<8x128xf32> to vector<8x32xf32>
    %351 = vector.extract_strided_slice %348 {offsets = [0, 64], sizes = [8, 32], strides = [1, 1]} : vector<8x128xf32> to vector<8x32xf32>
    %352 = vector.extract_strided_slice %348 {offsets = [0, 96], sizes = [8, 32], strides = [1, 1]} : vector<8x128xf32> to vector<8x32xf32>
    %353 = arith.mulf %350, %313 : vector<8x32xf32>
    %354 = arith.mulf %349, %351 : vector<8x32xf32>
    %355 = arith.addf %353, %354 : vector<8x32xf32>
    %356 = math.tanh %355 : vector<8x32xf32>
    %357 = arith.mulf %352, %356 : vector<8x32xf32>
    %358 = tpu.concatenate %337, %357, %335, %355 in 1 : vector<8x32xf32>, vector<8x32xf32>, vector<8x32xf32>, vector<8x32xf32> -> vector<8x128xf32>
    %359 = arith.truncf %358 : vector<8x128xf32> to vector<8x128xbf16>
    %c0_45 = arith.constant 0 : index
    %c0_46 = arith.constant 0 : index
    %360 = vector.load %arg8[%c0_45, %c0_46] : memref<128x32xbf16, #tpu.memory_space<vmem>>, vector<128x32xbf16>
    %cst_47 = arith.constant dense<0.000000e+00> : vector<8x32xf32>
    %361 = tpu.matmul %359, %360, %cst_47 {dimension_numbers = #tpu.dot_dimension_numbers<[1], [0], [0], [1], [0, 0, 1, 1], [], []>} : vector<8x128xbf16>, vector<128x32xbf16>, vector<8x32xf32> -> vector<8x32xf32>
    %c0_48 = arith.constant 0 : index
    %c0_49 = arith.constant 0 : index
    %362 = vector.load %arg9[%c0_48, %c0_49] : memref<1x32xf32, #tpu.memory_space<vmem>>, vector<1x32xf32>
    %363 = vector.broadcast %362 : vector<1x32xf32> to vector<8x32xf32>
    %364 = arith.addf %361, %363 : vector<8x32xf32>
    %365 = math.tanh %364 : vector<8x32xf32>
    %c0_50 = arith.constant 0 : index
    %c0_51 = arith.constant 0 : index
    %366 = vector.load %arg2[%c0_50, %c0_51] : memref<8x64xf32, #tpu.memory_space<vmem>>, vector<8x64xf32>
    %367 = arith.truncf %366 : vector<8x64xf32> to vector<8x64xbf16>
    %c0_52 = arith.constant 0 : index
    %c0_53 = arith.constant 0 : index
    %368 = vector.load %arg10[%c0_52, %c0_53] : memref<64x32xbf16, #tpu.memory_space<vmem>>, vector<64x32xbf16>
    %cst_54 = arith.constant dense<0.000000e+00> : vector<8x32xf32>
    %369 = tpu.matmul %367, %368, %cst_54 {dimension_numbers = #tpu.dot_dimension_numbers<[1], [0], [0], [1], [0, 0, 1, 1], [], []>} : vector<8x64xbf16>, vector<64x32xbf16>, vector<8x32xf32> -> vector<8x32xf32>
    %c0_55 = arith.constant 0 : index
    %c0_56 = arith.constant 0 : index
    %370 = vector.load %arg11[%c0_55, %c0_56] : memref<1x32xf32, #tpu.memory_space<vmem>>, vector<1x32xf32>
    %371 = vector.broadcast %370 : vector<1x32xf32> to vector<8x32xf32>
    %372 = arith.addf %369, %371 : vector<8x32xf32>
    %373 = math.tanh %372 : vector<8x32xf32>
    %374 = arith.mulf %365, %373 : vector<8x32xf32>
    %375 = arith.truncf %374 : vector<8x32xf32> to vector<8x32xbf16>
    %c0_57 = arith.constant 0 : index
    %c0_58 = arith.constant 0 : index
    %376 = vector.load %arg12[%c0_57, %c0_58] : memref<32x128xbf16, #tpu.memory_space<vmem>>, vector<32x128xbf16>
    %cst_59 = arith.constant dense<0.000000e+00> : vector<8x128xf32>
    %377 = tpu.matmul %375, %376, %cst_59 {dimension_numbers = #tpu.dot_dimension_numbers<[1], [0], [0], [1], [0, 0, 1, 1], [], []>} : vector<8x32xbf16>, vector<32x128xbf16>, vector<8x128xf32> -> vector<8x128xf32>
    %c0_60 = arith.constant 0 : index
    %c0_61 = arith.constant 0 : index
    %378 = vector.load %arg13[%c0_60, %c0_61] : memref<1x128xf32, #tpu.memory_space<vmem>>, vector<1x128xf32>
    %379 = vector.broadcast %378 : vector<1x128xf32> to vector<8x128xf32>
    %380 = arith.addf %377, %379 : vector<8x128xf32>
    %381 = math.tanh %380 : vector<8x128xf32>
    %382 = arith.truncf %381 : vector<8x128xf32> to vector<8x128xbf16>
    %c0_62 = arith.constant 0 : index
    %c0_63 = arith.constant 0 : index
    %383 = vector.load %arg14[%c0_62, %c0_63] : memref<128x128xbf16, #tpu.memory_space<vmem>>, vector<128x128xbf16>
    %cst_64 = arith.constant dense<0.000000e+00> : vector<8x128xf32>
    %384 = tpu.matmul %382, %383, %cst_64 {dimension_numbers = #tpu.dot_dimension_numbers<[1], [0], [0], [1], [0, 0, 1, 1], [], []>} : vector<8x128xbf16>, vector<128x128xbf16>, vector<8x128xf32> -> vector<8x128xf32>
    %c0_65 = arith.constant 0 : index
    %c0_66 = arith.constant 0 : index
    %385 = vector.load %arg15[%c0_65, %c0_66] : memref<1x128xf32, #tpu.memory_space<vmem>>, vector<1x128xf32>
    %386 = vector.broadcast %385 : vector<1x128xf32> to vector<8x128xf32>
    %387 = arith.addf %384, %386 : vector<8x128xf32>
    %c0_67 = arith.constant 0 : index
    %c0_68 = arith.constant 0 : index
    %388 = vector.load %arg16[%c0_67, %c0_68] : memref<8x128xf32, #tpu.memory_space<vmem>>, vector<8x128xf32>
    tpu.vector_store %arg16[%c0_67, %c0_68], %387 {strides = array<i32>} : memref<8x128xf32, #tpu.memory_space<vmem>>, vector<8x128xf32>,
    return
  }
  func.func @transform_0(%arg0: i32) -> (i32, i32, i32) {
    %c0_i32 = arith.constant 0 : i32
    %c0_i32_0 = arith.constant 0 : i32
    %c0_i32_1 = arith.constant 0 : i32
    return %c0_i32, %arg0, %c0_i32_0 : i32, i32, i32
  }
  func.func @transform_1(%arg0: i32) -> (i32, i32) {
    %c0_i32 = arith.constant 0 : i32
    %c0_i32_0 = arith.constant 0 : i32
    return %arg0, %c0_i32 : i32, i32
  }
  func.func @transform_2(%arg0: i32) -> (i32, i32) {
    %c0_i32 = arith.constant 0 : i32
    %c0_i32_0 = arith.constant 0 : i32
    %c0_i32_1 = arith.constant 0 : i32
    return %c0_i32, %c0_i32_0 : i32, i32
  }
  func.func @transform_3(%arg0: i32) -> (i32, i32) {
    %c0_i32 = arith.constant 0 : i32
    %c0_i32_0 = arith.constant 0 : i32
    %c0_i32_1 = arith.constant 0 : i32
    return %c0_i32, %c0_i32_0 : i32, i32
  }
  func.func @transform_4(%arg0: i32) -> (i32, i32) {
    %c0_i32 = arith.constant 0 : i32
    %c0_i32_0 = arith.constant 0 : i32
    %c0_i32_1 = arith.constant 0 : i32
    return %c0_i32, %c0_i32_0 : i32, i32
  }
  func.func @transform_5(%arg0: i32) -> (i32, i32) {
    %c0_i32 = arith.constant 0 : i32
    %c0_i32_0 = arith.constant 0 : i32
    %c0_i32_1 = arith.constant 0 : i32
    return %c0_i32, %c0_i32_0 : i32, i32
  }
  func.func @transform_6(%arg0: i32) -> (i32, i32) {
    %c0_i32 = arith.constant 0 : i32
    %c0_i32_0 = arith.constant 0 : i32
    %c0_i32_1 = arith.constant 0 : i32
    return %c0_i32, %c0_i32_0 : i32, i32
  }
  func.func @transform_7(%arg0: i32) -> (i32, i32) {
    %c0_i32 = arith.constant 0 : i32
    %c0_i32_0 = arith.constant 0 : i32
    %c0_i32_1 = arith.constant 0 : i32
    return %c0_i32, %c0_i32_0 : i32, i32
  }
  func.func @transform_8(%arg0: i32) -> (i32, i32) {
    %c0_i32 = arith.constant 0 : i32
    %c0_i32_0 = arith.constant 0 : i32
    %c0_i32_1 = arith.constant 0 : i32
    return %c0_i32, %c0_i32_0 : i32, i32
  }
  func.func @transform_9(%arg0: i32) -> (i32, i32) {
    %c0_i32 = arith.constant 0 : i32
    %c0_i32_0 = arith.constant 0 : i32
    %c0_i32_1 = arith.constant 0 : i32
    return %c0_i32, %c0_i32_0 : i32, i32
  }
  func.func @transform_10(%arg0: i32) -> (i32, i32) {
    %c0_i32 = arith.constant 0 : i32
    %c0_i32_0 = arith.constant 0 : i32
    %c0_i32_1 = arith.constant 0 : i32
    return %c0_i32, %c0_i32_0 : i32, i32
  }
  func.func @transform_11(%arg0: i32) -> (i32, i32) {
    %c0_i32 = arith.constant 0 : i32
    %c0_i32_0 = arith.constant 0 : i32
    %c0_i32_1 = arith.constant 0 : i32
    return %c0_i32, %c0_i32_0 : i32, i32
  }
  func.func @transform_12(%arg0: i32) -> (i32, i32) {
    %c0_i32 = arith.constant 0 : i32
    %c0_i32_0 = arith.constant 0 : i32
    %c0_i32_1 = arith.constant 0 : i32
    return %c0_i32, %c0_i32_0 : i32, i32
  }
  func.func @transform_13(%arg0: i32) -> (i32, i32) {
    %c0_i32 = arith.constant 0 : i32
    %c0_i32_0 = arith.constant 0 : i32
    %c0_i32_1 = arith.constant 0 : i32
    return %c0_i32, %c0_i32_0 : i32, i32
  }
  func.func @transform_14(%arg0: i32) -> (i32, i32) {
    %c0_i32 = arith.constant 0 : i32
    %c0_i32_0 = arith.constant 0 : i32
    %c0_i32_1 = arith.constant 0 : i32
    return %c0_i32, %c0_i32_0 : i32, i32
  }
  func.func @transform_15(%arg0: i32) -> (i32, i32) {
    %c0_i32 = arith.constant 0 : i32
    %c0_i32_0 = arith.constant 0 : i32
    return %arg0, %c0_i32 : i32, i32
  }
}

</mosaic_0001>

<llo_original>
// kernel: tpu_custom_call.1
$region0: #{tpu_custom_call.1}
  #allocation0 [shape = 'u32[]', space=smem, size = 0x4, offset = 0x4, fixed_abs, tag = 'smem constant byte address 0x4 - core index']
  #allocation1 [shape = 'u32[144,128]{1,0:T(1,128)}', space=vmem, size = 0x12000, scoped, tag = 'internal scratch']
  %s0 = inlined_call_operand.vmem [shape: f32[8,8,32], index: 0, kind: input, shape index: {}]
  %s1 = inlined_call_operand.hbm [shape: f32[8,64], index: 1, kind: input, shape index: {}]
  %s2 = inlined_call_operand.hbm [shape: bf16[32,128], index: 2, kind: input, shape index: {}]
  %s3 = inlined_call_operand.hbm [shape: bf16[32,128], index: 3, kind: input, shape index: {}]
  %s4 = inlined_call_operand.hbm [shape: f32[1,128], index: 4, kind: input, shape index: {}]
  %s5 = inlined_call_operand.hbm [shape: bf16[64,128], index: 5, kind: input, shape index: {}]
  %s6 = inlined_call_operand.hbm [shape: f32[1,128], index: 6, kind: input, shape index: {}]
  %s7 = inlined_call_operand.vmem [shape: bf16[128,32], index: 7, kind: input, shape index: {}]
  %s8 = inlined_call_operand.hbm [shape: f32[1,32], index: 8, kind: input, shape index: {}]
  %s9 = inlined_call_operand.vmem [shape: bf16[64,32], index: 9, kind: input, shape index: {}]
  %s10 = inlined_call_operand.vmem [shape: f32[1,32], index: 10, kind: input, shape index: {}]
  %s11 = inlined_call_operand.hbm [shape: bf16[32,128], index: 11, kind: input, shape index: {}]
  %s12 = inlined_call_operand.vmem [shape: f32[1,128], index: 12, kind: input, shape index: {}]
  %s13 = inlined_call_operand.vmem [shape: bf16[128,128], index: 13, kind: input, shape index: {}]
  %s14 = inlined_call_operand.vmem [shape: f32[1,128], index: 14, kind: input, shape index: {}]
  %s15 = inlined_call_operand.hbm [shape: f32[8,128], index: 15, kind: output, shape index: {}]
  %s16 = sld [smem:[#allocation0]]
  $region102: #{tpu_custom_call.1} parent=0
    _
  %s18 = ssub.s32 1, %s16
  %s19 = scalar_select 0, %s18, %s16
  $region1: #{tpu_custom_call.1} parent=0
    #allocation2 [shape = 'u8[4096]{0}', space=vmem, size = 0x1000, scoped, tag = 'input window, operand 1, single buffered']
    #allocation3 [shape = 's32[1]{0}', space=sflag, size = 0x4, scoped, tag = 'scoped memory for tpu_custom_call.1']
    #allocation4 [shape = 's32[1]{0}', space=sflag, size = 0x4, scoped, tag = 'scoped memory for tpu_custom_call.1']
    #allocation5 [shape = 'u8[8192]{0}', space=vmem, size = 0x2000, scoped, tag = 'input window, operand 2, single buffered']
    #allocation6 [shape = 's32[1]{0}', space=sflag, size = 0x4, scoped, tag = 'scoped memory for tpu_custom_call.1']
    #allocation7 [shape = 'u8[8192]{0}', space=vmem, size = 0x2000, scoped, tag = 'input window, operand 3, single buffered']
    #allocation8 [shape = 'u8[512]{0}', space=vmem, size = 0x400, scoped, tag = 'input window, operand 4, single buffered']
    #allocation9 [shape = 's32[1]{0}', space=sflag, size = 0x4, scoped, tag = 'scoped memory for tpu_custom_call.1']
    #allocation10 [shape = 'u8[16384]{0}', space=vmem, size = 0x4000, scoped, tag = 'input window, operand 5, single buffered']
    #allocation11 [shape = 'u8[512]{0}', space=vmem, size = 0x400, scoped, tag = 'input window, operand 6, single buffered']
    #allocation12 [shape = 's32[1]{0}', space=sflag, size = 0x4, scoped, tag = 'scoped memory for tpu_custom_call.1']
    #allocation13 [shape = 'u8[512]{0}', space=vmem, size = 0x400, scoped, tag = 'input window, operand 8, single buffered']
    #allocation14 [shape = 'u8[8192]{0}', space=vmem, size = 0x2000, scoped, tag = 'input window, operand 11, single buffered']
    #allocation15 [shape = 's32[1]{0}', space=sflag, size = 0x4, scoped, tag = 'scoped memory for tpu_custom_call.1']
    #allocation16 [shape = 'u8[4096]{0}', space=vmem, size = 0x1000, scoped, tag = 'output window, operand 0, single buffered']
    %20 = vsyncpa [#allocation3], 0
    %21 = vsyncpa [#allocation6], 0
    %22 = vsyncpa [#allocation9], 0
    %23 = vsyncpa [#allocation12], 0
    %24 = vsyncpa [#allocation15], 0
    %25 = vsyncpa [#allocation4], 0
    // Predicated region
    $region2: #{tpu_custom_call.1} parent=1 // pred_check
      _
    $region3: #{tpu_custom_call.1} parent=1 // pred_check_branch
      %27 = sbr.rel (0) target = $region5
    $region4: #{tpu_custom_call.1} parent=1 // pred_region
      _
    $region5: #{tpu_custom_call.1} parent=1 // pred_fallthru
      _
    // Predicated region
    $region6: #{tpu_custom_call.1} parent=1 // pred_check
      _
    $region7: #{tpu_custom_call.1} parent=1 // pred_check_branch
      %29 = sbr.rel (0) target = $region9
    $region8: #{tpu_custom_call.1} parent=1 // pred_region
      %s31 = ssub.s32 128, 128
      %32 = vsyncadd [#allocation3], %s31
      %s34 = sshll.u32 [#allocation2], 4
      %s35 = int_to_ptr.vmem [resolvable:$true] %s34
      %37 = dma.hbm_to_vmem [thread:$0]  %s1, 128, %s35, [#allocation3]
    $region9: #{tpu_custom_call.1} parent=1 // pred_fallthru
      _
    // Predicated region
    $region10: #{tpu_custom_call.1} parent=1 // pred_check
      _
    $region11: #{tpu_custom_call.1} parent=1 // pred_check_branch
      %39 = sbr.rel (0) target = $region13
    $region12: #{tpu_custom_call.1} parent=1 // pred_region
      %s41 = ssub.s32 256, 256
      %42 = vsyncadd [#allocation6], %s41
      %s43 = sshll.u32 [#allocation5], 4
      %s44 = int_to_ptr.vmem [resolvable:$true] %s43
      %49 = dma.hbm_to_vmem [thread:$0]  %s2, 256, %s44, [#allocation6], 64, 64, 4
    $region13: #{tpu_custom_call.1} parent=1 // pred_fallthru
      _
    // Predicated region
    $region14: #{tpu_custom_call.1} parent=1 // pred_check
      _
    $region15: #{tpu_custom_call.1} parent=1 // pred_check_branch
      %51 = sbr.rel (0) target = $region17
    $region16: #{tpu_custom_call.1} parent=1 // pred_region
      %s53 = ssub.s32 256, 256
      %54 = vsyncadd [#allocation6], %s53
      %s55 = sshll.u32 [#allocation7], 4
      %s56 = int_to_ptr.vmem [resolvable:$true] %s55
      %61 = dma.hbm_to_vmem [thread:$0]  %s3, 256, %s56, [#allocation6], 64, 64, 4
    $region17: #{tpu_custom_call.1} parent=1 // pred_fallthru
      _
    // Predicated region
    $region18: #{tpu_custom_call.1} parent=1 // pred_check
      _
    $region19: #{tpu_custom_call.1} parent=1 // pred_check_branch
      %63 = sbr.rel (0) target = $region21
    $region20: #{tpu_custom_call.1} parent=1 // pred_region
      %s65 = ssub.s32 16, 16
      %66 = vsyncadd [#allocation9], %s65
      %s68 = sshll.u32 [#allocation8], 4
      %s69 = int_to_ptr.vmem [resolvable:$true] %s68
      %71 = dma.hbm_to_vmem [thread:$0]  %s4, 16, %s69, [#allocation9]
    $region21: #{tpu_custom_call.1} parent=1 // pred_fallthru
      _
    // Predicated region
    $region22: #{tpu_custom_call.1} parent=1 // pred_check
      _
    $region23: #{tpu_custom_call.1} parent=1 // pred_check_branch
      %73 = sbr.rel (0) target = $region25
    $region24: #{tpu_custom_call.1} parent=1 // pred_region
      %s75 = ssub.s32 512, 512
      %76 = vsyncadd [#allocation9], %s75
      %s77 = sshll.u32 [#allocation10], 4
      %s78 = int_to_ptr.vmem [resolvable:$true] %s77
      %83 = dma.hbm_to_vmem [thread:$0]  %s5, 512, %s78, [#allocation9], 64, 64, 4
    $region25: #{tpu_custom_call.1} parent=1 // pred_fallthru
      _
    // Predicated region
    $region26: #{tpu_custom_call.1} parent=1 // pred_check
      _
    $region27: #{tpu_custom_call.1} parent=1 // pred_check_branch
      %85 = sbr.rel (0) target = $region29
    $region28: #{tpu_custom_call.1} parent=1 // pred_region
      %s87 = ssub.s32 16, 16
      %88 = vsyncadd [#allocation12], %s87
      %s90 = sshll.u32 [#allocation11], 4
      %s91 = int_to_ptr.vmem [resolvable:$true] %s90
      %93 = dma.hbm_to_vmem [thread:$0]  %s6, 16, %s91, [#allocation12]
    $region29: #{tpu_custom_call.1} parent=1 // pred_fallthru
      _
    // Predicated region
    $region30: #{tpu_custom_call.1} parent=1 // pred_check
      _
    $region31: #{tpu_custom_call.1} parent=1 // pred_check_branch
      %95 = sbr.rel (0) target = $region33
    $region32: #{tpu_custom_call.1} parent=1 // pred_region
      _
    $region33: #{tpu_custom_call.1} parent=1 // pred_fallthru
      _
    // Predicated region
    $region34: #{tpu_custom_call.1} parent=1 // pred_check
      _
    $region35: #{tpu_custom_call.1} parent=1 // pred_check_branch
      %97 = sbr.rel (0) target = $region37
    $region36: #{tpu_custom_call.1} parent=1 // pred_region
      %s99 = ssub.s32 16, 16
      %100 = vsyncadd [#allocation12], %s99
      %s102 = sshll.u32 [#allocation13], 4
      %s103 = int_to_ptr.vmem [resolvable:$true] %s102
      %105 = dma.hbm_to_vmem [thread:$0]  %s8, 16, %s103, [#allocation12]
    $region37: #{tpu_custom_call.1} parent=1 // pred_fallthru
      _
    // Predicated region
    $region38: #{tpu_custom_call.1} parent=1 // pred_check
      _
    $region39: #{tpu_custom_call.1} parent=1 // pred_check_branch
      %107 = sbr.rel (0) target = $region41
    $region40: #{tpu_custom_call.1} parent=1 // pred_region
      _
    $region41: #{tpu_custom_call.1} parent=1 // pred_fallthru
      _
    // Predicated region
    $region42: #{tpu_custom_call.1} parent=1 // pred_check
      _
    $region43: #{tpu_custom_call.1} parent=1 // pred_check_branch
      %109 = sbr.rel (0) target = $region45
    $region44: #{tpu_custom_call.1} parent=1 // pred_region
      _
    $region45: #{tpu_custom_call.1} parent=1 // pred_fallthru
      _
    // Predicated region
    $region46: #{tpu_custom_call.1} parent=1 // pred_check
      _
    $region47: #{tpu_custom_call.1} parent=1 // pred_check_branch
      %111 = sbr.rel (0) target = $region49
    $region48: #{tpu_custom_call.1} parent=1 // pred_region
      %s113 = ssub.s32 256, 256
      %114 = vsyncadd [#allocation15], %s113
      %s115 = sshll.u32 [#allocation14], 4
      %s116 = int_to_ptr.vmem [resolvable:$true] %s115
      %121 = dma.hbm_to_vmem [thread:$0]  %s11, 256, %s116, [#allocation15], 64, 64, 4
    $region49: #{tpu_custom_call.1} parent=1 // pred_fallthru
      _
    // Predicated region
    $region50: #{tpu_custom_call.1} parent=1 // pred_check
      _
    $region51: #{tpu_custom_call.1} parent=1 // pred_check_branch
      %123 = sbr.rel (0) target = $region53
    $region52: #{tpu_custom_call.1} parent=1 // pred_region
      _
    $region53: #{tpu_custom_call.1} parent=1 // pred_fallthru
      _
    // Predicated region
    $region54: #{tpu_custom_call.1} parent=1 // pred_check
      _
    $region55: #{tpu_custom_call.1} parent=1 // pred_check_branch
      %125 = sbr.rel (0) target = $region57
    $region56: #{tpu_custom_call.1} parent=1 // pred_region
      _
    $region57: #{tpu_custom_call.1} parent=1 // pred_fallthru
      _
    // Predicated region
    $region58: #{tpu_custom_call.1} parent=1 // pred_check
      _
    $region59: #{tpu_custom_call.1} parent=1 // pred_check_branch
      %127 = sbr.rel (0) target = $region61
    $region60: #{tpu_custom_call.1} parent=1 // pred_region
      _
    $region61: #{tpu_custom_call.1} parent=1 // pred_fallthru
      _
    // Predicated region
    $region62: #{tpu_custom_call.1} parent=1 // pred_check
      _
    $region63: #{tpu_custom_call.1} parent=1 // pred_check_branch
      %129 = sbr.rel (0) target = $region65
    $region64: #{tpu_custom_call.1} parent=1 // pred_region
      %130 = dma.done [#allocation3], 128
    $region65: #{tpu_custom_call.1} parent=1 // pred_fallthru
      _
    // Predicated region
    $region66: #{tpu_custom_call.1} parent=1 // pred_check
      _
    $region67: #{tpu_custom_call.1} parent=1 // pred_check_branch
      %132 = sbr.rel (0) target = $region69
    $region68: #{tpu_custom_call.1} parent=1 // pred_region
      %133 = dma.done [#allocation6], 256
    $region69: #{tpu_custom_call.1} parent=1 // pred_fallthru
      _
    // Predicated region
    $region70: #{tpu_custom_call.1} parent=1 // pred_check
      _
    $region71: #{tpu_custom_call.1} parent=1 // pred_check_branch
      %135 = sbr.rel (0) target = $region73
    $region72: #{tpu_custom_call.1} parent=1 // pred_region
      %136 = dma.done [#allocation6], 256
    $region73: #{tpu_custom_call.1} parent=1 // pred_fallthru
      _
    // Predicated region
    $region74: #{tpu_custom_call.1} parent=1 // pred_check
      _
    $region75: #{tpu_custom_call.1} parent=1 // pred_check_branch
      %138 = sbr.rel (0) target = $region77
    $region76: #{tpu_custom_call.1} parent=1 // pred_region
      %139 = dma.done [#allocation9], 16
    $region77: #{tpu_custom_call.1} parent=1 // pred_fallthru
      _
    // Predicated region
    $region78: #{tpu_custom_call.1} parent=1 // pred_check
      _
    $region79: #{tpu_custom_call.1} parent=1 // pred_check_branch
      %141 = sbr.rel (0) target = $region81
    $region80: #{tpu_custom_call.1} parent=1 // pred_region
      %142 = dma.done [#allocation9], 512
    $region81: #{tpu_custom_call.1} parent=1 // pred_fallthru
      _
    // Predicated region
    $region82: #{tpu_custom_call.1} parent=1 // pred_check
      _
    $region83: #{tpu_custom_call.1} parent=1 // pred_check_branch
      %144 = sbr.rel (0) target = $region85
    $region84: #{tpu_custom_call.1} parent=1 // pred_region
      %145 = dma.done [#allocation12], 16
    $region85: #{tpu_custom_call.1} parent=1 // pred_fallthru
      _
    // Predicated region
    $region86: #{tpu_custom_call.1} parent=1 // pred_check
      _
    $region87: #{tpu_custom_call.1} parent=1 // pred_check_branch
      %147 = sbr.rel (0) target = $region89
    $region88: #{tpu_custom_call.1} parent=1 // pred_region
      %148 = dma.done [#allocation12], 16
    $region89: #{tpu_custom_call.1} parent=1 // pred_fallthru
      _
    // Predicated region
    $region90: #{tpu_custom_call.1} parent=1 // pred_check
      _
    $region91: #{tpu_custom_call.1} parent=1 // pred_check_branch
      %150 = sbr.rel (0) target = $region93
    $region92: #{tpu_custom_call.1} parent=1 // pred_region
      %151 = dma.done [#allocation15], 256
    $region93: #{tpu_custom_call.1} parent=1 // pred_fallthru
      _
    %v153 = vld [vmem:[%s0] sm:$0xff]
    %v154 = vld [vmem:[%s0 + $0x8] sm:$0xff]
    %v155 = vld [vmem:[%s0 + $0x10] sm:$0xff]
    %v156 = vld [vmem:[%s0 + $0x18] sm:$0xff]
    %v157 = vld [vmem:[%s0 + $0x20] sm:$0xff]
    %v158 = vld [vmem:[%s0 + $0x28] sm:$0xff]
    %v159 = vld [vmem:[%s0 + $0x30] sm:$0xff]
    %v160 = vld [vmem:[%s0 + $0x38] sm:$0xff]
    %v161 = vtanh.pop %v153
    %v162 = vtanh.pop %v154
    %v163 = vtanh.pop %v155
    %v164 = vtanh.pop %v156
    %v165 = vtanh.pop %v157
    %v166 = vtanh.pop %v158
    %v167 = vtanh.pop %v159
    %v168 = vtanh.pop %v160
    %v169 = vpack.c.bf16 %v162, %v161
    %v170 = vpack.c.bf16 %v164, %v163
    %v171 = vpack.c.bf16 %v166, %v165
    %v172 = vpack.c.bf16 %v168, %v167
    %v173 = vld [vmem:[#allocation5] sm:$0xf]
    %v174 = vld [vmem:[#allocation5 + $0x4] sm:$0xf]
    %v175 = vld [vmem:[#allocation5 + $0x8] sm:$0xf]
    %v176 = vld [vmem:[#allocation5 + $0xc] sm:$0xf]
    %v181 = vunpack.c.l.b16 %v173
    %v182 = vunpack.c.l.b16 %v174
    %v183 = vunpack.c.l.b16 %v175
    %v184 = vunpack.c.l.b16 %v176
    %v185 = vpack.c.b16 %v182, %v181
    %v186 = vpack.c.b16 %v184, %v183
    %vm189 = vcmask 261120
    %v191 = vsel %vm189, %v169, 0
    %v194 = vsel %vm189, %v170, 0
    %v197 = vsel %vm189, %v171, 0
    %v200 = vsel %vm189, %v172, 0
    %202 = vmatprep.subr.bf16.mxu0 0
    %203 = vmatpush1.bf16.msra.mxu0 0
    %204 = vmatprep.subr.bf16.mxu0 0
    %205 = vmatpush1.bf16.msra.mxu0 0
    %206 = vmatprep.subr.bf16.mxu0 0
    %207 = vmatpush1.bf16.msra.mxu0 0
    %208 = vmatprep.subr.bf16.mxu0 0
    %209 = vmatpush1.bf16.msra.mxu0 0
    %210 = vmatprep.subr.bf16.mxu0 0
    %211 = vmatpush1.bf16.msra.mxu0 0
    %212 = vmatprep.subr.bf16.mxu0 0
    %213 = vmatpush1.bf16.msra.mxu0 0
    %214 = vmatprep.subr.bf16.mxu0 0
    %215 = vmatpush1.bf16.msra.mxu0 %v186
    %216 = vmatprep.subr.bf16.mxu0 0
    %217 = vmatpush1.bf16.msra.mxu0 %v185
    %218 = vmatprep.subr.bf16.mxu0 0
    %219 = vmatpush2.bf16.msra.mxu0 0
    %220 = vmatprep.subr.bf16.mxu0 0
    %221 = vmatpush2.bf16.msra.mxu0 0
    %222 = vmatprep.subr.bf16.mxu0 0
    %223 = vmatpush2.bf16.msra.mxu0 0
    %224 = vmatprep.subr.bf16.mxu0 0
    %225 = vmatpush2.bf16.msra.mxu0 0
    %226 = vmatprep.subr.bf16.mxu0 0
    %227 = vmatpush2.bf16.msra.mxu0 0
    %228 = vmatprep.subr.bf16.mxu0 0
    %229 = vmatpush2.bf16.msra.mxu0 0
    %230 = vmatprep.subr.bf16.mxu0 0
    %231 = vmatpush2.bf16.msra.mxu0 0
    %232 = vmatprep.subr.bf16.mxu0 0
    %233 = vmatpush2.bf16.msra.mxu0 0
    %234 = vmatprep.mubr.bf16.mxu0 0
    %235 = vmatmul.mubr.bf16.gmra.mxu0 %v191
    %v236 = vpop.f32.mrf.mxu0
    %v237 = vadd.f32 0.0, %v236
    %v238 = vpop.f32.mrf.mxu0
    %v239 = vpop.f32.mrf.mxu0
    %v240 = vadd.f32 0.0, %v239
    %v241 = vpop.f32.mrf.mxu0
    %242 = vmatprep.mubr.bf16.mxu0 0
    %243 = vmatmul.mubr.bf16.gmra.mxu0 %v194
    %v244 = vpop.f32.mrf.mxu0
    %v245 = vadd.f32 0.0, %v244
    %v246 = vpop.f32.mrf.mxu0
    %v247 = vpop.f32.mrf.mxu0
    %v248 = vadd.f32 0.0, %v247
    %v249 = vpop.f32.mrf.mxu0
    %250 = vmatprep.mubr.bf16.mxu0 0
    %251 = vmatmul.mubr.bf16.gmra.mxu0 %v197
    %v252 = vpop.f32.mrf.mxu0
    %v253 = vadd.f32 0.0, %v252
    %v254 = vpop.f32.mrf.mxu0
    %v255 = vpop.f32.mrf.mxu0
    %v256 = vadd.f32 0.0, %v255
    %v257 = vpop.f32.mrf.mxu0
    %258 = vmatprep.mubr.bf16.mxu0 0
    %259 = vmatmul.mubr.bf16.gmra.mxu0 %v200
    %v260 = vpop.f32.mrf.mxu0
    %v261 = vadd.f32 0.0, %v260
    %v262 = vpop.f32.mrf.mxu0
    %v263 = vpop.f32.mrf.mxu0
    %v264 = vadd.f32 0.0, %v263
    %v265 = vpop.f32.mrf.mxu0
    %266 = vdwg.mxu0
    %v267 = vpack.c.bf16 %v240, %v237
    %v268 = vpack.c.bf16 %v248, %v245
    %v269 = vpack.c.bf16 %v256, %v253
    %v270 = vpack.c.bf16 %v264, %v261
    %v271 = vld [vmem:[#allocation7] sm:$0xf]
    %v272 = vld [vmem:[#allocation7 + $0x4] sm:$0xf]
    %v273 = vld [vmem:[#allocation7 + $0x8] sm:$0xf]
    %v274 = vld [vmem:[#allocation7 + $0xc] sm:$0xf]
    %v275 = vld [vmem:[#allocation10] sm:$0xf]
    %v276 = vld [vmem:[#allocation10 + $0x4] sm:$0xf]
    %v277 = vld [vmem:[#allocation10 + $0x8] sm:$0xf]
    %v278 = vld [vmem:[#allocation10 + $0xc] sm:$0xf]
    %v279 = vld [vmem:[#allocation10 + $0x10] sm:$0xf]
    %v280 = vld [vmem:[#allocation10 + $0x14] sm:$0xf]
    %v281 = vld [vmem:[#allocation10 + $0x18] sm:$0xf]
    %v282 = vld [vmem:[#allocation10 + $0x1c] sm:$0xf]
    %v283 = vld [vmem:[#allocation8] sm:$0x1]
    %v285 = vlaneseq
    %v286 = vshrl.u32 %v285, 7
    %v287 = vsub.s32 0, %v286
    %v288 = vrot.slane %v283, %v287
    %v290 = vld [vmem:[#allocation11] sm:$0x1]
    %v292 = vlaneseq
    %v293 = vshrl.u32 %v292, 7
    %v294 = vsub.s32 0, %v293
    %v295 = vrot.slane %v290, %v294
    %v297 = vlaneseq
    %v298 = vand.u32 %v297, 127
    %vm299 = vcmp.ge.s32.totalorder %v298, 64
    %vm300 = vcmp.lt.s32.totalorder %v298, 96
    %vm301 = vmand %vm299, %vm300
    %v302 = vunpack.c.l.bf16 %v267
    %v303 = vadd.f32 %v302, %v288
    %v308 = vunpack.c.l.b16 %v271
    %v309 = vunpack.c.l.b16 %v272
    %v310 = vunpack.c.l.b16 %v273
    %v311 = vunpack.c.l.b16 %v274
    %v312 = vpack.c.b16 %v309, %v308
    %v313 = vpack.c.b16 %v311, %v310
    %v317 = vsel %vm189, 0, 0
    %319 = vmatprep.subr.bf16.mxu0 0
    %320 = vmatpush1.bf16.msra.mxu0 0
    %321 = vmatprep.subr.bf16.mxu0 0
    %322 = vmatpush1.bf16.msra.mxu0 0
    %323 = vmatprep.subr.bf16.mxu0 0
    %324 = vmatpush1.bf16.msra.mxu0 0
    %325 = vmatprep.subr.bf16.mxu0 0
    %326 = vmatpush1.bf16.msra.mxu0 0
    %327 = vmatprep.subr.bf16.mxu0 0
    %328 = vmatpush1.bf16.msra.mxu0 0
    %329 = vmatprep.subr.bf16.mxu0 0
    %330 = vmatpush1.bf16.msra.mxu0 0
    %331 = vmatprep.subr.bf16.mxu0 0
    %332 = vmatpush1.bf16.msra.mxu0 %v313
    %333 = vmatprep.subr.bf16.mxu0 0
    %334 = vmatpush1.bf16.msra.mxu0 %v312
    %335 = vmatprep.subr.bf16.mxu0 0
    %336 = vmatpush2.bf16.msra.mxu0 0
    %337 = vmatprep.subr.bf16.mxu0 0
    %338 = vmatpush2.bf16.msra.mxu0 0
    %339 = vmatprep.subr.bf16.mxu0 0
    %340 = vmatpush2.bf16.msra.mxu0 0
    %341 = vmatprep.subr.bf16.mxu0 0
    %342 = vmatpush2.bf16.msra.mxu0 0
    %343 = vmatprep.subr.bf16.mxu0 0
    %344 = vmatpush2.bf16.msra.mxu0 0
    %345 = vmatprep.subr.bf16.mxu0 0
    %346 = vmatpush2.bf16.msra.mxu0 0
    %347 = vmatprep.subr.bf16.mxu0 0
    %348 = vmatpush2.bf16.msra.mxu0 0
    %349 = vmatprep.subr.bf16.mxu0 0
    %350 = vmatpush2.bf16.msra.mxu0 0
    %351 = vmatprep.mubr.bf16.mxu0 0
    %352 = vmatmul.mubr.bf16.gmra.mxu0 %v317
    %v353 = vpop.f32.mrf.mxu0
    %v354 = vadd.f32 0.0, %v353
    %v355 = vpop.f32.mrf.mxu0
    %v356 = vpop.f32.mrf.mxu0
    %v357 = vpop.f32.mrf.mxu0
    %358 = vdwg.mxu0
    %v359 = vadd.f32 %v303, %v354
    %v360 = vtanh.pop %v359
    %v361 = vxor.u32 %v359, 2147483648
    %v362 = vmul.f32 %v361, 1.442695
    %v363 = vpow.pop %v362
    %v364 = vadd.f32 %v363, 1.0
    %v365 = vrcp.pop %v364
    %v366 = vmul.f32 1.0, %v365
    %v367 = vsel %vm301, %v360, %v366
    %v368 = vmul.f32 %v367, 0.0
    %370 = vrot.lane.b32.xlu0 %v367, 64
    %v371 = vpop.permute.xlu0 %370
    %v373 = vmul.f32 %v367, %v371
    %375 = vrot.lane.b32.xlu0 %v373, 32
    %v376 = vpop.permute.xlu0 %375
    %v378 = vadd.f32 %v368, %v376
    %v379 = vtanh.pop %v378
    %381 = vrot.lane.b32.xlu0 %v379, 64
    %v382 = vpop.permute.xlu0 %381
    %v384 = vmul.f32 %v367, %v382
    %386 = vrot.lane.b32.xlu0 %v384, 32
    %v387 = vpop.permute.xlu0 %386
    %v389 = vsel %vm189, %v387, 0.0
    %v390 = vpack.c.bf16 %v389, %v389
    %v399 = vunpack.c.l.b16 %v275
    %v400 = vunpack.c.l.b16 %v276
    %v401 = vunpack.c.l.b16 %v277
    %v402 = vunpack.c.l.b16 %v278
    %v403 = vunpack.c.l.b16 %v279
    %v404 = vunpack.c.l.b16 %v280
    %v405 = vunpack.c.l.b16 %v281
    %v406 = vunpack.c.l.b16 %v282
    %v407 = vpack.c.b16 %v400, %v399
    %v408 = vpack.c.b16 %v402, %v401
    %v409 = vpack.c.b16 %v404, %v403
    %v410 = vpack.c.b16 %v406, %v405
    %vm415 = vcmask 523264
    %v417 = vsel %vm415, %v390, 0
    %419 = vmatprep.subr.bf16.mxu0 0
    %420 = vmatpush1.bf16.msra.mxu0 0
    %421 = vmatprep.subr.bf16.mxu0 0
    %422 = vmatpush1.bf16.msra.mxu0 0
    %423 = vmatprep.subr.bf16.mxu0 0
    %424 = vmatpush1.bf16.msra.mxu0 0
    %425 = vmatprep.subr.bf16.mxu0 0
    %426 = vmatpush1.bf16.msra.mxu0 0
    %427 = vmatprep.subr.bf16.mxu0 0
    %428 = vmatpush1.bf16.msra.mxu0 %v410
    %429 = vmatprep.subr.bf16.mxu0 0
    %430 = vmatpush1.bf16.msra.mxu0 %v409
    %431 = vmatprep.subr.bf16.mxu0 0
    %432 = vmatpush1.bf16.msra.mxu0 %v408
    %433 = vmatprep.subr.bf16.mxu0 0
    %434 = vmatpush1.bf16.msra.mxu0 %v407
    %435 = vmatprep.subr.bf16.mxu0 0
    %436 = vmatpush2.bf16.msra.mxu0 0
    %437 = vmatprep.subr.bf16.mxu0 0
    %438 = vmatpush2.bf16.msra.mxu0 0
    %439 = vmatprep.subr.bf16.mxu0 0
    %440 = vmatpush2.bf16.msra.mxu0 0
    %441 = vmatprep.subr.bf16.mxu0 0
    %442 = vmatpush2.bf16.msra.mxu0 0
    %443 = vmatprep.subr.bf16.mxu0 0
    %444 = vmatpush2.bf16.msra.mxu0 0
    %445 = vmatprep.subr.bf16.mxu0 0
    %446 = vmatpush2.bf16.msra.mxu0 0
    %447 = vmatprep.subr.bf16.mxu0 0
    %448 = vmatpush2.bf16.msra.mxu0 0
    %449 = vmatprep.subr.bf16.mxu0 0
    %450 = vmatpush2.bf16.msra.mxu0 0
    %451 = vmatprep.mubr.bf16.mxu0 0
    %452 = vmatmul.mubr.bf16.gmra.mxu0 %v417
    %v453 = vpop.f32.mrf.mxu0
    %v454 = vadd.f32 %v295, %v453
    %v455 = vpop.f32.mrf.mxu0
    %v456 = vpop.f32.mrf.mxu0
    %v457 = vpop.f32.mrf.mxu0
    %458 = vdwg.mxu0
    %v459 = vtanh.pop %v454
    %v460 = vxor.u32 %v454, 2147483648
    %v461 = vmul.f32 %v460, 1.442695
    %v462 = vpow.pop %v461
    %v463 = vadd.f32 %v462, 1.0
    %v464 = vrcp.pop %v463
    %v465 = vmul.f32 1.0, %v464
    %v466 = vsel %vm301, %v459, %v465
    %v467 = vmul.f32 %v466, 0.0
    %469 = vrot.lane.b32.xlu0 %v466, 64
    %v470 = vpop.permute.xlu0 %469
    %v472 = vmul.f32 %v466, %v470
    %474 = vrot.lane.b32.xlu0 %v472, 32
    %v475 = vpop.permute.xlu0 %474
    %v477 = vadd.f32 %v467, %v475
    %v478 = vtanh.pop %v477
    %480 = vrot.lane.b32.xlu0 %v478, 64
    %v481 = vpop.permute.xlu0 %480
    %v483 = vmul.f32 %v466, %v481
    %v485 = vrot.slane %v267, 4
    %v487 = vunpack.c.l.bf16 %v485
    %v488 = vadd.f32 %v487, %v288
    %v489 = vpack.c.bf16 %v384, %v384
    %491 = vrot.lane.b32.xlu0 %v489, 32
    %v492 = vpop.permute.xlu0 %491
    %v494 = vsel %vm189, %v492, 0
    %496 = vmatprep.subr.bf16.mxu0 0
    %497 = vmatpush1.bf16.msra.mxu0 0
    %498 = vmatprep.subr.bf16.mxu0 0
    %499 = vmatpush1.bf16.msra.mxu0 0
    %500 = vmatprep.subr.bf16.mxu0 0
    %501 = vmatpush1.bf16.msra.mxu0 0
    %502 = vmatprep.subr.bf16.mxu0 0
    %503 = vmatpush1.bf16.msra.mxu0 0
    %504 = vmatprep.subr.bf16.mxu0 0
    %505 = vmatpush1.bf16.msra.mxu0 0
    %506 = vmatprep.subr.bf16.mxu0 0
    %507 = vmatpush1.bf16.msra.mxu0 0
    %508 = vmatprep.subr.bf16.mxu0 0
    %509 = vmatpush1.bf16.msra.mxu0 %v313
    %510 = vmatprep.subr.bf16.mxu0 0
    %511 = vmatpush1.bf16.msra.mxu0 %v312
    %512 = vmatprep.subr.bf16.mxu0 0
    %513 = vmatpush2.bf16.msra.mxu0 0
    %514 = vmatprep.subr.bf16.mxu0 0
    %515 = vmatpush2.bf16.msra.mxu0 0
    %516 = vmatprep.subr.bf16.mxu0 0
    %517 = vmatpush2.bf16.msra.mxu0 0
    %518 = vmatprep.subr.bf16.mxu0 0
    %519 = vmatpush2.bf16.msra.mxu0 0
    %520 = vmatprep.subr.bf16.mxu0 0
    %521 = vmatpush2.bf16.msra.mxu0 0
    %522 = vmatprep.subr.bf16.mxu0 0
    %523 = vmatpush2.bf16.msra.mxu0 0
    %524 = vmatprep.subr.bf16.mxu0 0
    %525 = vmatpush2.bf16.msra.mxu0 0
    %526 = vmatprep.subr.bf16.mxu0 0
    %527 = vmatpush2.bf16.msra.mxu0 0
    %528 = vmatprep.mubr.bf16.mxu0 0
    %529 = vmatmul.mubr.bf16.gmra.mxu0 %v494
    %v530 = vpop.f32.mrf.mxu0
    %v531 = vadd.f32 0.0, %v530
    %v532 = vpop.f32.mrf.mxu0
    %v533 = vpop.f32.mrf.mxu0
    %v534 = vpop.f32.mrf.mxu0
    %535 = vdwg.mxu0
    %v536 = vadd.f32 %v488, %v531
    %v537 = vtanh.pop %v536
    %v538 = vxor.u32 %v536, 2147483648
    %v539 = vmul.f32 %v538, 1.442695
    %v540 = vpow.pop %v539
    %v541 = vadd.f32 %v540, 1.0
    %v542 = vrcp.pop %v541
    %v543 = vmul.f32 1.0, %v542
    %v544 = vsel %vm301, %v537, %v543
    %v545 = vmul.f32 %v544, %v378
    %547 = vrot.lane.b32.xlu0 %v544, 64
    %v548 = vpop.permute.xlu0 %547
    %v550 = vmul.f32 %v544, %v548
    %552 = vrot.lane.b32.xlu0 %v550, 32
    %v553 = vpop.permute.xlu0 %552
    %v555 = vadd.f32 %v545, %v553
    %v556 = vtanh.pop %v555
    %558 = vrot.lane.b32.xlu0 %v556, 64
    %v559 = vpop.permute.xlu0 %558
    %v561 = vmul.f32 %v544, %v559
    %563 = vrot.lane.b32.xlu0 %v561, 32
    %v564 = vpop.permute.xlu0 %563
    %567 = vrot.lane.b32.xlu0 %v483, 64
    %v568 = vpop.permute.xlu0 %567
    %v570 = vsel %vm189, %v564, %v568
    %v571 = vpack.c.bf16 %v570, %v570
    %v573 = vsel %vm415, %v571, 0
    %575 = vmatprep.subr.bf16.mxu0 0
    %576 = vmatpush1.bf16.msra.mxu0 0
    %577 = vmatprep.subr.bf16.mxu0 0
    %578 = vmatpush1.bf16.msra.mxu0 0
    %579 = vmatprep.subr.bf16.mxu0 0
    %580 = vmatpush1.bf16.msra.mxu0 0
    %581 = vmatprep.subr.bf16.mxu0 0
    %582 = vmatpush1.bf16.msra.mxu0 0
    %583 = vmatprep.subr.bf16.mxu0 0
    %584 = vmatpush1.bf16.msra.mxu0 %v410
    %585 = vmatprep.subr.bf16.mxu0 0
    %586 = vmatpush1.bf16.msra.mxu0 %v409
    %587 = vmatprep.subr.bf16.mxu0 0
    %588 = vmatpush1.bf16.msra.mxu0 %v408
    %589 = vmatprep.subr.bf16.mxu0 0
    %590 = vmatpush1.bf16.msra.mxu0 %v407
    %591 = vmatprep.subr.bf16.mxu0 0
    %592 = vmatpush2.bf16.msra.mxu0 0
    %593 = vmatprep.subr.bf16.mxu0 0
    %594 = vmatpush2.bf16.msra.mxu0 0
    %595 = vmatprep.subr.bf16.mxu0 0
    %596 = vmatpush2.bf16.msra.mxu0 0
    %597 = vmatprep.subr.bf16.mxu0 0
    %598 = vmatpush2.bf16.msra.mxu0 0
    %599 = vmatprep.subr.bf16.mxu0 0
    %600 = vmatpush2.bf16.msra.mxu0 0
    %601 = vmatprep.subr.bf16.mxu0 0
    %602 = vmatpush2.bf16.msra.mxu0 0
    %603 = vmatprep.subr.bf16.mxu0 0
    %604 = vmatpush2.bf16.msra.mxu0 0
    %605 = vmatprep.subr.bf16.mxu0 0
    %606 = vmatpush2.bf16.msra.mxu0 0
    %607 = vmatprep.mubr.bf16.mxu0 0
    %608 = vmatmul.mubr.bf16.gmra.mxu0 %v573
    %v609 = vpop.f32.mrf.mxu0
    %v610 = vadd.f32 %v295, %v609
    %v611 = vpop.f32.mrf.mxu0
    %v612 = vpop.f32.mrf.mxu0
    %v613 = vpop.f32.mrf.mxu0
    %614 = vdwg.mxu0
    %v615 = vtanh.pop %v610
    %v616 = vxor.u32 %v610, 2147483648
    %v617 = vmul.f32 %v616, 1.442695
    %v618 = vpow.pop %v617
    %v619 = vadd.f32 %v618, 1.0
    %v620 = vrcp.pop %v619
    %v621 = vmul.f32 1.0, %v620
    %v622 = vsel %vm301, %v615, %v621
    %v623 = vmul.f32 %v622, %v477
    %625 = vrot.lane.b32.xlu0 %v622, 64
    %v626 = vpop.permute.xlu0 %625
    %v628 = vmul.f32 %v622, %v626
    %630 = vrot.lane.b32.xlu0 %v628, 32
    %v631 = vpop.permute.xlu0 %630
    %v633 = vadd.f32 %v623, %v631
    %v634 = vtanh.pop %v633
    %636 = vrot.lane.b32.xlu0 %v634, 64
    %v637 = vpop.permute.xlu0 %636
    %v639 = vmul.f32 %v622, %v637
    %v640 = vunpack.c.l.bf16 %v268
    %v641 = vadd.f32 %v640, %v288
    %v642 = vpack.c.bf16 %v561, %v561
    %644 = vrot.lane.b32.xlu0 %v642, 32
    %v645 = vpop.permute.xlu0 %644
    %v647 = vsel %vm189, %v645, 0
    %649 = vmatprep.subr.bf16.mxu0 0
    %650 = vmatpush1.bf16.msra.mxu0 0
    %651 = vmatprep.subr.bf16.mxu0 0
    %652 = vmatpush1.bf16.msra.mxu0 0
    %653 = vmatprep.subr.bf16.mxu0 0
    %654 = vmatpush1.bf16.msra.mxu0 0
    %655 = vmatprep.subr.bf16.mxu0 0
    %656 = vmatpush1.bf16.msra.mxu0 0
    %657 = vmatprep.subr.bf16.mxu0 0
    %658 = vmatpush1.bf16.msra.mxu0 0
    %659 = vmatprep.subr.bf16.mxu0 0
    %660 = vmatpush1.bf16.msra.mxu0 0
    %661 = vmatprep.subr.bf16.mxu0 0
    %662 = vmatpush1.bf16.msra.mxu0 %v313
    %663 = vmatprep.subr.bf16.mxu0 0
    %664 = vmatpush1.bf16.msra.mxu0 %v312
    %665 = vmatprep.subr.bf16.mxu0 0
    %666 = vmatpush2.bf16.msra.mxu0 0
    %667 = vmatprep.subr.bf16.mxu0 0
    %668 = vmatpush2.bf16.msra.mxu0 0
    %669 = vmatprep.subr.bf16.mxu0 0
    %670 = vmatpush2.bf16.msra.mxu0 0
    %671 = vmatprep.subr.bf16.mxu0 0
    %672 = vmatpush2.bf16.msra.mxu0 0
    %673 = vmatprep.subr.bf16.mxu0 0
    %674 = vmatpush2.bf16.msra.mxu0 0
    %675 = vmatprep.subr.bf16.mxu0 0
    %676 = vmatpush2.bf16.msra.mxu0 0
    %677 = vmatprep.subr.bf16.mxu0 0
    %678 = vmatpush2.bf16.msra.mxu0 0
    %679 = vmatprep.subr.bf16.mxu0 0
    %680 = vmatpush2.bf16.msra.mxu0 0
    %681 = vmatprep.mubr.bf16.mxu0 0
    %682 = vmatmul.mubr.bf16.gmra.mxu0 %v647
    %v683 = vpop.f32.mrf.mxu0
    %v684 = vadd.f32 0.0, %v683
    %v685 = vpop.f32.mrf.mxu0
    %v686 = vpop.f32.mrf.mxu0
    %v687 = vpop.f32.mrf.mxu0
    %688 = vdwg.mxu0
    %v689 = vadd.f32 %v641, %v684
    %v690 = vtanh.pop %v689
    %v691 = vxor.u32 %v689, 2147483648
    %v692 = vmul.f32 %v691, 1.442695
    %v693 = vpow.pop %v692
    %v694 = vadd.f32 %v693, 1.0
    %v695 = vrcp.pop %v694
    %v696 = vmul.f32 1.0, %v695
    %v697 = vsel %vm301, %v690, %v696
    %v698 = vmul.f32 %v697, %v555
    %700 = vrot.lane.b32.xlu0 %v697, 64
    %v701 = vpop.permute.xlu0 %700
    %v703 = vmul.f32 %v697, %v701
    %705 = vrot.lane.b32.xlu0 %v703, 32
    %v706 = vpop.permute.xlu0 %705
    %v708 = vadd.f32 %v698, %v706
    %v709 = vtanh.pop %v708
    %711 = vrot.lane.b32.xlu0 %v709, 64
    %v712 = vpop.permute.xlu0 %711
    %v714 = vmul.f32 %v697, %v712
    %716 = vrot.lane.b32.xlu0 %v714, 32
    %v717 = vpop.permute.xlu0 %716
    %720 = vrot.lane.b32.xlu0 %v639, 64
    %v721 = vpop.permute.xlu0 %720
    %v723 = vsel %vm189, %v717, %v721
    %v724 = vpack.c.bf16 %v723, %v723
    %v726 = vsel %vm415, %v724, 0
    %728 = vmatprep.subr.bf16.mxu0 0
    %729 = vmatpush1.bf16.msra.mxu0 0
    %730 = vmatprep.subr.bf16.mxu0 0
    %731 = vmatpush1.bf16.msra.mxu0 0
    %732 = vmatprep.subr.bf16.mxu0 0
    %733 = vmatpush1.bf16.msra.mxu0 0
    %734 = vmatprep.subr.bf16.mxu0 0
    %735 = vmatpush1.bf16.msra.mxu0 0
    %736 = vmatprep.subr.bf16.mxu0 0
    %737 = vmatpush1.bf16.msra.mxu0 %v410
    %738 = vmatprep.subr.bf16.mxu0 0
    %739 = vmatpush1.bf16.msra.mxu0 %v409
    %740 = vmatprep.subr.bf16.mxu0 0
    %741 = vmatpush1.bf16.msra.mxu0 %v408
    %742 = vmatprep.subr.bf16.mxu0 0
    %743 = vmatpush1.bf16.msra.mxu0 %v407
    %744 = vmatprep.subr.bf16.mxu0 0
    %745 = vmatpush2.bf16.msra.mxu0 0
    %746 = vmatprep.subr.bf16.mxu0 0
    %747 = vmatpush2.bf16.msra.mxu0 0
    %748 = vmatprep.subr.bf16.mxu0 0
    %749 = vmatpush2.bf16.msra.mxu0 0
    %750 = vmatprep.subr.bf16.mxu0 0
    %751 = vmatpush2.bf16.msra.mxu0 0
    %752 = vmatprep.subr.bf16.mxu0 0
    %753 = vmatpush2.bf16.msra.mxu0 0
    %754 = vmatprep.subr.bf16.mxu0 0
    %755 = vmatpush2.bf16.msra.mxu0 0
    %756 = vmatprep.subr.bf16.mxu0 0
    %757 = vmatpush2.bf16.msra.mxu0 0
    %758 = vmatprep.subr.bf16.mxu0 0
    %759 = vmatpush2.bf16.msra.mxu0 0
    %760 = vmatprep.mubr.bf16.mxu0 0
    %761 = vmatmul.mubr.bf16.gmra.mxu0 %v726
    %v762 = vpop.f32.mrf.mxu0
    %v763 = vadd.f32 %v295, %v762
    %v764 = vpop.f32.mrf.mxu0
    %v765 = vpop.f32.mrf.mxu0
    %v766 = vpop.f32.mrf.mxu0
    %767 = vdwg.mxu0
    %v768 = vtanh.pop %v763
    %v769 = vxor.u32 %v763, 2147483648
    %v770 = vmul.f32 %v769, 1.442695
    %v771 = vpow.pop %v770
    %v772 = vadd.f32 %v771, 1.0
    %v773 = vrcp.pop %v772
    %v774 = vmul.f32 1.0, %v773
    %v775 = vsel %vm301, %v768, %v774
    %v776 = vmul.f32 %v775, %v633
    %778 = vrot.lane.b32.xlu0 %v775, 64
    %v779 = vpop.permute.xlu0 %778
    %v781 = vmul.f32 %v775, %v779
    %783 = vrot.lane.b32.xlu0 %v781, 32
    %v784 = vpop.permute.xlu0 %783
    %v786 = vadd.f32 %v776, %v784
    %v787 = vtanh.pop %v786
    %789 = vrot.lane.b32.xlu0 %v787, 64
    %v790 = vpop.permute.xlu0 %789
    %v792 = vmul.f32 %v775, %v790
    %v794 = vrot.slane %v268, 4
    %v796 = vunpack.c.l.bf16 %v794
    %v797 = vadd.f32 %v796, %v288
    %v798 = vpack.c.bf16 %v714, %v714
    %800 = vrot.lane.b32.xlu0 %v798, 32
    %v801 = vpop.permute.xlu0 %800
    %v803 = vsel %vm189, %v801, 0
    %805 = vmatprep.subr.bf16.mxu0 0
    %806 = vmatpush1.bf16.msra.mxu0 0
    %807 = vmatprep.subr.bf16.mxu0 0
    %808 = vmatpush1.bf16.msra.mxu0 0
    %809 = vmatprep.subr.bf16.mxu0 0
    %810 = vmatpush1.bf16.msra.mxu0 0
    %811 = vmatprep.subr.bf16.mxu0 0
    %812 = vmatpush1.bf16.msra.mxu0 0
    %813 = vmatprep.subr.bf16.mxu0 0
    %814 = vmatpush1.bf16.msra.mxu0 0
    %815 = vmatprep.subr.bf16.mxu0 0
    %816 = vmatpush1.bf16.msra.mxu0 0
    %817 = vmatprep.subr.bf16.mxu0 0
    %818 = vmatpush1.bf16.msra.mxu0 %v313
    %819 = vmatprep.subr.bf16.mxu0 0
    %820 = vmatpush1.bf16.msra.mxu0 %v312
    %821 = vmatprep.subr.bf16.mxu0 0
    %822 = vmatpush2.bf16.msra.mxu0 0
    %823 = vmatprep.subr.bf16.mxu0 0
    %824 = vmatpush2.bf16.msra.mxu0 0
    %825 = vmatprep.subr.bf16.mxu0 0
    %826 = vmatpush2.bf16.msra.mxu0 0
    %827 = vmatprep.subr.bf16.mxu0 0
    %828 = vmatpush2.bf16.msra.mxu0 0
    %829 = vmatprep.subr.bf16.mxu0 0
    %830 = vmatpush2.bf16.msra.mxu0 0
    %831 = vmatprep.subr.bf16.mxu0 0
    %832 = vmatpush2.bf16.msra.mxu0 0
    %833 = vmatprep.subr.bf16.mxu0 0
    %834 = vmatpush2.bf16.msra.mxu0 0
    %835 = vmatprep.subr.bf16.mxu0 0
    %836 = vmatpush2.bf16.msra.mxu0 0
    %837 = vmatprep.mubr.bf16.mxu0 0
    %838 = vmatmul.mubr.bf16.gmra.mxu0 %v803
    %v839 = vpop.f32.mrf.mxu0
    %v840 = vadd.f32 0.0, %v839
    %v841 = vpop.f32.mrf.mxu0
    %v842 = vpop.f32.mrf.mxu0
    %v843 = vpop.f32.mrf.mxu0
    %844 = vdwg.mxu0
    %v845 = vadd.f32 %v797, %v840
    %v846 = vtanh.pop %v845
    %v847 = vxor.u32 %v845, 2147483648
    %v848 = vmul.f32 %v847, 1.442695
    %v849 = vpow.pop %v848
    %v850 = vadd.f32 %v849, 1.0
    %v851 = vrcp.pop %v850
    %v852 = vmul.f32 1.0, %v851
    %v853 = vsel %vm301, %v846, %v852
    %v854 = vmul.f32 %v853, %v708
    %856 = vrot.lane.b32.xlu0 %v853, 64
    %v857 = vpop.permute.xlu0 %856
    %v859 = vmul.f32 %v853, %v857
    %861 = vrot.lane.b32.xlu0 %v859, 32
    %v862 = vpop.permute.xlu0 %861
    %v864 = vadd.f32 %v854, %v862
    %v865 = vtanh.pop %v864
    %867 = vrot.lane.b32.xlu0 %v865, 64
    %v868 = vpop.permute.xlu0 %867
    %v870 = vmul.f32 %v853, %v868
    %872 = vrot.lane.b32.xlu0 %v870, 32
    %v873 = vpop.permute.xlu0 %872
    %876 = vrot.lane.b32.xlu0 %v792, 64
    %v877 = vpop.permute.xlu0 %876
    %v879 = vsel %vm189, %v873, %v877
    %v880 = vpack.c.bf16 %v879, %v879
    %v882 = vsel %vm415, %v880, 0
    %884 = vmatprep.subr.bf16.mxu0 0
    %885 = vmatpush1.bf16.msra.mxu0 0
    %886 = vmatprep.subr.bf16.mxu0 0
    %887 = vmatpush1.bf16.msra.mxu0 0
    %888 = vmatprep.subr.bf16.mxu0 0
    %889 = vmatpush1.bf16.msra.mxu0 0
    %890 = vmatprep.subr.bf16.mxu0 0
    %891 = vmatpush1.bf16.msra.mxu0 0
    %892 = vmatprep.subr.bf16.mxu0 0
    %893 = vmatpush1.bf16.msra.mxu0 %v410
    %894 = vmatprep.subr.bf16.mxu0 0
    %895 = vmatpush1.bf16.msra.mxu0 %v409
    %896 = vmatprep.subr.bf16.mxu0 0
    %897 = vmatpush1.bf16.msra.mxu0 %v408
    %898 = vmatprep.subr.bf16.mxu0 0
    %899 = vmatpush1.bf16.msra.mxu0 %v407
    %900 = vmatprep.subr.bf16.mxu0 0
    %901 = vmatpush2.bf16.msra.mxu0 0
    %902 = vmatprep.subr.bf16.mxu0 0
    %903 = vmatpush2.bf16.msra.mxu0 0
    %904 = vmatprep.subr.bf16.mxu0 0
    %905 = vmatpush2.bf16.msra.mxu0 0
    %906 = vmatprep.subr.bf16.mxu0 0
    %907 = vmatpush2.bf16.msra.mxu0 0
    %908 = vmatprep.subr.bf16.mxu0 0
    %909 = vmatpush2.bf16.msra.mxu0 0
    %910 = vmatprep.subr.bf16.mxu0 0
    %911 = vmatpush2.bf16.msra.mxu0 0
    %912 = vmatprep.subr.bf16.mxu0 0
    %913 = vmatpush2.bf16.msra.mxu0 0
    %914 = vmatprep.subr.bf16.mxu0 0
    %915 = vmatpush2.bf16.msra.mxu0 0
    %916 = vmatprep.mubr.bf16.mxu0 0
    %917 = vmatmul.mubr.bf16.gmra.mxu0 %v882
    %v918 = vpop.f32.mrf.mxu0
    %v919 = vadd.f32 %v295, %v918
    %v920 = vpop.f32.mrf.mxu0
    %v921 = vpop.f32.mrf.mxu0
    %v922 = vpop.f32.mrf.mxu0
    %923 = vdwg.mxu0
    %v924 = vtanh.pop %v919
    %v925 = vxor.u32 %v919, 2147483648
    %v926 = vmul.f32 %v925, 1.442695
    %v927 = vpow.pop %v926
    %v928 = vadd.f32 %v927, 1.0
    %v929 = vrcp.pop %v928
    %v930 = vmul.f32 1.0, %v929
    %v931 = vsel %vm301, %v924, %v930
    %v932 = vmul.f32 %v931, %v786
    %934 = vrot.lane.b32.xlu0 %v931, 64
    %v935 = vpop.permute.xlu0 %934
    %v937 = vmul.f32 %v931, %v935
    %939 = vrot.lane.b32.xlu0 %v937, 32
    %v940 = vpop.permute.xlu0 %939
    %v942 = vadd.f32 %v932, %v940
    %v943 = vtanh.pop %v942
    %945 = vrot.lane.b32.xlu0 %v943, 64
    %v946 = vpop.permute.xlu0 %945
    %v948 = vmul.f32 %v931, %v946
    %v949 = vunpack.c.l.bf16 %v269
    %v950 = vadd.f32 %v949, %v288
    %v951 = vpack.c.bf16 %v870, %v870
    %953 = vrot.lane.b32.xlu0 %v951, 32
    %v954 = vpop.permute.xlu0 %953
    %v956 = vsel %vm189, %v954, 0
    %958 = vmatprep.subr.bf16.mxu0 0
    %959 = vmatpush1.bf16.msra.mxu0 0
    %960 = vmatprep.subr.bf16.mxu0 0
    %961 = vmatpush1.bf16.msra.mxu0 0
    %962 = vmatprep.subr.bf16.mxu0 0
    %963 = vmatpush1.bf16.msra.mxu0 0
    %964 = vmatprep.subr.bf16.mxu0 0
    %965 = vmatpush1.bf16.msra.mxu0 0
    %966 = vmatprep.subr.bf16.mxu0 0
    %967 = vmatpush1.bf16.msra.mxu0 0
    %968 = vmatprep.subr.bf16.mxu0 0
    %969 = vmatpush1.bf16.msra.mxu0 0
    %970 = vmatprep.subr.bf16.mxu0 0
    %971 = vmatpush1.bf16.msra.mxu0 %v313
    %972 = vmatprep.subr.bf16.mxu0 0
    %973 = vmatpush1.bf16.msra.mxu0 %v312
    %974 = vmatprep.subr.bf16.mxu0 0
    %975 = vmatpush2.bf16.msra.mxu0 0
    %976 = vmatprep.subr.bf16.mxu0 0
    %977 = vmatpush2.bf16.msra.mxu0 0
    %978 = vmatprep.subr.bf16.mxu0 0
    %979 = vmatpush2.bf16.msra.mxu0 0
    %980 = vmatprep.subr.bf16.mxu0 0
    %981 = vmatpush2.bf16.msra.mxu0 0
    %982 = vmatprep.subr.bf16.mxu0 0
    %983 = vmatpush2.bf16.msra.mxu0 0
    %984 = vmatprep.subr.bf16.mxu0 0
    %985 = vmatpush2.bf16.msra.mxu0 0
    %986 = vmatprep.subr.bf16.mxu0 0
    %987 = vmatpush2.bf16.msra.mxu0 0
    %988 = vmatprep.subr.bf16.mxu0 0
    %989 = vmatpush2.bf16.msra.mxu0 0
    %990 = vmatprep.mubr.bf16.mxu0 0
    %991 = vmatmul.mubr.bf16.gmra.mxu0 %v956
    %v992 = vpop.f32.mrf.mxu0
    %v993 = vadd.f32 0.0, %v992
    %v994 = vpop.f32.mrf.mxu0
    %v995 = vpop.f32.mrf.mxu0
    %v996 = vpop.f32.mrf.mxu0
    %997 = vdwg.mxu0
    %v998 = vadd.f32 %v950, %v993
    %v999 = vtanh.pop %v998
    %v1000 = vxor.u32 %v998, 2147483648
    %v1001 = vmul.f32 %v1000, 1.442695
    %v1002 = vpow.pop %v1001
    %v1003 = vadd.f32 %v1002, 1.0
    %v1004 = vrcp.pop %v1003
    %v1005 = vmul.f32 1.0, %v1004
    %v1006 = vsel %vm301, %v999, %v1005
    %v1007 = vmul.f32 %v1006, %v864
    %1009 = vrot.lane.b32.xlu0 %v1006, 64
    %v1010 = vpop.permute.xlu0 %1009
    %v1012 = vmul.f32 %v1006, %v1010
    %1014 = vrot.lane.b32.xlu0 %v1012, 32
    %v1015 = vpop.permute.xlu0 %1014
    %v1017 = vadd.f32 %v1007, %v1015
    %v1018 = vtanh.pop %v1017
    %1020 = vrot.lane.b32.xlu0 %v1018, 64
    %v1021 = vpop.permute.xlu0 %1020
    %v1023 = vmul.f32 %v1006, %v1021
    %1025 = vrot.lane.b32.xlu0 %v1023, 32
    %v1026 = vpop.permute.xlu0 %1025
    %1029 = vrot.lane.b32.xlu0 %v948, 64
    %v1030 = vpop.permute.xlu0 %1029
    %v1032 = vsel %vm189, %v1026, %v1030
    %v1033 = vpack.c.bf16 %v1032, %v1032
    %v1035 = vsel %vm415, %v1033, 0
    %1037 = vmatprep.subr.bf16.mxu0 0
    %1038 = vmatpush1.bf16.msra.mxu0 0
    %1039 = vmatprep.subr.bf16.mxu0 0
    %1040 = vmatpush1.bf16.msra.mxu0 0
    %1041 = vmatprep.subr.bf16.mxu0 0
    %1042 = vmatpush1.bf16.msra.mxu0 0
    %1043 = vmatprep.subr.bf16.mxu0 0
    %1044 = vmatpush1.bf16.msra.mxu0 0
    %1045 = vmatprep.subr.bf16.mxu0 0
    %1046 = vmatpush1.bf16.msra.mxu0 %v410
    %1047 = vmatprep.subr.bf16.mxu0 0
    %1048 = vmatpush1.bf16.msra.mxu0 %v409
    %1049 = vmatprep.subr.bf16.mxu0 0
    %1050 = vmatpush1.bf16.msra.mxu0 %v408
    %1051 = vmatprep.subr.bf16.mxu0 0
    %1052 = vmatpush1.bf16.msra.mxu0 %v407
    %1053 = vmatprep.subr.bf16.mxu0 0
    %1054 = vmatpush2.bf16.msra.mxu0 0
    %1055 = vmatprep.subr.bf16.mxu0 0
    %1056 = vmatpush2.bf16.msra.mxu0 0
    %1057 = vmatprep.subr.bf16.mxu0 0
    %1058 = vmatpush2.bf16.msra.mxu0 0
    %1059 = vmatprep.subr.bf16.mxu0 0
    %1060 = vmatpush2.bf16.msra.mxu0 0
    %1061 = vmatprep.subr.bf16.mxu0 0
    %1062 = vmatpush2.bf16.msra.mxu0 0
    %1063 = vmatprep.subr.bf16.mxu0 0
    %1064 = vmatpush2.bf16.msra.mxu0 0
    %1065 = vmatprep.subr.bf16.mxu0 0
    %1066 = vmatpush2.bf16.msra.mxu0 0
    %1067 = vmatprep.subr.bf16.mxu0 0
    %1068 = vmatpush2.bf16.msra.mxu0 0
    %1069 = vmatprep.mubr.bf16.mxu0 0
    %1070 = vmatmul.mubr.bf16.gmra.mxu0 %v1035
    %v1071 = vpop.f32.mrf.mxu0
    %v1072 = vadd.f32 %v295, %v1071
    %v1073 = vpop.f32.mrf.mxu0
    %v1074 = vpop.f32.mrf.mxu0
    %v1075 = vpop.f32.mrf.mxu0
    %1076 = vdwg.mxu0
    %v1077 = vtanh.pop %v1072
    %v1078 = vxor.u32 %v1072, 2147483648
    %v1079 = vmul.f32 %v1078, 1.442695
    %v1080 = vpow.pop %v1079
    %v1081 = vadd.f32 %v1080, 1.0
    %v1082 = vrcp.pop %v1081
    %v1083 = vmul.f32 1.0, %v1082
    %v1084 = vsel %vm301, %v1077, %v1083
    %v1085 = vmul.f32 %v1084, %v942
    %1087 = vrot.lane.b32.xlu0 %v1084, 64
    %v1088 = vpop.permute.xlu0 %1087
    %v1090 = vmul.f32 %v1084, %v1088
    %1092 = vrot.lane.b32.xlu0 %v1090, 32
    %v1093 = vpop.permute.xlu0 %1092
    %v1095 = vadd.f32 %v1085, %v1093
    %v1096 = vtanh.pop %v1095
    %1098 = vrot.lane.b32.xlu0 %v1096, 64
    %v1099 = vpop.permute.xlu0 %1098
    %v1101 = vmul.f32 %v1084, %v1099
    %v1103 = vrot.slane %v269, 4
    %v1105 = vunpack.c.l.bf16 %v1103
    %v1106 = vadd.f32 %v1105, %v288
    %v1107 = vpack.c.bf16 %v1023, %v1023
    %1109 = vrot.lane.b32.xlu0 %v1107, 32
    %v1110 = vpop.permute.xlu0 %1109
    %v1112 = vsel %vm189, %v1110, 0
    %1114 = vmatprep.subr.bf16.mxu0 0
    %1115 = vmatpush1.bf16.msra.mxu0 0
    %1116 = vmatprep.subr.bf16.mxu0 0
    %1117 = vmatpush1.bf16.msra.mxu0 0
    %1118 = vmatprep.subr.bf16.mxu0 0
    %1119 = vmatpush1.bf16.msra.mxu0 0
    %1120 = vmatprep.subr.bf16.mxu0 0
    %1121 = vmatpush1.bf16.msra.mxu0 0
    %1122 = vmatprep.subr.bf16.mxu0 0
    %1123 = vmatpush1.bf16.msra.mxu0 0
    %1124 = vmatprep.subr.bf16.mxu0 0
    %1125 = vmatpush1.bf16.msra.mxu0 0
    %1126 = vmatprep.subr.bf16.mxu0 0
    %1127 = vmatpush1.bf16.msra.mxu0 %v313
    %1128 = vmatprep.subr.bf16.mxu0 0
    %1129 = vmatpush1.bf16.msra.mxu0 %v312
    %1130 = vmatprep.subr.bf16.mxu0 0
    %1131 = vmatpush2.bf16.msra.mxu0 0
    %1132 = vmatprep.subr.bf16.mxu0 0
    %1133 = vmatpush2.bf16.msra.mxu0 0
    %1134 = vmatprep.subr.bf16.mxu0 0
    %1135 = vmatpush2.bf16.msra.mxu0 0
    %1136 = vmatprep.subr.bf16.mxu0 0
    %1137 = vmatpush2.bf16.msra.mxu0 0
    %1138 = vmatprep.subr.bf16.mxu0 0
    %1139 = vmatpush2.bf16.msra.mxu0 0
    %1140 = vmatprep.subr.bf16.mxu0 0
    %1141 = vmatpush2.bf16.msra.mxu0 0
    %1142 = vmatprep.subr.bf16.mxu0 0
    %1143 = vmatpush2.bf16.msra.mxu0 0
    %1144 = vmatprep.subr.bf16.mxu0 0
    %1145 = vmatpush2.bf16.msra.mxu0 0
    %1146 = vmatprep.mubr.bf16.mxu0 0
    %1147 = vmatmul.mubr.bf16.gmra.mxu0 %v1112
    %v1148 = vpop.f32.mrf.mxu0
    %v1149 = vadd.f32 0.0, %v1148
    %v1150 = vpop.f32.mrf.mxu0
    %v1151 = vpop.f32.mrf.mxu0
    %v1152 = vpop.f32.mrf.mxu0
    %1153 = vdwg.mxu0
    %v1154 = vadd.f32 %v1106, %v1149
    %v1155 = vtanh.pop %v1154
    %v1156 = vxor.u32 %v1154, 2147483648
    %v1157 = vmul.f32 %v1156, 1.442695
    %v1158 = vpow.pop %v1157
    %v1159 = vadd.f32 %v1158, 1.0
    %v1160 = vrcp.pop %v1159
    %v1161 = vmul.f32 1.0, %v1160
    %v1162 = vsel %vm301, %v1155, %v1161
    %v1163 = vmul.f32 %v1162, %v1017
    %1165 = vrot.lane.b32.xlu0 %v1162, 64
    %v1166 = vpop.permute.xlu0 %1165
    %v1168 = vmul.f32 %v1162, %v1166
    %1170 = vrot.lane.b32.xlu0 %v1168, 32
    %v1171 = vpop.permute.xlu0 %1170
    %v1173 = vadd.f32 %v1163, %v1171
    %v1174 = vtanh.pop %v1173
    %1176 = vrot.lane.b32.xlu0 %v1174, 64
    %v1177 = vpop.permute.xlu0 %1176
    %v1179 = vmul.f32 %v1162, %v1177
    %1181 = vrot.lane.b32.xlu0 %v1179, 32
    %v1182 = vpop.permute.xlu0 %1181
    %1185 = vrot.lane.b32.xlu0 %v1101, 64
    %v1186 = vpop.permute.xlu0 %1185
    %v1188 = vsel %vm189, %v1182, %v1186
    %v1189 = vpack.c.bf16 %v1188, %v1188
    %v1191 = vsel %vm415, %v1189, 0
    %1193 = vmatprep.subr.bf16.mxu0 0
    %1194 = vmatpush1.bf16.msra.mxu0 0
    %1195 = vmatprep.subr.bf16.mxu0 0
    %1196 = vmatpush1.bf16.msra.mxu0 0
    %1197 = vmatprep.subr.bf16.mxu0 0
    %1198 = vmatpush1.bf16.msra.mxu0 0
    %1199 = vmatprep.subr.bf16.mxu0 0
    %1200 = vmatpush1.bf16.msra.mxu0 0
    %1201 = vmatprep.subr.bf16.mxu0 0
    %1202 = vmatpush1.bf16.msra.mxu0 %v410
    %1203 = vmatprep.subr.bf16.mxu0 0
    %1204 = vmatpush1.bf16.msra.mxu0 %v409
    %1205 = vmatprep.subr.bf16.mxu0 0
    %1206 = vmatpush1.bf16.msra.mxu0 %v408
    %1207 = vmatprep.subr.bf16.mxu0 0
    %1208 = vmatpush1.bf16.msra.mxu0 %v407
    %1209 = vmatprep.subr.bf16.mxu0 0
    %1210 = vmatpush2.bf16.msra.mxu0 0
    %1211 = vmatprep.subr.bf16.mxu0 0
    %1212 = vmatpush2.bf16.msra.mxu0 0
    %1213 = vmatprep.subr.bf16.mxu0 0
    %1214 = vmatpush2.bf16.msra.mxu0 0
    %1215 = vmatprep.subr.bf16.mxu0 0
    %1216 = vmatpush2.bf16.msra.mxu0 0
    %1217 = vmatprep.subr.bf16.mxu0 0
    %1218 = vmatpush2.bf16.msra.mxu0 0
    %1219 = vmatprep.subr.bf16.mxu0 0
    %1220 = vmatpush2.bf16.msra.mxu0 0
    %1221 = vmatprep.subr.bf16.mxu0 0
    %1222 = vmatpush2.bf16.msra.mxu0 0
    %1223 = vmatprep.subr.bf16.mxu0 0
    %1224 = vmatpush2.bf16.msra.mxu0 0
    %1225 = vmatprep.mubr.bf16.mxu0 0
    %1226 = vmatmul.mubr.bf16.gmra.mxu0 %v1191
    %v1227 = vpop.f32.mrf.mxu0
    %v1228 = vadd.f32 %v295, %v1227
    %v1229 = vpop.f32.mrf.mxu0
    %v1230 = vpop.f32.mrf.mxu0
    %v1231 = vpop.f32.mrf.mxu0
    %1232 = vdwg.mxu0
    %v1233 = vtanh.pop %v1228
    %v1234 = vxor.u32 %v1228, 2147483648
    %v1235 = vmul.f32 %v1234, 1.442695
    %v1236 = vpow.pop %v1235
    %v1237 = vadd.f32 %v1236, 1.0
    %v1238 = vrcp.pop %v1237
    %v1239 = vmul.f32 1.0, %v1238
    %v1240 = vsel %vm301, %v1233, %v1239
    %v1241 = vmul.f32 %v1240, %v1095
    %1243 = vrot.lane.b32.xlu0 %v1240, 64
    %v1244 = vpop.permute.xlu0 %1243
    %v1246 = vmul.f32 %v1240, %v1244
    %1248 = vrot.lane.b32.xlu0 %v1246, 32
    %v1249 = vpop.permute.xlu0 %1248
    %v1251 = vadd.f32 %v1241, %v1249
    %v1252 = vtanh.pop %v1251
    %1254 = vrot.lane.b32.xlu0 %v1252, 64
    %v1255 = vpop.permute.xlu0 %1254
    %v1257 = vmul.f32 %v1240, %v1255
    %v1258 = vunpack.c.l.bf16 %v270
    %v1259 = vadd.f32 %v1258, %v288
    %v1260 = vpack.c.bf16 %v1179, %v1179
    %1262 = vrot.lane.b32.xlu0 %v1260, 32
    %v1263 = vpop.permute.xlu0 %1262
    %v1265 = vsel %vm189, %v1263, 0
    %1267 = vmatprep.subr.bf16.mxu0 0
    %1268 = vmatpush1.bf16.msra.mxu0 0
    %1269 = vmatprep.subr.bf16.mxu0 0
    %1270 = vmatpush1.bf16.msra.mxu0 0
    %1271 = vmatprep.subr.bf16.mxu0 0
    %1272 = vmatpush1.bf16.msra.mxu0 0
    %1273 = vmatprep.subr.bf16.mxu0 0
    %1274 = vmatpush1.bf16.msra.mxu0 0
    %1275 = vmatprep.subr.bf16.mxu0 0
    %1276 = vmatpush1.bf16.msra.mxu0 0
    %1277 = vmatprep.subr.bf16.mxu0 0
    %1278 = vmatpush1.bf16.msra.mxu0 0
    %1279 = vmatprep.subr.bf16.mxu0 0
    %1280 = vmatpush1.bf16.msra.mxu0 %v313
    %1281 = vmatprep.subr.bf16.mxu0 0
    %1282 = vmatpush1.bf16.msra.mxu0 %v312
    %1283 = vmatprep.subr.bf16.mxu0 0
    %1284 = vmatpush2.bf16.msra.mxu0 0
    %1285 = vmatprep.subr.bf16.mxu0 0
    %1286 = vmatpush2.bf16.msra.mxu0 0
    %1287 = vmatprep.subr.bf16.mxu0 0
    %1288 = vmatpush2.bf16.msra.mxu0 0
    %1289 = vmatprep.subr.bf16.mxu0 0
    %1290 = vmatpush2.bf16.msra.mxu0 0
    %1291 = vmatprep.subr.bf16.mxu0 0
    %1292 = vmatpush2.bf16.msra.mxu0 0
    %1293 = vmatprep.subr.bf16.mxu0 0
    %1294 = vmatpush2.bf16.msra.mxu0 0
    %1295 = vmatprep.subr.bf16.mxu0 0
    %1296 = vmatpush2.bf16.msra.mxu0 0
    %1297 = vmatprep.subr.bf16.mxu0 0
    %1298 = vmatpush2.bf16.msra.mxu0 0
    %1299 = vmatprep.mubr.bf16.mxu0 0
    %1300 = vmatmul.mubr.bf16.gmra.mxu0 %v1265
    %v1301 = vpop.f32.mrf.mxu0
    %v1302 = vadd.f32 0.0, %v1301
    %v1303 = vpop.f32.mrf.mxu0
    %v1304 = vpop.f32.mrf.mxu0
    %v1305 = vpop.f32.mrf.mxu0
    %1306 = vdwg.mxu0
    %v1307 = vadd.f32 %v1259, %v1302
    %v1308 = vtanh.pop %v1307
    %v1309 = vxor.u32 %v1307, 2147483648
    %v1310 = vmul.f32 %v1309, 1.442695
    %v1311 = vpow.pop %v1310
    %v1312 = vadd.f32 %v1311, 1.0
    %v1313 = vrcp.pop %v1312
    %v1314 = vmul.f32 1.0, %v1313
    %v1315 = vsel %vm301, %v1308, %v1314
    %v1316 = vmul.f32 %v1315, %v1173
    %1318 = vrot.lane.b32.xlu0 %v1315, 64
    %v1319 = vpop.permute.xlu0 %1318
    %v1321 = vmul.f32 %v1315, %v1319
    %1323 = vrot.lane.b32.xlu0 %v1321, 32
    %v1324 = vpop.permute.xlu0 %1323
    %v1326 = vadd.f32 %v1316, %v1324
    %v1327 = vtanh.pop %v1326
    %1329 = vrot.lane.b32.xlu0 %v1327, 64
    %v1330 = vpop.permute.xlu0 %1329
    %v1332 = vmul.f32 %v1315, %v1330
    %1334 = vrot.lane.b32.xlu0 %v1332, 32
    %v1335 = vpop.permute.xlu0 %1334
    %1338 = vrot.lane.b32.xlu0 %v1257, 64
    %v1339 = vpop.permute.xlu0 %1338
    %v1341 = vsel %vm189, %v1335, %v1339
    %v1342 = vpack.c.bf16 %v1341, %v1341
    %v1344 = vsel %vm415, %v1342, 0
    %1346 = vmatprep.subr.bf16.mxu0 0
    %1347 = vmatpush1.bf16.msra.mxu0 0
    %1348 = vmatprep.subr.bf16.mxu0 0
    %1349 = vmatpush1.bf16.msra.mxu0 0
    %1350 = vmatprep.subr.bf16.mxu0 0
    %1351 = vmatpush1.bf16.msra.mxu0 0
    %1352 = vmatprep.subr.bf16.mxu0 0
    %1353 = vmatpush1.bf16.msra.mxu0 0
    %1354 = vmatprep.subr.bf16.mxu0 0
    %1355 = vmatpush1.bf16.msra.mxu0 %v410
    %1356 = vmatprep.subr.bf16.mxu0 0
    %1357 = vmatpush1.bf16.msra.mxu0 %v409
    %1358 = vmatprep.subr.bf16.mxu0 0
    %1359 = vmatpush1.bf16.msra.mxu0 %v408
    %1360 = vmatprep.subr.bf16.mxu0 0
    %1361 = vmatpush1.bf16.msra.mxu0 %v407
    %1362 = vmatprep.subr.bf16.mxu0 0
    %1363 = vmatpush2.bf16.msra.mxu0 0
    %1364 = vmatprep.subr.bf16.mxu0 0
    %1365 = vmatpush2.bf16.msra.mxu0 0
    %1366 = vmatprep.subr.bf16.mxu0 0
    %1367 = vmatpush2.bf16.msra.mxu0 0
    %1368 = vmatprep.subr.bf16.mxu0 0
    %1369 = vmatpush2.bf16.msra.mxu0 0
    %1370 = vmatprep.subr.bf16.mxu0 0
    %1371 = vmatpush2.bf16.msra.mxu0 0
    %1372 = vmatprep.subr.bf16.mxu0 0
    %1373 = vmatpush2.bf16.msra.mxu0 0
    %1374 = vmatprep.subr.bf16.mxu0 0
    %1375 = vmatpush2.bf16.msra.mxu0 0
    %1376 = vmatprep.subr.bf16.mxu0 0
    %1377 = vmatpush2.bf16.msra.mxu0 0
    %1378 = vmatprep.mubr.bf16.mxu0 0
    %1379 = vmatmul.mubr.bf16.gmra.mxu0 %v1344
    %v1380 = vpop.f32.mrf.mxu0
    %v1381 = vadd.f32 %v295, %v1380
    %v1382 = vpop.f32.mrf.mxu0
    %v1383 = vpop.f32.mrf.mxu0
    %v1384 = vpop.f32.mrf.mxu0
    %1385 = vdwg.mxu0
    %v1386 = vtanh.pop %v1381
    %v1387 = vxor.u32 %v1381, 2147483648
    %v1388 = vmul.f32 %v1387, 1.442695
    %v1389 = vpow.pop %v1388
    %v1390 = vadd.f32 %v1389, 1.0
    %v1391 = vrcp.pop %v1390
    %v1392 = vmul.f32 1.0, %v1391
    %v1393 = vsel %vm301, %v1386, %v1392
    %v1394 = vmul.f32 %v1393, %v1251
    %1396 = vrot.lane.b32.xlu0 %v1393, 64
    %v1397 = vpop.permute.xlu0 %1396
    %v1399 = vmul.f32 %v1393, %v1397
    %1401 = vrot.lane.b32.xlu0 %v1399, 32
    %v1402 = vpop.permute.xlu0 %1401
    %v1404 = vadd.f32 %v1394, %v1402
    %v1405 = vtanh.pop %v1404
    %1407 = vrot.lane.b32.xlu0 %v1405, 64
    %v1408 = vpop.permute.xlu0 %1407
    %v1410 = vmul.f32 %v1393, %v1408
    %v1412 = vrot.slane %v270, 4
    %v1414 = vunpack.c.l.bf16 %v1412
    %v1415 = vadd.f32 %v1414, %v288
    %v1416 = vpack.c.bf16 %v1332, %v1332
    %1418 = vrot.lane.b32.xlu0 %v1416, 32
    %v1419 = vpop.permute.xlu0 %1418
    %v1421 = vsel %vm189, %v1419, 0
    %1423 = vmatprep.subr.bf16.mxu0 0
    %1424 = vmatpush1.bf16.msra.mxu0 0
    %1425 = vmatprep.subr.bf16.mxu0 0
    %1426 = vmatpush1.bf16.msra.mxu0 0
    %1427 = vmatprep.subr.bf16.mxu0 0
    %1428 = vmatpush1.bf16.msra.mxu0 0
    %1429 = vmatprep.subr.bf16.mxu0 0
    %1430 = vmatpush1.bf16.msra.mxu0 0
    %1431 = vmatprep.subr.bf16.mxu0 0
    %1432 = vmatpush1.bf16.msra.mxu0 0
    %1433 = vmatprep.subr.bf16.mxu0 0
    %1434 = vmatpush1.bf16.msra.mxu0 0
    %1435 = vmatprep.subr.bf16.mxu0 0
    %1436 = vmatpush1.bf16.msra.mxu0 %v313
    %1437 = vmatprep.subr.bf16.mxu0 0
    %1438 = vmatpush1.bf16.msra.mxu0 %v312
    %1439 = vmatprep.subr.bf16.mxu0 0
    %1440 = vmatpush2.bf16.msra.mxu0 0
    %1441 = vmatprep.subr.bf16.mxu0 0
    %1442 = vmatpush2.bf16.msra.mxu0 0
    %1443 = vmatprep.subr.bf16.mxu0 0
    %1444 = vmatpush2.bf16.msra.mxu0 0
    %1445 = vmatprep.subr.bf16.mxu0 0
    %1446 = vmatpush2.bf16.msra.mxu0 0
    %1447 = vmatprep.subr.bf16.mxu0 0
    %1448 = vmatpush2.bf16.msra.mxu0 0
    %1449 = vmatprep.subr.bf16.mxu0 0
    %1450 = vmatpush2.bf16.msra.mxu0 0
    %1451 = vmatprep.subr.bf16.mxu0 0
    %1452 = vmatpush2.bf16.msra.mxu0 0
    %1453 = vmatprep.subr.bf16.mxu0 0
    %1454 = vmatpush2.bf16.msra.mxu0 0
    %1455 = vmatprep.mubr.bf16.mxu0 0
    %1456 = vmatmul.mubr.bf16.gmra.mxu0 %v1421
    %v1457 = vpop.f32.mrf.mxu0
    %v1458 = vadd.f32 0.0, %v1457
    %v1459 = vpop.f32.mrf.mxu0
    %v1460 = vpop.f32.mrf.mxu0
    %v1461 = vpop.f32.mrf.mxu0
    %1462 = vdwg.mxu0
    %v1463 = vadd.f32 %v1415, %v1458
    %v1464 = vtanh.pop %v1463
    %v1465 = vxor.u32 %v1463, 2147483648
    %v1466 = vmul.f32 %v1465, 1.442695
    %v1467 = vpow.pop %v1466
    %v1468 = vadd.f32 %v1467, 1.0
    %v1469 = vrcp.pop %v1468
    %v1470 = vmul.f32 1.0, %v1469
    %v1471 = vsel %vm301, %v1464, %v1470
    %v1472 = vmul.f32 %v1471, %v1326
    %1474 = vrot.lane.b32.xlu0 %v1471, 64
    %v1475 = vpop.permute.xlu0 %1474
    %v1477 = vmul.f32 %v1471, %v1475
    %1479 = vrot.lane.b32.xlu0 %v1477, 32
    %v1480 = vpop.permute.xlu0 %1479
    %v1482 = vadd.f32 %v1472, %v1480
    %v1483 = vtanh.pop %v1482
    %1485 = vrot.lane.b32.xlu0 %v1483, 64
    %v1486 = vpop.permute.xlu0 %1485
    %v1488 = vmul.f32 %v1471, %v1486
    %1490 = vrot.lane.b32.xlu0 %v1488, 32
    %v1491 = vpop.permute.xlu0 %1490
    %1494 = vrot.lane.b32.xlu0 %v1410, 64
    %v1495 = vpop.permute.xlu0 %1494
    %v1497 = vsel %vm189, %v1491, %v1495
    %v1498 = vpack.c.bf16 %v1497, %v1497
    %v1500 = vsel %vm415, %v1498, 0
    %1502 = vmatprep.subr.bf16.mxu0 0
    %1503 = vmatpush1.bf16.msra.mxu0 0
    %1504 = vmatprep.subr.bf16.mxu0 0
    %1505 = vmatpush1.bf16.msra.mxu0 0
    %1506 = vmatprep.subr.bf16.mxu0 0
    %1507 = vmatpush1.bf16.msra.mxu0 0
    %1508 = vmatprep.subr.bf16.mxu0 0
    %1509 = vmatpush1.bf16.msra.mxu0 0
    %1510 = vmatprep.subr.bf16.mxu0 0
    %1511 = vmatpush1.bf16.msra.mxu0 %v410
    %1512 = vmatprep.subr.bf16.mxu0 0
    %1513 = vmatpush1.bf16.msra.mxu0 %v409
    %1514 = vmatprep.subr.bf16.mxu0 0
    %1515 = vmatpush1.bf16.msra.mxu0 %v408
    %1516 = vmatprep.subr.bf16.mxu0 0
    %1517 = vmatpush1.bf16.msra.mxu0 %v407
    %1518 = vmatprep.subr.bf16.mxu0 0
    %1519 = vmatpush2.bf16.msra.mxu0 0
    %1520 = vmatprep.subr.bf16.mxu0 0
    %1521 = vmatpush2.bf16.msra.mxu0 0
    %1522 = vmatprep.subr.bf16.mxu0 0
    %1523 = vmatpush2.bf16.msra.mxu0 0
    %1524 = vmatprep.subr.bf16.mxu0 0
    %1525 = vmatpush2.bf16.msra.mxu0 0
    %1526 = vmatprep.subr.bf16.mxu0 0
    %1527 = vmatpush2.bf16.msra.mxu0 0
    %1528 = vmatprep.subr.bf16.mxu0 0
    %1529 = vmatpush2.bf16.msra.mxu0 0
    %1530 = vmatprep.subr.bf16.mxu0 0
    %1531 = vmatpush2.bf16.msra.mxu0 0
    %1532 = vmatprep.subr.bf16.mxu0 0
    %1533 = vmatpush2.bf16.msra.mxu0 0
    %1534 = vmatprep.mubr.bf16.mxu0 0
    %1535 = vmatmul.mubr.bf16.gmra.mxu0 %v1500
    %v1536 = vpop.f32.mrf.mxu0
    %v1537 = vadd.f32 %v295, %v1536
    %v1538 = vpop.f32.mrf.mxu0
    %v1539 = vpop.f32.mrf.mxu0
    %v1540 = vpop.f32.mrf.mxu0
    %1541 = vdwg.mxu0
    %v1542 = vtanh.pop %v1537
    %v1543 = vxor.u32 %v1537, 2147483648
    %v1544 = vmul.f32 %v1543, 1.442695
    %v1545 = vpow.pop %v1544
    %v1546 = vadd.f32 %v1545, 1.0
    %v1547 = vrcp.pop %v1546
    %v1548 = vmul.f32 1.0, %v1547
    %v1549 = vsel %vm301, %v1542, %v1548
    %v1550 = vmul.f32 %v1549, %v1404
    %1552 = vrot.lane.b32.xlu0 %v1549, 64
    %v1553 = vpop.permute.xlu0 %1552
    %v1555 = vmul.f32 %v1549, %v1553
    %1557 = vrot.lane.b32.xlu0 %v1555, 32
    %v1558 = vpop.permute.xlu0 %1557
    %v1560 = vadd.f32 %v1550, %v1558
    %v1561 = vtanh.pop %v1560
    %1563 = vrot.lane.b32.xlu0 %v1561, 64
    %v1564 = vpop.permute.xlu0 %1563
    %v1566 = vmul.f32 %v1549, %v1564
    %1568 = vrot.lane.b32.xlu0 %v1566, 64
    %v1569 = vpop.permute.xlu0 %1568
    %1572 = vrot.lane.b32.xlu0 %v1482, 32
    %v1573 = vpop.permute.xlu0 %1572
    %1576 = vrot.lane.b32.xlu0 %v1560, 64
    %v1577 = vpop.permute.xlu0 %1576
    %v1579 = vsel %vm189, %v1491, %v1569
    %v1580 = vsel %vm415, %v1579, %v1573
    %vm1581 = vcmask 785408
    %v1582 = vsel %vm1581, %v1580, %v1577
    %v1583 = vpack.c.bf16 %v1582, %v1582
    %v1584 = vld [vmem:[%s7] sm:$0xf]
    %v1585 = vld [vmem:[%s7 + $0x4] sm:$0xf]
    %v1586 = vld [vmem:[%s7 + $0x8] sm:$0xf]
    %v1587 = vld [vmem:[%s7 + $0xc] sm:$0xf]
    %v1588 = vld [vmem:[%s7 + $0x10] sm:$0xf]
    %v1589 = vld [vmem:[%s7 + $0x14] sm:$0xf]
    %v1590 = vld [vmem:[%s7 + $0x18] sm:$0xf]
    %v1591 = vld [vmem:[%s7 + $0x1c] sm:$0xf]
    %v1592 = vld [vmem:[%s7 + $0x20] sm:$0xf]
    %v1593 = vld [vmem:[%s7 + $0x24] sm:$0xf]
    %v1594 = vld [vmem:[%s7 + $0x28] sm:$0xf]
    %v1595 = vld [vmem:[%s7 + $0x2c] sm:$0xf]
    %v1596 = vld [vmem:[%s7 + $0x30] sm:$0xf]
    %v1597 = vld [vmem:[%s7 + $0x34] sm:$0xf]
    %v1598 = vld [vmem:[%s7 + $0x38] sm:$0xf]
    %v1599 = vld [vmem:[%s7 + $0x3c] sm:$0xf]
    %v1600 = vld [vmem:[#allocation13] sm:$0x1]
    %v1602 = vlaneseq
    %v1603 = vshrl.u32 %v1602, 7
    %v1604 = vsub.s32 0, %v1603
    %v1605 = vrot.slane %v1600, %v1604
    %v1623 = vunpack.c.l.b16 %v1584
    %v1624 = vunpack.c.l.b16 %v1585
    %v1625 = vunpack.c.l.b16 %v1586
    %v1626 = vunpack.c.l.b16 %v1587
    %v1627 = vunpack.c.l.b16 %v1588
    %v1628 = vunpack.c.l.b16 %v1589
    %v1629 = vunpack.c.l.b16 %v1590
    %v1630 = vunpack.c.l.b16 %v1591
    %v1631 = vunpack.c.l.b16 %v1592
    %v1632 = vunpack.c.l.b16 %v1593
    %v1633 = vunpack.c.l.b16 %v1594
    %v1634 = vunpack.c.l.b16 %v1595
    %v1635 = vunpack.c.l.b16 %v1596
    %v1636 = vunpack.c.l.b16 %v1597
    %v1637 = vunpack.c.l.b16 %v1598
    %v1638 = vunpack.c.l.b16 %v1599
    %v1639 = vpack.c.b16 %v1624, %v1623
    %v1640 = vpack.c.b16 %v1626, %v1625
    %v1641 = vpack.c.b16 %v1628, %v1627
    %v1642 = vpack.c.b16 %v1630, %v1629
    %v1643 = vpack.c.b16 %v1632, %v1631
    %v1644 = vpack.c.b16 %v1634, %v1633
    %v1645 = vpack.c.b16 %v1636, %v1635
    %v1646 = vpack.c.b16 %v1638, %v1637
    %1655 = vmatprep.subr.bf16.mxu0 0
    %1656 = vmatpush1.bf16.msra.mxu0 %v1646
    %1657 = vmatprep.subr.bf16.mxu0 0
    %1658 = vmatpush1.bf16.msra.mxu0 %v1645
    %1659 = vmatprep.subr.bf16.mxu0 0
    %1660 = vmatpush1.bf16.msra.mxu0 %v1644
    %1661 = vmatprep.subr.bf16.mxu0 0
    %1662 = vmatpush1.bf16.msra.mxu0 %v1643
    %1663 = vmatprep.subr.bf16.mxu0 0
    %1664 = vmatpush1.bf16.msra.mxu0 %v1642
    %1665 = vmatprep.subr.bf16.mxu0 0
    %1666 = vmatpush1.bf16.msra.mxu0 %v1641
    %1667 = vmatprep.subr.bf16.mxu0 0
    %1668 = vmatpush1.bf16.msra.mxu0 %v1640
    %1669 = vmatprep.subr.bf16.mxu0 0
    %1670 = vmatpush1.bf16.msra.mxu0 %v1639
    %1671 = vmatprep.subr.bf16.mxu0 0
    %1672 = vmatpush2.bf16.msra.mxu0 0
    %1673 = vmatprep.subr.bf16.mxu0 0
    %1674 = vmatpush2.bf16.msra.mxu0 0
    %1675 = vmatprep.subr.bf16.mxu0 0
    %1676 = vmatpush2.bf16.msra.mxu0 0
    %1677 = vmatprep.subr.bf16.mxu0 0
    %1678 = vmatpush2.bf16.msra.mxu0 0
    %1679 = vmatprep.subr.bf16.mxu0 0
    %1680 = vmatpush2.bf16.msra.mxu0 0
    %1681 = vmatprep.subr.bf16.mxu0 0
    %1682 = vmatpush2.bf16.msra.mxu0 0
    %1683 = vmatprep.subr.bf16.mxu0 0
    %1684 = vmatpush2.bf16.msra.mxu0 0
    %1685 = vmatprep.subr.bf16.mxu0 0
    %1686 = vmatpush2.bf16.msra.mxu0 0
    %1687 = vmatprep.mubr.bf16.mxu0 0
    %1688 = vmatmul.mubr.bf16.gmra.mxu0 %v1583
    %v1689 = vpop.f32.mrf.mxu0
    %v1690 = vadd.f32 %v1605, %v1689
    %v1691 = vpop.f32.mrf.mxu0
    %v1692 = vpop.f32.mrf.mxu0
    %v1693 = vpop.f32.mrf.mxu0
    %1694 = vdwg.mxu0
    %v1695 = vtanh.pop %v1690
    %v1696 = vld [vmem:[#allocation2] sm:$0xff]
    %v1697 = vpack.c.bf16 %v1696, %v1696
    %v1698 = vld [vmem:[%s9] sm:$0xf]
    %v1699 = vld [vmem:[%s9 + $0x4] sm:$0xf]
    %v1700 = vld [vmem:[%s9 + $0x8] sm:$0xf]
    %v1701 = vld [vmem:[%s9 + $0xc] sm:$0xf]
    %v1702 = vld [vmem:[%s9 + $0x10] sm:$0xf]
    %v1703 = vld [vmem:[%s9 + $0x14] sm:$0xf]
    %v1704 = vld [vmem:[%s9 + $0x18] sm:$0xf]
    %v1705 = vld [vmem:[%s9 + $0x1c] sm:$0xf]
    %v1706 = vld [vmem:[%s10] sm:$0x1]
    %v1708 = vlaneseq
    %v1709 = vshrl.u32 %v1708, 7
    %v1710 = vsub.s32 0, %v1709
    %v1711 = vrot.slane %v1706, %v1710
    %v1721 = vunpack.c.l.b16 %v1698
    %v1722 = vunpack.c.l.b16 %v1699
    %v1723 = vunpack.c.l.b16 %v1700
    %v1724 = vunpack.c.l.b16 %v1701
    %v1725 = vunpack.c.l.b16 %v1702
    %v1726 = vunpack.c.l.b16 %v1703
    %v1727 = vunpack.c.l.b16 %v1704
    %v1728 = vunpack.c.l.b16 %v1705
    %v1729 = vpack.c.b16 %v1722, %v1721
    %v1730 = vpack.c.b16 %v1724, %v1723
    %v1731 = vpack.c.b16 %v1726, %v1725
    %v1732 = vpack.c.b16 %v1728, %v1727
    %v1738 = vsel %vm415, %v1697, 0
    %1740 = vmatprep.subr.bf16.mxu0 0
    %1741 = vmatpush1.bf16.msra.mxu0 0
    %1742 = vmatprep.subr.bf16.mxu0 0
    %1743 = vmatpush1.bf16.msra.mxu0 0
    %1744 = vmatprep.subr.bf16.mxu0 0
    %1745 = vmatpush1.bf16.msra.mxu0 0
    %1746 = vmatprep.subr.bf16.mxu0 0
    %1747 = vmatpush1.bf16.msra.mxu0 0
    %1748 = vmatprep.subr.bf16.mxu0 0
    %1749 = vmatpush1.bf16.msra.mxu0 %v1732
    %1750 = vmatprep.subr.bf16.mxu0 0
    %1751 = vmatpush1.bf16.msra.mxu0 %v1731
    %1752 = vmatprep.subr.bf16.mxu0 0
    %1753 = vmatpush1.bf16.msra.mxu0 %v1730
    %1754 = vmatprep.subr.bf16.mxu0 0
    %1755 = vmatpush1.bf16.msra.mxu0 %v1729
    %1756 = vmatprep.subr.bf16.mxu0 0
    %1757 = vmatpush2.bf16.msra.mxu0 0
    %1758 = vmatprep.subr.bf16.mxu0 0
    %1759 = vmatpush2.bf16.msra.mxu0 0
    %1760 = vmatprep.subr.bf16.mxu0 0
    %1761 = vmatpush2.bf16.msra.mxu0 0
    %1762 = vmatprep.subr.bf16.mxu0 0
    %1763 = vmatpush2.bf16.msra.mxu0 0
    %1764 = vmatprep.subr.bf16.mxu0 0
    %1765 = vmatpush2.bf16.msra.mxu0 0
    %1766 = vmatprep.subr.bf16.mxu0 0
    %1767 = vmatpush2.bf16.msra.mxu0 0
    %1768 = vmatprep.subr.bf16.mxu0 0
    %1769 = vmatpush2.bf16.msra.mxu0 0
    %1770 = vmatprep.subr.bf16.mxu0 0
    %1771 = vmatpush2.bf16.msra.mxu0 0
    %1772 = vmatprep.mubr.bf16.mxu0 0
    %1773 = vmatmul.mubr.bf16.gmra.mxu0 %v1738
    %v1774 = vpop.f32.mrf.mxu0
    %v1775 = vadd.f32 %v1711, %v1774
    %v1776 = vpop.f32.mrf.mxu0
    %v1777 = vpop.f32.mrf.mxu0
    %v1778 = vpop.f32.mrf.mxu0
    %1779 = vdwg.mxu0
    %v1780 = vtanh.pop %v1775
    %v1781 = vmul.f32 %v1695, %v1780
    %v1782 = vpack.c.bf16 %v1781, %v1781
    %v1783 = vld [vmem:[#allocation14] sm:$0xf]
    %v1784 = vld [vmem:[#allocation14 + $0x4] sm:$0xf]
    %v1785 = vld [vmem:[#allocation14 + $0x8] sm:$0xf]
    %v1786 = vld [vmem:[#allocation14 + $0xc] sm:$0xf]
    %v1787 = vld [vmem:[%s12] sm:$0x1]
    %v1789 = vlaneseq
    %v1790 = vshrl.u32 %v1789, 7
    %v1791 = vsub.s32 0, %v1790
    %v1792 = vrot.slane %v1787, %v1791
    %v1798 = vunpack.c.l.b16 %v1783
    %v1799 = vunpack.c.l.b16 %v1784
    %v1800 = vunpack.c.l.b16 %v1785
    %v1801 = vunpack.c.l.b16 %v1786
    %v1802 = vpack.c.b16 %v1799, %v1798
    %v1803 = vpack.c.b16 %v1801, %v1800
    %v1807 = vsel %vm189, %v1782, 0
    %1809 = vmatprep.subr.bf16.mxu0 0
    %1810 = vmatpush1.bf16.msra.mxu0 0
    %1811 = vmatprep.subr.bf16.mxu0 0
    %1812 = vmatpush1.bf16.msra.mxu0 0
    %1813 = vmatprep.subr.bf16.mxu0 0
    %1814 = vmatpush1.bf16.msra.mxu0 0
    %1815 = vmatprep.subr.bf16.mxu0 0
    %1816 = vmatpush1.bf16.msra.mxu0 0
    %1817 = vmatprep.subr.bf16.mxu0 0
    %1818 = vmatpush1.bf16.msra.mxu0 0
    %1819 = vmatprep.subr.bf16.mxu0 0
    %1820 = vmatpush1.bf16.msra.mxu0 0
    %1821 = vmatprep.subr.bf16.mxu0 0
    %1822 = vmatpush1.bf16.msra.mxu0 %v1803
    %1823 = vmatprep.subr.bf16.mxu0 0
    %1824 = vmatpush1.bf16.msra.mxu0 %v1802
    %1825 = vmatprep.subr.bf16.mxu0 0
    %1826 = vmatpush2.bf16.msra.mxu0 0
    %1827 = vmatprep.subr.bf16.mxu0 0
    %1828 = vmatpush2.bf16.msra.mxu0 0
    %1829 = vmatprep.subr.bf16.mxu0 0
    %1830 = vmatpush2.bf16.msra.mxu0 0
    %1831 = vmatprep.subr.bf16.mxu0 0
    %1832 = vmatpush2.bf16.msra.mxu0 0
    %1833 = vmatprep.subr.bf16.mxu0 0
    %1834 = vmatpush2.bf16.msra.mxu0 0
    %1835 = vmatprep.subr.bf16.mxu0 0
    %1836 = vmatpush2.bf16.msra.mxu0 0
    %1837 = vmatprep.subr.bf16.mxu0 0
    %1838 = vmatpush2.bf16.msra.mxu0 0
    %1839 = vmatprep.subr.bf16.mxu0 0
    %1840 = vmatpush2.bf16.msra.mxu0 0
    %1841 = vmatprep.mubr.bf16.mxu0 0
    %1842 = vmatmul.mubr.bf16.gmra.mxu0 %v1807
    %v1843 = vpop.f32.mrf.mxu0
    %v1844 = vadd.f32 %v1792, %v1843
    %v1845 = vpop.f32.mrf.mxu0
    %v1846 = vpop.f32.mrf.mxu0
    %v1847 = vpop.f32.mrf.mxu0
    %1848 = vdwg.mxu0
    %v1849 = vtanh.pop %v1844
    %v1850 = vpack.c.bf16 %v1849, %v1849
    %v1851 = vld [vmem:[%s13] sm:$0xf]
    %v1852 = vld [vmem:[%s13 + $0x4] sm:$0xf]
    %v1853 = vld [vmem:[%s13 + $0x8] sm:$0xf]
    %v1854 = vld [vmem:[%s13 + $0xc] sm:$0xf]
    %v1855 = vld [vmem:[%s13 + $0x10] sm:$0xf]
    %v1856 = vld [vmem:[%s13 + $0x14] sm:$0xf]
    %v1857 = vld [vmem:[%s13 + $0x18] sm:$0xf]
    %v1858 = vld [vmem:[%s13 + $0x1c] sm:$0xf]
    %v1859 = vld [vmem:[%s13 + $0x20] sm:$0xf]
    %v1860 = vld [vmem:[%s13 + $0x24] sm:$0xf]
    %v1861 = vld [vmem:[%s13 + $0x28] sm:$0xf]
    %v1862 = vld [vmem:[%s13 + $0x2c] sm:$0xf]
    %v1863 = vld [vmem:[%s13 + $0x30] sm:$0xf]
    %v1864 = vld [vmem:[%s13 + $0x34] sm:$0xf]
    %v1865 = vld [vmem:[%s13 + $0x38] sm:$0xf]
    %v1866 = vld [vmem:[%s13 + $0x3c] sm:$0xf]
    %v1867 = vld [vmem:[%s14] sm:$0x1]
    %v1869 = vlaneseq
    %v1870 = vshrl.u32 %v1869, 7
    %v1871 = vsub.s32 0, %v1870
    %v1872 = vrot.slane %v1867, %v1871
    %v1890 = vunpack.c.l.b16 %v1851
    %v1891 = vunpack.c.l.b16 %v1852
    %v1892 = vunpack.c.l.b16 %v1853
    %v1893 = vunpack.c.l.b16 %v1854
    %v1894 = vunpack.c.l.b16 %v1855
    %v1895 = vunpack.c.l.b16 %v1856
    %v1896 = vunpack.c.l.b16 %v1857
    %v1897 = vunpack.c.l.b16 %v1858
    %v1898 = vunpack.c.l.b16 %v1859
    %v1899 = vunpack.c.l.b16 %v1860
    %v1900 = vunpack.c.l.b16 %v1861
    %v1901 = vunpack.c.l.b16 %v1862
    %v1902 = vunpack.c.l.b16 %v1863
    %v1903 = vunpack.c.l.b16 %v1864
    %v1904 = vunpack.c.l.b16 %v1865
    %v1905 = vunpack.c.l.b16 %v1866
    %v1906 = vpack.c.b16 %v1891, %v1890
    %v1907 = vpack.c.b16 %v1893, %v1892
    %v1908 = vpack.c.b16 %v1895, %v1894
    %v1909 = vpack.c.b16 %v1897, %v1896
    %v1910 = vpack.c.b16 %v1899, %v1898
    %v1911 = vpack.c.b16 %v1901, %v1900
    %v1912 = vpack.c.b16 %v1903, %v1902
    %v1913 = vpack.c.b16 %v1905, %v1904
    %1922 = vmatprep.subr.bf16.mxu0 0
    %1923 = vmatpush1.bf16.msra.mxu0 %v1913
    %1924 = vmatprep.subr.bf16.mxu0 0
    %1925 = vmatpush1.bf16.msra.mxu0 %v1912
    %1926 = vmatprep.subr.bf16.mxu0 0
    %1927 = vmatpush1.bf16.msra.mxu0 %v1911
    %1928 = vmatprep.subr.bf16.mxu0 0
    %1929 = vmatpush1.bf16.msra.mxu0 %v1910
    %1930 = vmatprep.subr.bf16.mxu0 0
    %1931 = vmatpush1.bf16.msra.mxu0 %v1909
    %1932 = vmatprep.subr.bf16.mxu0 0
    %1933 = vmatpush1.bf16.msra.mxu0 %v1908
    %1934 = vmatprep.subr.bf16.mxu0 0
    %1935 = vmatpush1.bf16.msra.mxu0 %v1907
    %1936 = vmatprep.subr.bf16.mxu0 0
    %1937 = vmatpush1.bf16.msra.mxu0 %v1906
    %1938 = vmatprep.subr.bf16.mxu0 0
    %1939 = vmatpush2.bf16.msra.mxu0 0
    %1940 = vmatprep.subr.bf16.mxu0 0
    %1941 = vmatpush2.bf16.msra.mxu0 0
    %1942 = vmatprep.subr.bf16.mxu0 0
    %1943 = vmatpush2.bf16.msra.mxu0 0
    %1944 = vmatprep.subr.bf16.mxu0 0
    %1945 = vmatpush2.bf16.msra.mxu0 0
    %1946 = vmatprep.subr.bf16.mxu0 0
    %1947 = vmatpush2.bf16.msra.mxu0 0
    %1948 = vmatprep.subr.bf16.mxu0 0
    %1949 = vmatpush2.bf16.msra.mxu0 0
    %1950 = vmatprep.subr.bf16.mxu0 0
    %1951 = vmatpush2.bf16.msra.mxu0 0
    %1952 = vmatprep.subr.bf16.mxu0 0
    %1953 = vmatpush2.bf16.msra.mxu0 0
    %1954 = vmatprep.mubr.bf16.mxu0 0
    %1955 = vmatmul.mubr.bf16.gmra.mxu0 %v1850
    %v1956 = vpop.f32.mrf.mxu0
    %v1957 = vadd.f32 %v1872, %v1956
    %v1958 = vpop.f32.mrf.mxu0
    %v1959 = vpop.f32.mrf.mxu0
    %v1960 = vpop.f32.mrf.mxu0
    %1961 = vdwg.mxu0
    %1962 = vst [vmem:[#allocation16] sm:$0xff] %v1957
    // Predicated region
    $region94: #{tpu_custom_call.1} parent=1 // pred_check
      _
    $region95: #{tpu_custom_call.1} parent=1 // pred_check_branch
      %1964 = sbr.rel (0) target = $region97
    $region96: #{tpu_custom_call.1} parent=1 // pred_region
      %s1966 = ssub.s32 128, 128
      %1967 = vsyncadd [#allocation4], %s1966
      %s1969 = sshll.u32 [#allocation16], 4
      %s1970 = int_to_ptr.vmem [resolvable:$true] %s1969
      %1972 = dma.vmem_to_hbm [thread:$0]  %s1970, 128, %s15, [#allocation4]
    $region97: #{tpu_custom_call.1} parent=1 // pred_fallthru
      _
    // Predicated region
    $region98: #{tpu_custom_call.1} parent=1 // pred_check
      _
    $region99: #{tpu_custom_call.1} parent=1 // pred_check_branch
      %1974 = sbr.rel (0) target = $region101
    $region100: #{tpu_custom_call.1} parent=1 // pred_region
      %1975 = dma.done [#allocation4], 128
    $region101: #{tpu_custom_call.1} parent=1 // pred_fallthru
      _
    %1976 = vsyncpa [#allocation3], 1
    %1977 = vsyncpa [#allocation6], 1
    %1978 = vsyncpa [#allocation9], 1
    %1979 = vsyncpa [#allocation12], 1
    %1980 = vsyncpa [#allocation15], 1
    %1981 = vsyncpa [#allocation4], 1

// kernel: tpu_custom_call.1
$region0: #{tpu_custom_call.1}
  #allocation0 [shape = 'u32[]', space=smem, size = 0x4, offset = 0x4, fixed_abs, tag = 'smem constant byte address 0x4 - core index']
  #allocation1 [shape = 'u32[144,128]{1,0:T(1,128)}', space=vmem, size = 0x12000, scoped, tag = 'internal scratch']
  %s0 = inlined_call_operand.vmem [shape: f32[8,8,32], index: 0, kind: input, shape index: {}]
  %s1 = inlined_call_operand.hbm [shape: f32[8,64], index: 1, kind: input, shape index: {}]
  %s2 = inlined_call_operand.hbm [shape: bf16[32,128], index: 2, kind: input, shape index: {}]
  %s3 = inlined_call_operand.hbm [shape: bf16[32,128], index: 3, kind: input, shape index: {}]
  %s4 = inlined_call_operand.hbm [shape: f32[1,128], index: 4, kind: input, shape index: {}]
  %s5 = inlined_call_operand.hbm [shape: bf16[64,128], index: 5, kind: input, shape index: {}]
  %s6 = inlined_call_operand.hbm [shape: f32[1,128], index: 6, kind: input, shape index: {}]
  %s7 = inlined_call_operand.vmem [shape: bf16[128,32], index: 7, kind: input, shape index: {}]
  %s8 = inlined_call_operand.hbm [shape: f32[1,32], index: 8, kind: input, shape index: {}]
  %s9 = inlined_call_operand.vmem [shape: bf16[64,32], index: 9, kind: input, shape index: {}]
  %s10 = inlined_call_operand.vmem [shape: f32[1,32], index: 10, kind: input, shape index: {}]
  %s11 = inlined_call_operand.hbm [shape: bf16[32,128], index: 11, kind: input, shape index: {}]
  %s12 = inlined_call_operand.vmem [shape: f32[1,128], index: 12, kind: input, shape index: {}]
  %s13 = inlined_call_operand.vmem [shape: bf16[128,128], index: 13, kind: input, shape index: {}]
  %s14 = inlined_call_operand.vmem [shape: f32[1,128], index: 14, kind: input, shape index: {}]
  %s15 = inlined_call_operand.hbm [shape: f32[8,128], index: 15, kind: output, shape index: {}]
  %s16 = sld [smem:[#allocation0]]
  $region102: #{tpu_custom_call.1} parent=0
    _
  %s18 = ssub.s32 1, %s16
  %s19 = scalar_select 0, %s18, %s16
  $region1: #{tpu_custom_call.1} parent=0
    #allocation2 [shape = 'u8[4096]{0}', space=vmem, size = 0x1000, scoped, tag = 'input window, operand 1, single buffered']
    #allocation3 [shape = 's32[1]{0}', space=sflag, size = 0x4, scoped, tag = 'scoped memory for tpu_custom_call.1']
    #allocation4 [shape = 's32[1]{0}', space=sflag, size = 0x4, scoped, tag = 'scoped memory for tpu_custom_call.1']
    #allocation5 [shape = 'u8[8192]{0}', space=vmem, size = 0x2000, scoped, tag = 'input window, operand 2, single buffered']
    #allocation6 [shape = 's32[1]{0}', space=sflag, size = 0x4, scoped, tag = 'scoped memory for tpu_custom_call.1']
    #allocation7 [shape = 'u8[8192]{0}', space=vmem, size = 0x2000, scoped, tag = 'input window, operand 3, single buffered']
    #allocation8 [shape = 'u8[512]{0}', space=vmem, size = 0x400, scoped, tag = 'input window, operand 4, single buffered']
    #allocation9 [shape = 's32[1]{0}', space=sflag, size = 0x4, scoped, tag = 'scoped memory for tpu_custom_call.1']
    #allocation10 [shape = 'u8[16384]{0}', space=vmem, size = 0x4000, scoped, tag = 'input window, operand 5, single buffered']
    #allocation11 [shape = 'u8[512]{0}', space=vmem, size = 0x400, scoped, tag = 'input window, operand 6, single buffered']
    #allocation12 [shape = 's32[1]{0}', space=sflag, size = 0x4, scoped, tag = 'scoped memory for tpu_custom_call.1']
    #allocation13 [shape = 'u8[512]{0}', space=vmem, size = 0x400, scoped, tag = 'input window, operand 8, single buffered']
    #allocation14 [shape = 'u8[8192]{0}', space=vmem, size = 0x2000, scoped, tag = 'input window, operand 11, single buffered']
    #allocation15 [shape = 's32[1]{0}', space=sflag, size = 0x4, scoped, tag = 'scoped memory for tpu_custom_call.1']
    #allocation16 [shape = 'u8[4096]{0}', space=vmem, size = 0x1000, scoped, tag = 'output window, operand 0, single buffered']
    %20 = vsyncpa [#allocation3], 0
    %21 = vsyncpa [#allocation6], 0
    %22 = vsyncpa [#allocation9], 0
    %23 = vsyncpa [#allocation12], 0
    %24 = vsyncpa [#allocation15], 0
    %25 = vsyncpa [#allocation4], 0
    // Predicated region
    $region2: #{tpu_custom_call.1} parent=1 // pred_check
      _
    $region3: #{tpu_custom_call.1} parent=1 // pred_check_branch
      %27 = sbr.rel (0) target = $region5
    $region4: #{tpu_custom_call.1} parent=1 // pred_region
      _
    $region5: #{tpu_custom_call.1} parent=1 // pred_fallthru
      _
    // Predicated region
    $region6: #{tpu_custom_call.1} parent=1 // pred_check
      _
    $region7: #{tpu_custom_call.1} parent=1 // pred_check_branch
      %29 = sbr.rel (0) target = $region9
    $region8: #{tpu_custom_call.1} parent=1 // pred_region
      %s31 = ssub.s32 128, 128
      %32 = vsyncadd [#allocation3], %s31
      %s34 = sshll.u32 [#allocation2], 4
      %s35 = int_to_ptr.vmem [resolvable:$true] %s34
      %37 = dma.hbm_to_vmem [thread:$0]  %s1, 128, %s35, [#allocation3]
    $region9: #{tpu_custom_call.1} parent=1 // pred_fallthru
      _
    // Predicated region
    $region10: #{tpu_custom_call.1} parent=1 // pred_check
      _
    $region11: #{tpu_custom_call.1} parent=1 // pred_check_branch
      %39 = sbr.rel (0) target = $region13
    $region12: #{tpu_custom_call.1} parent=1 // pred_region
      %s41 = ssub.s32 256, 256
      %42 = vsyncadd [#allocation6], %s41
      %s43 = sshll.u32 [#allocation5], 4
      %s44 = int_to_ptr.vmem [resolvable:$true] %s43
      %49 = dma.hbm_to_vmem [thread:$0]  %s2, 256, %s44, [#allocation6], 64, 64, 4
    $region13: #{tpu_custom_call.1} parent=1 // pred_fallthru
      _
    // Predicated region
    $region14: #{tpu_custom_call.1} parent=1 // pred_check
      _
    $region15: #{tpu_custom_call.1} parent=1 // pred_check_branch
      %51 = sbr.rel (0) target = $region17
    $region16: #{tpu_custom_call.1} parent=1 // pred_region
      %s53 = ssub.s32 256, 256
      %54 = vsyncadd [#allocation6], %s53
      %s55 = sshll.u32 [#allocation7], 4
      %s56 = int_to_ptr.vmem [resolvable:$true] %s55
      %61 = dma.hbm_to_vmem [thread:$0]  %s3, 256, %s56, [#allocation6], 64, 64, 4
    $region17: #{tpu_custom_call.1} parent=1 // pred_fallthru
      _
    // Predicated region
    $region18: #{tpu_custom_call.1} parent=1 // pred_check
      _
    $region19: #{tpu_custom_call.1} parent=1 // pred_check_branch
      %63 = sbr.rel (0) target = $region21
    $region20: #{tpu_custom_call.1} parent=1 // pred_region
      %s65 = ssub.s32 16, 16
      %66 = vsyncadd [#allocation9], %s65
      %s68 = sshll.u32 [#allocation8], 4
      %s69 = int_to_ptr.vmem [resolvable:$true] %s68
      %71 = dma.hbm_to_vmem [thread:$0]  %s4, 16, %s69, [#allocation9]
    $region21: #{tpu_custom_call.1} parent=1 // pred_fallthru
      _
    // Predicated region
    $region22: #{tpu_custom_call.1} parent=1 // pred_check
      _
    $region23: #{tpu_custom_call.1} parent=1 // pred_check_branch
      %73 = sbr.rel (0) target = $region25
    $region24: #{tpu_custom_call.1} parent=1 // pred_region
      %s75 = ssub.s32 512, 512
      %76 = vsyncadd [#allocation9], %s75
      %s77 = sshll.u32 [#allocation10], 4
      %s78 = int_to_ptr.vmem [resolvable:$true] %s77
      %83 = dma.hbm_to_vmem [thread:$0]  %s5, 512, %s78, [#allocation9], 64, 64, 4
    $region25: #{tpu_custom_call.1} parent=1 // pred_fallthru
      _
    // Predicated region
    $region26: #{tpu_custom_call.1} parent=1 // pred_check
      _
    $region27: #{tpu_custom_call.1} parent=1 // pred_check_branch
      %85 = sbr.rel (0) target = $region29
    $region28: #{tpu_custom_call.1} parent=1 // pred_region
      %s87 = ssub.s32 16, 16
      %88 = vsyncadd [#allocation12], %s87
      %s90 = sshll.u32 [#allocation11], 4
      %s91 = int_to_ptr.vmem [resolvable:$true] %s90
      %93 = dma.hbm_to_vmem [thread:$0]  %s6, 16, %s91, [#allocation12]
    $region29: #{tpu_custom_call.1} parent=1 // pred_fallthru
      _
    // Predicated region
    $region30: #{tpu_custom_call.1} parent=1 // pred_check
      _
    $region31: #{tpu_custom_call.1} parent=1 // pred_check_branch
      %95 = sbr.rel (0) target = $region33
    $region32: #{tpu_custom_call.1} parent=1 // pred_region
      _
    $region33: #{tpu_custom_call.1} parent=1 // pred_fallthru
      _
    // Predicated region
    $region34: #{tpu_custom_call.1} parent=1 // pred_check
      _
    $region35: #{tpu_custom_call.1} parent=1 // pred_check_branch
      %97 = sbr.rel (0) target = $region37
    $region36: #{tpu_custom_call.1} parent=1 // pred_region
      %s99 = ssub.s32 16, 16
      %100 = vsyncadd [#allocation12], %s99
      %s102 = sshll.u32 [#allocation13], 4
      %s103 = int_to_ptr.vmem [resolvable:$true] %s102
      %105 = dma.hbm_to_vmem [thread:$0]  %s8, 16, %s103, [#allocation12]
    $region37: #{tpu_custom_call.1} parent=1 // pred_fallthru
      _
    // Predicated region
    $region38: #{tpu_custom_call.1} parent=1 // pred_check
      _
    $region39: #{tpu_custom_call.1} parent=1 // pred_check_branch
      %107 = sbr.rel (0) target = $region41
    $region40: #{tpu_custom_call.1} parent=1 // pred_region
      _
    $region41: #{tpu_custom_call.1} parent=1 // pred_fallthru
      _
    // Predicated region
    $region42: #{tpu_custom_call.1} parent=1 // pred_check
      _
    $region43: #{tpu_custom_call.1} parent=1 // pred_check_branch
      %109 = sbr.rel (0) target = $region45
    $region44: #{tpu_custom_call.1} parent=1 // pred_region
      _
    $region45: #{tpu_custom_call.1} parent=1 // pred_fallthru
      _
    // Predicated region
    $region46: #{tpu_custom_call.1} parent=1 // pred_check
      _
    $region47: #{tpu_custom_call.1} parent=1 // pred_check_branch
      %111 = sbr.rel (0) target = $region49
    $region48: #{tpu_custom_call.1} parent=1 // pred_region
      %s113 = ssub.s32 256, 256
      %114 = vsyncadd [#allocation15], %s113
      %s115 = sshll.u32 [#allocation14], 4
      %s116 = int_to_ptr.vmem [resolvable:$true] %s115
      %121 = dma.hbm_to_vmem [thread:$0]  %s11, 256, %s116, [#allocation15], 64, 64, 4
    $region49: #{tpu_custom_call.1} parent=1 // pred_fallthru
      _
    // Predicated region
    $region50: #{tpu_custom_call.1} parent=1 // pred_check
      _
    $region51: #{tpu_custom_call.1} parent=1 // pred_check_branch
      %123 = sbr.rel (0) target = $region53
    $region52: #{tpu_custom_call.1} parent=1 // pred_region
      _
    $region53: #{tpu_custom_call.1} parent=1 // pred_fallthru
      _
    // Predicated region
    $region54: #{tpu_custom_call.1} parent=1 // pred_check
      _
    $region55: #{tpu_custom_call.1} parent=1 // pred_check_branch
      %125 = sbr.rel (0) target = $region57
    $region56: #{tpu_custom_call.1} parent=1 // pred_region
      _
    $region57: #{tpu_custom_call.1} parent=1 // pred_fallthru
      _
    // Predicated region
    $region58: #{tpu_custom_call.1} parent=1 // pred_check
      _
    $region59: #{tpu_custom_call.1} parent=1 // pred_check_branch
      %127 = sbr.rel (0) target = $region61
    $region60: #{tpu_custom_call.1} parent=1 // pred_region
      _
    $region61: #{tpu_custom_call.1} parent=1 // pred_fallthru
      _
    // Predicated region
    $region62: #{tpu_custom_call.1} parent=1 // pred_check
      _
    $region63: #{tpu_custom_call.1} parent=1 // pred_check_branch
      %129 = sbr.rel (0) target = $region65
    $region64: #{tpu_custom_call.1} parent=1 // pred_region
      %130 = dma.done [#allocation3], 128
    $region65: #{tpu_custom_call.1} parent=1 // pred_fallthru
      _
    // Predicated region
    $region66: #{tpu_custom_call.1} parent=1 // pred_check
      _
    $region67: #{tpu_custom_call.1} parent=1 // pred_check_branch
      %132 = sbr.rel (0) target = $region69
    $region68: #{tpu_custom_call.1} parent=1 // pred_region
      %133 = dma.done [#allocation6], 256
    $region69: #{tpu_custom_call.1} parent=1 // pred_fallthru
      _
    // Predicated region
    $region70: #{tpu_custom_call.1} parent=1 // pred_check
      _
    $region71: #{tpu_custom_call.1} parent=1 // pred_check_branch
      %135 = sbr.rel (0) target = $region73
    $region72: #{tpu_custom_call.1} parent=1 // pred_region
      %136 = dma.done [#allocation6], 256
    $region73: #{tpu_custom_call.1} parent=1 // pred_fallthru
      _
    // Predicated region
    $region74: #{tpu_custom_call.1} parent=1 // pred_check
      _
    $region75: #{tpu_custom_call.1} parent=1 // pred_check_branch
      %138 = sbr.rel (0) target = $region77
    $region76: #{tpu_custom_call.1} parent=1 // pred_region
      %139 = dma.done [#allocation9], 16
    $region77: #{tpu_custom_call.1} parent=1 // pred_fallthru
      _
    // Predicated region
    $region78: #{tpu_custom_call.1} parent=1 // pred_check
      _
    $region79: #{tpu_custom_call.1} parent=1 // pred_check_branch
      %141 = sbr.rel (0) target = $region81
    $region80: #{tpu_custom_call.1} parent=1 // pred_region
      %142 = dma.done [#allocation9], 512
    $region81: #{tpu_custom_call.1} parent=1 // pred_fallthru
      _
    // Predicated region
    $region82: #{tpu_custom_call.1} parent=1 // pred_check
      _
    $region83: #{tpu_custom_call.1} parent=1 // pred_check_branch
      %144 = sbr.rel (0) target = $region85
    $region84: #{tpu_custom_call.1} parent=1 // pred_region
      %145 = dma.done [#allocation12], 16
    $region85: #{tpu_custom_call.1} parent=1 // pred_fallthru
      _
    // Predicated region
    $region86: #{tpu_custom_call.1} parent=1 // pred_check
      _
    $region87: #{tpu_custom_call.1} parent=1 // pred_check_branch
      %147 = sbr.rel (0) target = $region89
    $region88: #{tpu_custom_call.1} parent=1 // pred_region
      %148 = dma.done [#allocation12], 16
    $region89: #{tpu_custom_call.1} parent=1 // pred_fallthru
      _
    // Predicated region
    $region90: #{tpu_custom_call.1} parent=1 // pred_check
      _
    $region91: #{tpu_custom_call.1} parent=1 // pred_check_branch
      %150 = sbr.rel (0) target = $region93
    $region92: #{tpu_custom_call.1} parent=1 // pred_region
      %151 = dma.done [#allocation15], 256
    $region93: #{tpu_custom_call.1} parent=1 // pred_fallthru
      _
    %v153 = vld [vmem:[%s0] sm:$0xff]
    %v154 = vld [vmem:[%s0 + $0x8] sm:$0xff]
    %v155 = vld [vmem:[%s0 + $0x10] sm:$0xff]
    %v156 = vld [vmem:[%s0 + $0x18] sm:$0xff]
    %v157 = vld [vmem:[%s0 + $0x20] sm:$0xff]
    %v158 = vld [vmem:[%s0 + $0x28] sm:$0xff]
    %v159 = vld [vmem:[%s0 + $0x30] sm:$0xff]
    %v160 = vld [vmem:[%s0 + $0x38] sm:$0xff]
    %v161 = vtanh.pop %v153
    %v162 = vtanh.pop %v154
    %v163 = vtanh.pop %v155
    %v164 = vtanh.pop %v156
    %v165 = vtanh.pop %v157
    %v166 = vtanh.pop %v158
    %v167 = vtanh.pop %v159
    %v168 = vtanh.pop %v160
    %v169 = vpack.c.bf16 %v162, %v161
    %v170 = vpack.c.bf16 %v164, %v163
    %v171 = vpack.c.bf16 %v166, %v165
    %v172 = vpack.c.bf16 %v168, %v167
    %v173 = vld [vmem:[#allocation5] sm:$0xf]
    %v174 = vld [vmem:[#allocation5 + $0x4] sm:$0xf]
    %v175 = vld [vmem:[#allocation5 + $0x8] sm:$0xf]
    %v176 = vld [vmem:[#allocation5 + $0xc] sm:$0xf]
    %v181 = vunpack.c.l.b16 %v173
    %v182 = vunpack.c.l.b16 %v174
    %v183 = vunpack.c.l.b16 %v175
    %v184 = vunpack.c.l.b16 %v176
    %v185 = vpack.c.b16 %v182, %v181
    %v186 = vpack.c.b16 %v184, %v183
    %vm189 = vcmask 261120
    %v191 = vsel %vm189, %v169, 0
    %v194 = vsel %vm189, %v170, 0
    %v197 = vsel %vm189, %v171, 0
    %v200 = vsel %vm189, %v172, 0
    %202 = vmatprep.subr.bf16.mxu0 0
    %203 = vmatpush1.bf16.msra.mxu0 0
    %204 = vmatprep.subr.bf16.mxu0 0
    %205 = vmatpush1.bf16.msra.mxu0 0
    %206 = vmatprep.subr.bf16.mxu0 0
    %207 = vmatpush1.bf16.msra.mxu0 0
    %208 = vmatprep.subr.bf16.mxu0 0
    %209 = vmatpush1.bf16.msra.mxu0 0
    %210 = vmatprep.subr.bf16.mxu0 0
    %211 = vmatpush1.bf16.msra.mxu0 0
    %212 = vmatprep.subr.bf16.mxu0 0
    %213 = vmatpush1.bf16.msra.mxu0 0
    %214 = vmatprep.subr.bf16.mxu0 0
    %215 = vmatpush1.bf16.msra.mxu0 %v186
    %216 = vmatprep.subr.bf16.mxu0 0
    %217 = vmatpush1.bf16.msra.mxu0 %v185
    %218 = vmatprep.subr.bf16.mxu0 0
    %219 = vmatpush2.bf16.msra.mxu0 0
    %220 = vmatprep.subr.bf16.mxu0 0
    %221 = vmatpush2.bf16.msra.mxu0 0
    %222 = vmatprep.subr.bf16.mxu0 0
    %223 = vmatpush2.bf16.msra.mxu0 0
    %224 = vmatprep.subr.bf16.mxu0 0
    %225 = vmatpush2.bf16.msra.mxu0 0
    %226 = vmatprep.subr.bf16.mxu0 0
    %227 = vmatpush2.bf16.msra.mxu0 0
    %228 = vmatprep.subr.bf16.mxu0 0
    %229 = vmatpush2.bf16.msra.mxu0 0
    %230 = vmatprep.subr.bf16.mxu0 0
    %231 = vmatpush2.bf16.msra.mxu0 0
    %232 = vmatprep.subr.bf16.mxu0 0
    %233 = vmatpush2.bf16.msra.mxu0 0
    %234 = vmatprep.mubr.bf16.mxu0 0
    %235 = vmatmul.mubr.bf16.gmra.mxu0 %v191
    %v236 = vpop.f32.mrf.mxu0
    %v237 = vadd.f32 0.0, %v236
    %v238 = vpop.f32.mrf.mxu0
    %v239 = vpop.f32.mrf.mxu0
    %v240 = vadd.f32 0.0, %v239
    %v241 = vpop.f32.mrf.mxu0
    %242 = vmatprep.mubr.bf16.mxu0 0
    %243 = vmatmul.mubr.bf16.gmra.mxu0 %v194
    %v244 = vpop.f32.mrf.mxu0
    %v245 = vadd.f32 0.0, %v244
    %v246 = vpop.f32.mrf.mxu0
    %v247 = vpop.f32.mrf.mxu0
    %v248 = vadd.f32 0.0, %v247
    %v249 = vpop.f32.mrf.mxu0
    %250 = vmatprep.mubr.bf16.mxu0 0
    %251 = vmatmul.mubr.bf16.gmra.mxu0 %v197
    %v252 = vpop.f32.mrf.mxu0
    %v253 = vadd.f32 0.0, %v252
    %v254 = vpop.f32.mrf.mxu0
    %v255 = vpop.f32.mrf.mxu0
    %v256 = vadd.f32 0.0, %v255
    %v257 = vpop.f32.mrf.mxu0
    %258 = vmatprep.mubr.bf16.mxu0 0
    %259 = vmatmul.mubr.bf16.gmra.mxu0 %v200
    %v260 = vpop.f32.mrf.mxu0
    %v261 = vadd.f32 0.0, %v260
    %v262 = vpop.f32.mrf.mxu0
    %v263 = vpop.f32.mrf.mxu0
    %v264 = vadd.f32 0.0, %v263
    %v265 = vpop.f32.mrf.mxu0
    %266 = vdwg.mxu0
    %v267 = vpack.c.bf16 %v240, %v237
    %v268 = vpack.c.bf16 %v248, %v245
    %v269 = vpack.c.bf16 %v256, %v253
    %v270 = vpack.c.bf16 %v264, %v261
    %v271 = vld [vmem:[#allocation7] sm:$0xf]
    %v272 = vld [vmem:[#allocation7 + $0x4] sm:$0xf]
    %v273 = vld [vmem:[#allocation7 + $0x8] sm:$0xf]
    %v274 = vld [vmem:[#allocation7 + $0xc] sm:$0xf]
    %v275 = vld [vmem:[#allocation10] sm:$0xf]
    %v276 = vld [vmem:[#allocation10 + $0x4] sm:$0xf]
    %v277 = vld [vmem:[#allocation10 + $0x8] sm:$0xf]
    %v278 = vld [vmem:[#allocation10 + $0xc] sm:$0xf]
    %v279 = vld [vmem:[#allocation10 + $0x10] sm:$0xf]
    %v280 = vld [vmem:[#allocation10 + $0x14] sm:$0xf]
    %v281 = vld [vmem:[#allocation10 + $0x18] sm:$0xf]
    %v282 = vld [vmem:[#allocation10 + $0x1c] sm:$0xf]
    %v283 = vld [vmem:[#allocation8] sm:$0x1]
    %v285 = vlaneseq
    %v286 = vshrl.u32 %v285, 7
    %v287 = vsub.s32 0, %v286
    %v288 = vrot.slane %v283, %v287
    %v290 = vld [vmem:[#allocation11] sm:$0x1]
    %v292 = vlaneseq
    %v293 = vshrl.u32 %v292, 7
    %v294 = vsub.s32 0, %v293
    %v295 = vrot.slane %v290, %v294
    %v297 = vlaneseq
    %v298 = vand.u32 %v297, 127
    %vm299 = vcmp.ge.s32.totalorder %v298, 64
    %vm300 = vcmp.lt.s32.totalorder %v298, 96
    %vm301 = vmand %vm299, %vm300
    %v302 = vunpack.c.l.bf16 %v267
    %v303 = vadd.f32 %v302, %v288
    %v308 = vunpack.c.l.b16 %v271
    %v309 = vunpack.c.l.b16 %v272
    %v310 = vunpack.c.l.b16 %v273
    %v311 = vunpack.c.l.b16 %v274
    %v312 = vpack.c.b16 %v309, %v308
    %v313 = vpack.c.b16 %v311, %v310
    %v317 = vsel %vm189, 0, 0
    %319 = vmatprep.subr.bf16.mxu0 0
    %320 = vmatpush1.bf16.msra.mxu0 0
    %321 = vmatprep.subr.bf16.mxu0 0
    %322 = vmatpush1.bf16.msra.mxu0 0
    %323 = vmatprep.subr.bf16.mxu0 0
    %324 = vmatpush1.bf16.msra.mxu0 0
    %325 = vmatprep.subr.bf16.mxu0 0
    %326 = vmatpush1.bf16.msra.mxu0 0
    %327 = vmatprep.subr.bf16.mxu0 0
    %328 = vmatpush1.bf16.msra.mxu0 0
    %329 = vmatprep.subr.bf16.mxu0 0
    %330 = vmatpush1.bf16.msra.mxu0 0
    %331 = vmatprep.subr.bf16.mxu0 0
    %332 = vmatpush1.bf16.msra.mxu0 %v313
    %333 = vmatprep.subr.bf16.mxu0 0
    %334 = vmatpush1.bf16.msra.mxu0 %v312
    %335 = vmatprep.subr.bf16.mxu0 0
    %336 = vmatpush2.bf16.msra.mxu0 0
    %337 = vmatprep.subr.bf16.mxu0 0
    %338 = vmatpush2.bf16.msra.mxu0 0
    %339 = vmatprep.subr.bf16.mxu0 0
    %340 = vmatpush2.bf16.msra.mxu0 0
    %341 = vmatprep.subr.bf16.mxu0 0
    %342 = vmatpush2.bf16.msra.mxu0 0
    %343 = vmatprep.subr.bf16.mxu0 0
    %344 = vmatpush2.bf16.msra.mxu0 0
    %345 = vmatprep.subr.bf16.mxu0 0
    %346 = vmatpush2.bf16.msra.mxu0 0
    %347 = vmatprep.subr.bf16.mxu0 0
    %348 = vmatpush2.bf16.msra.mxu0 0
    %349 = vmatprep.subr.bf16.mxu0 0
    %350 = vmatpush2.bf16.msra.mxu0 0
    %351 = vmatprep.mubr.bf16.mxu0 0
    %352 = vmatmul.mubr.bf16.gmra.mxu0 %v317
    %v353 = vpop.f32.mrf.mxu0
    %v354 = vadd.f32 0.0, %v353
    %v355 = vpop.f32.mrf.mxu0
    %v356 = vpop.f32.mrf.mxu0
    %v357 = vpop.f32.mrf.mxu0
    %358 = vdwg.mxu0
    %v359 = vadd.f32 %v303, %v354
    %v360 = vtanh.pop %v359
    %v361 = vxor.u32 %v359, 2147483648
    %v362 = vmul.f32 %v361, 1.442695
    %v363 = vpow.pop %v362
    %v364 = vadd.f32 %v363, 1.0
    %v365 = vrcp.pop %v364
    %v366 = vmul.f32 1.0, %v365
    %v367 = vsel %vm301, %v360, %v366
    %v368 = vmul.f32 %v367, 0.0
    %370 = vrot.lane.b32.xlu0 %v367, 64
    %v371 = vpop.permute.xlu0 %370
    %v373 = vmul.f32 %v367, %v371
    %375 = vrot.lane.b32.xlu0 %v373, 32
    %v376 = vpop.permute.xlu0 %375
    %v378 = vadd.f32 %v368, %v376
    %v379 = vtanh.pop %v378
    %381 = vrot.lane.b32.xlu0 %v379, 64
    %v382 = vpop.permute.xlu0 %381
    %v384 = vmul.f32 %v367, %v382
    %386 = vrot.lane.b32.xlu0 %v384, 32
    %v387 = vpop.permute.xlu0 %386
    %v389 = vsel %vm189, %v387, 0.0
    %v390 = vpack.c.bf16 %v389, %v389
    %v399 = vunpack.c.l.b16 %v275
    %v400 = vunpack.c.l.b16 %v276
    %v401 = vunpack.c.l.b16 %v277
    %v402 = vunpack.c.l.b16 %v278
    %v403 = vunpack.c.l.b16 %v279
    %v404 = vunpack.c.l.b16 %v280
    %v405 = vunpack.c.l.b16 %v281
    %v406 = vunpack.c.l.b16 %v282
    %v407 = vpack.c.b16 %v400, %v399
    %v408 = vpack.c.b16 %v402, %v401
    %v409 = vpack.c.b16 %v404, %v403
    %v410 = vpack.c.b16 %v406, %v405
    %vm415 = vcmask 523264
    %v417 = vsel %vm415, %v390, 0
    %419 = vmatprep.subr.bf16.mxu0 0
    %420 = vmatpush1.bf16.msra.mxu0 0
    %421 = vmatprep.subr.bf16.mxu0 0
    %422 = vmatpush1.bf16.msra.mxu0 0
    %423 = vmatprep.subr.bf16.mxu0 0
    %424 = vmatpush1.bf16.msra.mxu0 0
    %425 = vmatprep.subr.bf16.mxu0 0
    %426 = vmatpush1.bf16.msra.mxu0 0
    %427 = vmatprep.subr.bf16.mxu0 0
    %428 = vmatpush1.bf16.msra.mxu0 %v410
    %429 = vmatprep.subr.bf16.mxu0 0
    %430 = vmatpush1.bf16.msra.mxu0 %v409
    %431 = vmatprep.subr.bf16.mxu0 0
    %432 = vmatpush1.bf16.msra.mxu0 %v408
    %433 = vmatprep.subr.bf16.mxu0 0
    %434 = vmatpush1.bf16.msra.mxu0 %v407
    %435 = vmatprep.subr.bf16.mxu0 0
    %436 = vmatpush2.bf16.msra.mxu0 0
    %437 = vmatprep.subr.bf16.mxu0 0
    %438 = vmatpush2.bf16.msra.mxu0 0
    %439 = vmatprep.subr.bf16.mxu0 0
    %440 = vmatpush2.bf16.msra.mxu0 0
    %441 = vmatprep.subr.bf16.mxu0 0
    %442 = vmatpush2.bf16.msra.mxu0 0
    %443 = vmatprep.subr.bf16.mxu0 0
    %444 = vmatpush2.bf16.msra.mxu0 0
    %445 = vmatprep.subr.bf16.mxu0 0
    %446 = vmatpush2.bf16.msra.mxu0 0
    %447 = vmatprep.subr.bf16.mxu0 0
    %448 = vmatpush2.bf16.msra.mxu0 0
    %449 = vmatprep.subr.bf16.mxu0 0
    %450 = vmatpush2.bf16.msra.mxu0 0
    %451 = vmatprep.mubr.bf16.mxu0 0
    %452 = vmatmul.mubr.bf16.gmra.mxu0 %v417
    %v453 = vpop.f32.mrf.mxu0
    %v454 = vadd.f32 %v295, %v453
    %v455 = vpop.f32.mrf.mxu0
    %v456 = vpop.f32.mrf.mxu0
    %v457 = vpop.f32.mrf.mxu0
    %458 = vdwg.mxu0
    %v459 = vtanh.pop %v454
    %v460 = vxor.u32 %v454, 2147483648
    %v461 = vmul.f32 %v460, 1.442695
    %v462 = vpow.pop %v461
    %v463 = vadd.f32 %v462, 1.0
    %v464 = vrcp.pop %v463
    %v465 = vmul.f32 1.0, %v464
    %v466 = vsel %vm301, %v459, %v465
    %v467 = vmul.f32 %v466, 0.0
    %469 = vrot.lane.b32.xlu0 %v466, 64
    %v470 = vpop.permute.xlu0 %469
    %v472 = vmul.f32 %v466, %v470
    %474 = vrot.lane.b32.xlu0 %v472, 32
    %v475 = vpop.permute.xlu0 %474
    %v477 = vadd.f32 %v467, %v475
    %v478 = vtanh.pop %v477
    %480 = vrot.lane.b32.xlu0 %v478, 64
    %v481 = vpop.permute.xlu0 %480
    %v483 = vmul.f32 %v466, %v481
    %v485 = vrot.slane %v267, 4
    %v487 = vunpack.c.l.bf16 %v485
    %v488 = vadd.f32 %v487, %v288
    %v489 = vpack.c.bf16 %v384, %v384
    %491 = vrot.lane.b32.xlu0 %v489, 32
    %v492 = vpop.permute.xlu0 %491
    %v494 = vsel %vm189, %v492, 0
    %496 = vmatprep.subr.bf16.mxu0 0
    %497 = vmatpush1.bf16.msra.mxu0 0
    %498 = vmatprep.subr.bf16.mxu0 0
    %499 = vmatpush1.bf16.msra.mxu0 0
    %500 = vmatprep.subr.bf16.mxu0 0
    %501 = vmatpush1.bf16.msra.mxu0 0
    %502 = vmatprep.subr.bf16.mxu0 0
    %503 = vmatpush1.bf16.msra.mxu0 0
    %504 = vmatprep.subr.bf16.mxu0 0
    %505 = vmatpush1.bf16.msra.mxu0 0
    %506 = vmatprep.subr.bf16.mxu0 0
    %507 = vmatpush1.bf16.msra.mxu0 0
    %508 = vmatprep.subr.bf16.mxu0 0
    %509 = vmatpush1.bf16.msra.mxu0 %v313
    %510 = vmatprep.subr.bf16.mxu0 0
    %511 = vmatpush1.bf16.msra.mxu0 %v312
    %512 = vmatprep.subr.bf16.mxu0 0
    %513 = vmatpush2.bf16.msra.mxu0 0
    %514 = vmatprep.subr.bf16.mxu0 0
    %515 = vmatpush2.bf16.msra.mxu0 0
    %516 = vmatprep.subr.bf16.mxu0 0
    %517 = vmatpush2.bf16.msra.mxu0 0
    %518 = vmatprep.subr.bf16.mxu0 0
    %519 = vmatpush2.bf16.msra.mxu0 0
    %520 = vmatprep.subr.bf16.mxu0 0
    %521 = vmatpush2.bf16.msra.mxu0 0
    %522 = vmatprep.subr.bf16.mxu0 0
    %523 = vmatpush2.bf16.msra.mxu0 0
    %524 = vmatprep.subr.bf16.mxu0 0
    %525 = vmatpush2.bf16.msra.mxu0 0
    %526 = vmatprep.subr.bf16.mxu0 0
    %527 = vmatpush2.bf16.msra.mxu0 0
    %528 = vmatprep.mubr.bf16.mxu0 0
    %529 = vmatmul.mubr.bf16.gmra.mxu0 %v494
    %v530 = vpop.f32.mrf.mxu0
    %v531 = vadd.f32 0.0, %v530
    %v532 = vpop.f32.mrf.mxu0
    %v533 = vpop.f32.mrf.mxu0
    %v534 = vpop.f32.mrf.mxu0
    %535 = vdwg.mxu0
    %v536 = vadd.f32 %v488, %v531
    %v537 = vtanh.pop %v536
    %v538 = vxor.u32 %v536, 2147483648
    %v539 = vmul.f32 %v538, 1.442695
    %v540 = vpow.pop %v539
    %v541 = vadd.f32 %v540, 1.0
    %v542 = vrcp.pop %v541
    %v543 = vmul.f32 1.0, %v542
    %v544 = vsel %vm301, %v537, %v543
    %v545 = vmul.f32 %v544, %v378
    %547 = vrot.lane.b32.xlu0 %v544, 64
    %v548 = vpop.permute.xlu0 %547
    %v550 = vmul.f32 %v544, %v548
    %552 = vrot.lane.b32.xlu0 %v550, 32
    %v553 = vpop.permute.xlu0 %552
    %v555 = vadd.f32 %v545, %v553
    %v556 = vtanh.pop %v555
    %558 = vrot.lane.b32.xlu0 %v556, 64
    %v559 = vpop.permute.xlu0 %558
    %v561 = vmul.f32 %v544, %v559
    %563 = vrot.lane.b32.xlu0 %v561, 32
    %v564 = vpop.permute.xlu0 %563
    %567 = vrot.lane.b32.xlu0 %v483, 64
    %v568 = vpop.permute.xlu0 %567
    %v570 = vsel %vm189, %v564, %v568
    %v571 = vpack.c.bf16 %v570, %v570
    %v573 = vsel %vm415, %v571, 0
    %575 = vmatprep.subr.bf16.mxu0 0
    %576 = vmatpush1.bf16.msra.mxu0 0
    %577 = vmatprep.subr.bf16.mxu0 0
    %578 = vmatpush1.bf16.msra.mxu0 0
    %579 = vmatprep.subr.bf16.mxu0 0
    %580 = vmatpush1.bf16.msra.mxu0 0
    %581 = vmatprep.subr.bf16.mxu0 0
    %582 = vmatpush1.bf16.msra.mxu0 0
    %583 = vmatprep.subr.bf16.mxu0 0
    %584 = vmatpush1.bf16.msra.mxu0 %v410
    %585 = vmatprep.subr.bf16.mxu0 0
    %586 = vmatpush1.bf16.msra.mxu0 %v409
    %587 = vmatprep.subr.bf16.mxu0 0
    %588 = vmatpush1.bf16.msra.mxu0 %v408
    %589 = vmatprep.subr.bf16.mxu0 0
    %590 = vmatpush1.bf16.msra.mxu0 %v407
    %591 = vmatprep.subr.bf16.mxu0 0
    %592 = vmatpush2.bf16.msra.mxu0 0
    %593 = vmatprep.subr.bf16.mxu0 0
    %594 = vmatpush2.bf16.msra.mxu0 0
    %595 = vmatprep.subr.bf16.mxu0 0
    %596 = vmatpush2.bf16.msra.mxu0 0
    %597 = vmatprep.subr.bf16.mxu0 0
    %598 = vmatpush2.bf16.msra.mxu0 0
    %599 = vmatprep.subr.bf16.mxu0 0
    %600 = vmatpush2.bf16.msra.mxu0 0
    %601 = vmatprep.subr.bf16.mxu0 0
    %602 = vmatpush2.bf16.msra.mxu0 0
    %603 = vmatprep.subr.bf16.mxu0 0
    %604 = vmatpush2.bf16.msra.mxu0 0
    %605 = vmatprep.subr.bf16.mxu0 0
    %606 = vmatpush2.bf16.msra.mxu0 0
    %607 = vmatprep.mubr.bf16.mxu0 0
    %608 = vmatmul.mubr.bf16.gmra.mxu0 %v573
    %v609 = vpop.f32.mrf.mxu0
    %v610 = vadd.f32 %v295, %v609
    %v611 = vpop.f32.mrf.mxu0
    %v612 = vpop.f32.mrf.mxu0
    %v613 = vpop.f32.mrf.mxu0
    %614 = vdwg.mxu0
    %v615 = vtanh.pop %v610
    %v616 = vxor.u32 %v610, 2147483648
    %v617 = vmul.f32 %v616, 1.442695
    %v618 = vpow.pop %v617
    %v619 = vadd.f32 %v618, 1.0
    %v620 = vrcp.pop %v619
    %v621 = vmul.f32 1.0, %v620
    %v622 = vsel %vm301, %v615, %v621
    %v623 = vmul.f32 %v622, %v477
    %625 = vrot.lane.b32.xlu0 %v622, 64
    %v626 = vpop.permute.xlu0 %625
    %v628 = vmul.f32 %v622, %v626
    %630 = vrot.lane.b32.xlu0 %v628, 32
    %v631 = vpop.permute.xlu0 %630
    %v633 = vadd.f32 %v623, %v631
    %v634 = vtanh.pop %v633
    %636 = vrot.lane.b32.xlu0 %v634, 64
    %v637 = vpop.permute.xlu0 %636
    %v639 = vmul.f32 %v622, %v637
    %v640 = vunpack.c.l.bf16 %v268
    %v641 = vadd.f32 %v640, %v288
    %v642 = vpack.c.bf16 %v561, %v561
    %644 = vrot.lane.b32.xlu0 %v642, 32
    %v645 = vpop.permute.xlu0 %644
    %v647 = vsel %vm189, %v645, 0
    %649 = vmatprep.subr.bf16.mxu0 0
    %650 = vmatpush1.bf16.msra.mxu0 0
    %651 = vmatprep.subr.bf16.mxu0 0
    %652 = vmatpush1.bf16.msra.mxu0 0
    %653 = vmatprep.subr.bf16.mxu0 0
    %654 = vmatpush1.bf16.msra.mxu0 0
    %655 = vmatprep.subr.bf16.mxu0 0
    %656 = vmatpush1.bf16.msra.mxu0 0
    %657 = vmatprep.subr.bf16.mxu0 0
    %658 = vmatpush1.bf16.msra.mxu0 0
    %659 = vmatprep.subr.bf16.mxu0 0
    %660 = vmatpush1.bf16.msra.mxu0 0
    %661 = vmatprep.subr.bf16.mxu0 0
    %662 = vmatpush1.bf16.msra.mxu0 %v313
    %663 = vmatprep.subr.bf16.mxu0 0
    %664 = vmatpush1.bf16.msra.mxu0 %v312
    %665 = vmatprep.subr.bf16.mxu0 0
    %666 = vmatpush2.bf16.msra.mxu0 0
    %667 = vmatprep.subr.bf16.mxu0 0
    %668 = vmatpush2.bf16.msra.mxu0 0
    %669 = vmatprep.subr.bf16.mxu0 0
    %670 = vmatpush2.bf16.msra.mxu0 0
    %671 = vmatprep.subr.bf16.mxu0 0
    %672 = vmatpush2.bf16.msra.mxu0 0
    %673 = vmatprep.subr.bf16.mxu0 0
    %674 = vmatpush2.bf16.msra.mxu0 0
    %675 = vmatprep.subr.bf16.mxu0 0
    %676 = vmatpush2.bf16.msra.mxu0 0
    %677 = vmatprep.subr.bf16.mxu0 0
    %678 = vmatpush2.bf16.msra.mxu0 0
    %679 = vmatprep.subr.bf16.mxu0 0
    %680 = vmatpush2.bf16.msra.mxu0 0
    %681 = vmatprep.mubr.bf16.mxu0 0
    %682 = vmatmul.mubr.bf16.gmra.mxu0 %v647
    %v683 = vpop.f32.mrf.mxu0
    %v684 = vadd.f32 0.0, %v683
    %v685 = vpop.f32.mrf.mxu0
    %v686 = vpop.f32.mrf.mxu0
    %v687 = vpop.f32.mrf.mxu0
    %688 = vdwg.mxu0
    %v689 = vadd.f32 %v641, %v684
    %v690 = vtanh.pop %v689
    %v691 = vxor.u32 %v689, 2147483648
    %v692 = vmul.f32 %v691, 1.442695
    %v693 = vpow.pop %v692
    %v694 = vadd.f32 %v693, 1.0
    %v695 = vrcp.pop %v694
    %v696 = vmul.f32 1.0, %v695
    %v697 = vsel %vm301, %v690, %v696
    %v698 = vmul.f32 %v697, %v555
    %700 = vrot.lane.b32.xlu0 %v697, 64
    %v701 = vpop.permute.xlu0 %700
    %v703 = vmul.f32 %v697, %v701
    %705 = vrot.lane.b32.xlu0 %v703, 32
    %v706 = vpop.permute.xlu0 %705
    %v708 = vadd.f32 %v698, %v706
    %v709 = vtanh.pop %v708
    %711 = vrot.lane.b32.xlu0 %v709, 64
    %v712 = vpop.permute.xlu0 %711
    %v714 = vmul.f32 %v697, %v712
    %716 = vrot.lane.b32.xlu0 %v714, 32
    %v717 = vpop.permute.xlu0 %716
    %720 = vrot.lane.b32.xlu0 %v639, 64
    %v721 = vpop.permute.xlu0 %720
    %v723 = vsel %vm189, %v717, %v721
    %v724 = vpack.c.bf16 %v723, %v723
    %v726 = vsel %vm415, %v724, 0
    %728 = vmatprep.subr.bf16.mxu0 0
    %729 = vmatpush1.bf16.msra.mxu0 0
    %730 = vmatprep.subr.bf16.mxu0 0
    %731 = vmatpush1.bf16.msra.mxu0 0
    %732 = vmatprep.subr.bf16.mxu0 0
    %733 = vmatpush1.bf16.msra.mxu0 0
    %734 = vmatprep.subr.bf16.mxu0 0
    %735 = vmatpush1.bf16.msra.mxu0 0
    %736 = vmatprep.subr.bf16.mxu0 0
    %737 = vmatpush1.bf16.msra.mxu0 %v410
    %738 = vmatprep.subr.bf16.mxu0 0
    %739 = vmatpush1.bf16.msra.mxu0 %v409
    %740 = vmatprep.subr.bf16.mxu0 0
    %741 = vmatpush1.bf16.msra.mxu0 %v408
    %742 = vmatprep.subr.bf16.mxu0 0
    %743 = vmatpush1.bf16.msra.mxu0 %v407
    %744 = vmatprep.subr.bf16.mxu0 0
    %745 = vmatpush2.bf16.msra.mxu0 0
    %746 = vmatprep.subr.bf16.mxu0 0
    %747 = vmatpush2.bf16.msra.mxu0 0
    %748 = vmatprep.subr.bf16.mxu0 0
    %749 = vmatpush2.bf16.msra.mxu0 0
    %750 = vmatprep.subr.bf16.mxu0 0
    %751 = vmatpush2.bf16.msra.mxu0 0
    %752 = vmatprep.subr.bf16.mxu0 0
    %753 = vmatpush2.bf16.msra.mxu0 0
    %754 = vmatprep.subr.bf16.mxu0 0
    %755 = vmatpush2.bf16.msra.mxu0 0
    %756 = vmatprep.subr.bf16.mxu0 0
    %757 = vmatpush2.bf16.msra.mxu0 0
    %758 = vmatprep.subr.bf16.mxu0 0
    %759 = vmatpush2.bf16.msra.mxu0 0
    %760 = vmatprep.mubr.bf16.mxu0 0
    %761 = vmatmul.mubr.bf16.gmra.mxu0 %v726
    %v762 = vpop.f32.mrf.mxu0
    %v763 = vadd.f32 %v295, %v762
    %v764 = vpop.f32.mrf.mxu0
    %v765 = vpop.f32.mrf.mxu0
    %v766 = vpop.f32.mrf.mxu0
    %767 = vdwg.mxu0
    %v768 = vtanh.pop %v763
    %v769 = vxor.u32 %v763, 2147483648
    %v770 = vmul.f32 %v769, 1.442695
    %v771 = vpow.pop %v770
    %v772 = vadd.f32 %v771, 1.0
    %v773 = vrcp.pop %v772
    %v774 = vmul.f32 1.0, %v773
    %v775 = vsel %vm301, %v768, %v774
    %v776 = vmul.f32 %v775, %v633
    %778 = vrot.lane.b32.xlu0 %v775, 64
    %v779 = vpop.permute.xlu0 %778
    %v781 = vmul.f32 %v775, %v779
    %783 = vrot.lane.b32.xlu0 %v781, 32
    %v784 = vpop.permute.xlu0 %783
    %v786 = vadd.f32 %v776, %v784
    %v787 = vtanh.pop %v786
    %789 = vrot.lane.b32.xlu0 %v787, 64
    %v790 = vpop.permute.xlu0 %789
    %v792 = vmul.f32 %v775, %v790
    %v794 = vrot.slane %v268, 4
    %v796 = vunpack.c.l.bf16 %v794
    %v797 = vadd.f32 %v796, %v288
    %v798 = vpack.c.bf16 %v714, %v714
    %800 = vrot.lane.b32.xlu0 %v798, 32
    %v801 = vpop.permute.xlu0 %800
    %v803 = vsel %vm189, %v801, 0
    %805 = vmatprep.subr.bf16.mxu0 0
    %806 = vmatpush1.bf16.msra.mxu0 0
    %807 = vmatprep.subr.bf16.mxu0 0
    %808 = vmatpush1.bf16.msra.mxu0 0
    %809 = vmatprep.subr.bf16.mxu0 0
    %810 = vmatpush1.bf16.msra.mxu0 0
    %811 = vmatprep.subr.bf16.mxu0 0
    %812 = vmatpush1.bf16.msra.mxu0 0
    %813 = vmatprep.subr.bf16.mxu0 0
    %814 = vmatpush1.bf16.msra.mxu0 0
    %815 = vmatprep.subr.bf16.mxu0 0
    %816 = vmatpush1.bf16.msra.mxu0 0
    %817 = vmatprep.subr.bf16.mxu0 0
    %818 = vmatpush1.bf16.msra.mxu0 %v313
    %819 = vmatprep.subr.bf16.mxu0 0
    %820 = vmatpush1.bf16.msra.mxu0 %v312
    %821 = vmatprep.subr.bf16.mxu0 0
    %822 = vmatpush2.bf16.msra.mxu0 0
    %823 = vmatprep.subr.bf16.mxu0 0
    %824 = vmatpush2.bf16.msra.mxu0 0
    %825 = vmatprep.subr.bf16.mxu0 0
    %826 = vmatpush2.bf16.msra.mxu0 0
    %827 = vmatprep.subr.bf16.mxu0 0
    %828 = vmatpush2.bf16.msra.mxu0 0
    %829 = vmatprep.subr.bf16.mxu0 0
    %830 = vmatpush2.bf16.msra.mxu0 0
    %831 = vmatprep.subr.bf16.mxu0 0
    %832 = vmatpush2.bf16.msra.mxu0 0
    %833 = vmatprep.subr.bf16.mxu0 0
    %834 = vmatpush2.bf16.msra.mxu0 0
    %835 = vmatprep.subr.bf16.mxu0 0
    %836 = vmatpush2.bf16.msra.mxu0 0
    %837 = vmatprep.mubr.bf16.mxu0 0
    %838 = vmatmul.mubr.bf16.gmra.mxu0 %v803
    %v839 = vpop.f32.mrf.mxu0
    %v840 = vadd.f32 0.0, %v839
    %v841 = vpop.f32.mrf.mxu0
    %v842 = vpop.f32.mrf.mxu0
    %v843 = vpop.f32.mrf.mxu0
    %844 = vdwg.mxu0
    %v845 = vadd.f32 %v797, %v840
    %v846 = vtanh.pop %v845
    %v847 = vxor.u32 %v845, 2147483648
    %v848 = vmul.f32 %v847, 1.442695
    %v849 = vpow.pop %v848
    %v850 = vadd.f32 %v849, 1.0
    %v851 = vrcp.pop %v850
    %v852 = vmul.f32 1.0, %v851
    %v853 = vsel %vm301, %v846, %v852
    %v854 = vmul.f32 %v853, %v708
    %856 = vrot.lane.b32.xlu0 %v853, 64
    %v857 = vpop.permute.xlu0 %856
    %v859 = vmul.f32 %v853, %v857
    %861 = vrot.lane.b32.xlu0 %v859, 32
    %v862 = vpop.permute.xlu0 %861
    %v864 = vadd.f32 %v854, %v862
    %v865 = vtanh.pop %v864
    %867 = vrot.lane.b32.xlu0 %v865, 64
    %v868 = vpop.permute.xlu0 %867
    %v870 = vmul.f32 %v853, %v868
    %872 = vrot.lane.b32.xlu0 %v870, 32
    %v873 = vpop.permute.xlu0 %872
    %876 = vrot.lane.b32.xlu0 %v792, 64
    %v877 = vpop.permute.xlu0 %876
    %v879 = vsel %vm189, %v873, %v877
    %v880 = vpack.c.bf16 %v879, %v879
    %v882 = vsel %vm415, %v880, 0
    %884 = vmatprep.subr.bf16.mxu0 0
    %885 = vmatpush1.bf16.msra.mxu0 0
    %886 = vmatprep.subr.bf16.mxu0 0
    %887 = vmatpush1.bf16.msra.mxu0 0
    %888 = vmatprep.subr.bf16.mxu0 0
    %889 = vmatpush1.bf16.msra.mxu0 0
    %890 = vmatprep.subr.bf16.mxu0 0
    %891 = vmatpush1.bf16.msra.mxu0 0
    %892 = vmatprep.subr.bf16.mxu0 0
    %893 = vmatpush1.bf16.msra.mxu0 %v410
    %894 = vmatprep.subr.bf16.mxu0 0
    %895 = vmatpush1.bf16.msra.mxu0 %v409
    %896 = vmatprep.subr.bf16.mxu0 0
    %897 = vmatpush1.bf16.msra.mxu0 %v408
    %898 = vmatprep.subr.bf16.mxu0 0
    %899 = vmatpush1.bf16.msra.mxu0 %v407
    %900 = vmatprep.subr.bf16.mxu0 0
    %901 = vmatpush2.bf16.msra.mxu0 0
    %902 = vmatprep.subr.bf16.mxu0 0
    %903 = vmatpush2.bf16.msra.mxu0 0
    %904 = vmatprep.subr.bf16.mxu0 0
    %905 = vmatpush2.bf16.msra.mxu0 0
    %906 = vmatprep.subr.bf16.mxu0 0
    %907 = vmatpush2.bf16.msra.mxu0 0
    %908 = vmatprep.subr.bf16.mxu0 0
    %909 = vmatpush2.bf16.msra.mxu0 0
    %910 = vmatprep.subr.bf16.mxu0 0
    %911 = vmatpush2.bf16.msra.mxu0 0
    %912 = vmatprep.subr.bf16.mxu0 0
    %913 = vmatpush2.bf16.msra.mxu0 0
    %914 = vmatprep.subr.bf16.mxu0 0
    %915 = vmatpush2.bf16.msra.mxu0 0
    %916 = vmatprep.mubr.bf16.mxu0 0
    %917 = vmatmul.mubr.bf16.gmra.mxu0 %v882
    %v918 = vpop.f32.mrf.mxu0
    %v919 = vadd.f32 %v295, %v918
    %v920 = vpop.f32.mrf.mxu0
    %v921 = vpop.f32.mrf.mxu0
    %v922 = vpop.f32.mrf.mxu0
    %923 = vdwg.mxu0
    %v924 = vtanh.pop %v919
    %v925 = vxor.u32 %v919, 2147483648
    %v926 = vmul.f32 %v925, 1.442695
    %v927 = vpow.pop %v926
    %v928 = vadd.f32 %v927, 1.0
    %v929 = vrcp.pop %v928
    %v930 = vmul.f32 1.0, %v929
    %v931 = vsel %vm301, %v924, %v930
    %v932 = vmul.f32 %v931, %v786
    %934 = vrot.lane.b32.xlu0 %v931, 64
    %v935 = vpop.permute.xlu0 %934
    %v937 = vmul.f32 %v931, %v935
    %939 = vrot.lane.b32.xlu0 %v937, 32
    %v940 = vpop.permute.xlu0 %939
    %v942 = vadd.f32 %v932, %v940
    %v943 = vtanh.pop %v942
    %945 = vrot.lane.b32.xlu0 %v943, 64
    %v946 = vpop.permute.xlu0 %945
    %v948 = vmul.f32 %v931, %v946
    %v949 = vunpack.c.l.bf16 %v269
    %v950 = vadd.f32 %v949, %v288
    %v951 = vpack.c.bf16 %v870, %v870
    %953 = vrot.lane.b32.xlu0 %v951, 32
    %v954 = vpop.permute.xlu0 %953
    %v956 = vsel %vm189, %v954, 0
    %958 = vmatprep.subr.bf16.mxu0 0
    %959 = vmatpush1.bf16.msra.mxu0 0
    %960 = vmatprep.subr.bf16.mxu0 0
    %961 = vmatpush1.bf16.msra.mxu0 0
    %962 = vmatprep.subr.bf16.mxu0 0
    %963 = vmatpush1.bf16.msra.mxu0 0
    %964 = vmatprep.subr.bf16.mxu0 0
    %965 = vmatpush1.bf16.msra.mxu0 0
    %966 = vmatprep.subr.bf16.mxu0 0
    %967 = vmatpush1.bf16.msra.mxu0 0
    %968 = vmatprep.subr.bf16.mxu0 0
    %969 = vmatpush1.bf16.msra.mxu0 0
    %970 = vmatprep.subr.bf16.mxu0 0
    %971 = vmatpush1.bf16.msra.mxu0 %v313
    %972 = vmatprep.subr.bf16.mxu0 0
    %973 = vmatpush1.bf16.msra.mxu0 %v312
    %974 = vmatprep.subr.bf16.mxu0 0
    %975 = vmatpush2.bf16.msra.mxu0 0
    %976 = vmatprep.subr.bf16.mxu0 0
    %977 = vmatpush2.bf16.msra.mxu0 0
    %978 = vmatprep.subr.bf16.mxu0 0
    %979 = vmatpush2.bf16.msra.mxu0 0
    %980 = vmatprep.subr.bf16.mxu0 0
    %981 = vmatpush2.bf16.msra.mxu0 0
    %982 = vmatprep.subr.bf16.mxu0 0
    %983 = vmatpush2.bf16.msra.mxu0 0
    %984 = vmatprep.subr.bf16.mxu0 0
    %985 = vmatpush2.bf16.msra.mxu0 0
    %986 = vmatprep.subr.bf16.mxu0 0
    %987 = vmatpush2.bf16.msra.mxu0 0
    %988 = vmatprep.subr.bf16.mxu0 0
    %989 = vmatpush2.bf16.msra.mxu0 0
    %990 = vmatprep.mubr.bf16.mxu0 0
    %991 = vmatmul.mubr.bf16.gmra.mxu0 %v956
    %v992 = vpop.f32.mrf.mxu0
    %v993 = vadd.f32 0.0, %v992
    %v994 = vpop.f32.mrf.mxu0
    %v995 = vpop.f32.mrf.mxu0
    %v996 = vpop.f32.mrf.mxu0
    %997 = vdwg.mxu0
    %v998 = vadd.f32 %v950, %v993
    %v999 = vtanh.pop %v998
    %v1000 = vxor.u32 %v998, 2147483648
    %v1001 = vmul.f32 %v1000, 1.442695
    %v1002 = vpow.pop %v1001
    %v1003 = vadd.f32 %v1002, 1.0
    %v1004 = vrcp.pop %v1003
    %v1005 = vmul.f32 1.0, %v1004
    %v1006 = vsel %vm301, %v999, %v1005
    %v1007 = vmul.f32 %v1006, %v864
    %1009 = vrot.lane.b32.xlu0 %v1006, 64
    %v1010 = vpop.permute.xlu0 %1009
    %v1012 = vmul.f32 %v1006, %v1010
    %1014 = vrot.lane.b32.xlu0 %v1012, 32
    %v1015 = vpop.permute.xlu0 %1014
    %v1017 = vadd.f32 %v1007, %v1015
    %v1018 = vtanh.pop %v1017
    %1020 = vrot.lane.b32.xlu0 %v1018, 64
    %v1021 = vpop.permute.xlu0 %1020
    %v1023 = vmul.f32 %v1006, %v1021
    %1025 = vrot.lane.b32.xlu0 %v1023, 32
    %v1026 = vpop.permute.xlu0 %1025
    %1029 = vrot.lane.b32.xlu0 %v948, 64
    %v1030 = vpop.permute.xlu0 %1029
    %v1032 = vsel %vm189, %v1026, %v1030
    %v1033 = vpack.c.bf16 %v1032, %v1032
    %v1035 = vsel %vm415, %v1033, 0
    %1037 = vmatprep.subr.bf16.mxu0 0
    %1038 = vmatpush1.bf16.msra.mxu0 0
    %1039 = vmatprep.subr.bf16.mxu0 0
    %1040 = vmatpush1.bf16.msra.mxu0 0
    %1041 = vmatprep.subr.bf16.mxu0 0
    %1042 = vmatpush1.bf16.msra.mxu0 0
    %1043 = vmatprep.subr.bf16.mxu0 0
    %1044 = vmatpush1.bf16.msra.mxu0 0
    %1045 = vmatprep.subr.bf16.mxu0 0
    %1046 = vmatpush1.bf16.msra.mxu0 %v410
    %1047 = vmatprep.subr.bf16.mxu0 0
    %1048 = vmatpush1.bf16.msra.mxu0 %v409
    %1049 = vmatprep.subr.bf16.mxu0 0
    %1050 = vmatpush1.bf16.msra.mxu0 %v408
    %1051 = vmatprep.subr.bf16.mxu0 0
    %1052 = vmatpush1.bf16.msra.mxu0 %v407
    %1053 = vmatprep.subr.bf16.mxu0 0
    %1054 = vmatpush2.bf16.msra.mxu0 0
    %1055 = vmatprep.subr.bf16.mxu0 0
    %1056 = vmatpush2.bf16.msra.mxu0 0
    %1057 = vmatprep.subr.bf16.mxu0 0
    %1058 = vmatpush2.bf16.msra.mxu0 0
    %1059 = vmatprep.subr.bf16.mxu0 0
    %1060 = vmatpush2.bf16.msra.mxu0 0
    %1061 = vmatprep.subr.bf16.mxu0 0
    %1062 = vmatpush2.bf16.msra.mxu0 0
    %1063 = vmatprep.subr.bf16.mxu0 0
    %1064 = vmatpush2.bf16.msra.mxu0 0
    %1065 = vmatprep.subr.bf16.mxu0 0
    %1066 = vmatpush2.bf16.msra.mxu0 0
    %1067 = vmatprep.subr.bf16.mxu0 0
    %1068 = vmatpush2.bf16.msra.mxu0 0
    %1069 = vmatprep.mubr.bf16.mxu0 0
    %1070 = vmatmul.mubr.bf16.gmra.mxu0 %v1035
    %v1071 = vpop.f32.mrf.mxu0
    %v1072 = vadd.f32 %v295, %v1071
    %v1073 = vpop.f32.mrf.mxu0
    %v1074 = vpop.f32.mrf.mxu0
    %v1075 = vpop.f32.mrf.mxu0
    %1076 = vdwg.mxu0
    %v1077 = vtanh.pop %v1072
    %v1078 = vxor.u32 %v1072, 2147483648
    %v1079 = vmul.f32 %v1078, 1.442695
    %v1080 = vpow.pop %v1079
    %v1081 = vadd.f32 %v1080, 1.0
    %v1082 = vrcp.pop %v1081
    %v1083 = vmul.f32 1.0, %v1082
    %v1084 = vsel %vm301, %v1077, %v1083
    %v1085 = vmul.f32 %v1084, %v942
    %1087 = vrot.lane.b32.xlu0 %v1084, 64
    %v1088 = vpop.permute.xlu0 %1087
    %v1090 = vmul.f32 %v1084, %v1088
    %1092 = vrot.lane.b32.xlu0 %v1090, 32
    %v1093 = vpop.permute.xlu0 %1092
    %v1095 = vadd.f32 %v1085, %v1093
    %v1096 = vtanh.pop %v1095
    %1098 = vrot.lane.b32.xlu0 %v1096, 64
    %v1099 = vpop.permute.xlu0 %1098
    %v1101 = vmul.f32 %v1084, %v1099
    %v1103 = vrot.slane %v269, 4
    %v1105 = vunpack.c.l.bf16 %v1103
    %v1106 = vadd.f32 %v1105, %v288
    %v1107 = vpack.c.bf16 %v1023, %v1023
    %1109 = vrot.lane.b32.xlu0 %v1107, 32
    %v1110 = vpop.permute.xlu0 %1109
    %v1112 = vsel %vm189, %v1110, 0
    %1114 = vmatprep.subr.bf16.mxu0 0
    %1115 = vmatpush1.bf16.msra.mxu0 0
    %1116 = vmatprep.subr.bf16.mxu0 0
    %1117 = vmatpush1.bf16.msra.mxu0 0
    %1118 = vmatprep.subr.bf16.mxu0 0
    %1119 = vmatpush1.bf16.msra.mxu0 0
    %1120 = vmatprep.subr.bf16.mxu0 0
    %1121 = vmatpush1.bf16.msra.mxu0 0
    %1122 = vmatprep.subr.bf16.mxu0 0
    %1123 = vmatpush1.bf16.msra.mxu0 0
    %1124 = vmatprep.subr.bf16.mxu0 0
    %1125 = vmatpush1.bf16.msra.mxu0 0
    %1126 = vmatprep.subr.bf16.mxu0 0
    %1127 = vmatpush1.bf16.msra.mxu0 %v313
    %1128 = vmatprep.subr.bf16.mxu0 0
    %1129 = vmatpush1.bf16.msra.mxu0 %v312
    %1130 = vmatprep.subr.bf16.mxu0 0
    %1131 = vmatpush2.bf16.msra.mxu0 0
    %1132 = vmatprep.subr.bf16.mxu0 0
    %1133 = vmatpush2.bf16.msra.mxu0 0
    %1134 = vmatprep.subr.bf16.mxu0 0
    %1135 = vmatpush2.bf16.msra.mxu0 0
    %1136 = vmatprep.subr.bf16.mxu0 0
    %1137 = vmatpush2.bf16.msra.mxu0 0
    %1138 = vmatprep.subr.bf16.mxu0 0
    %1139 = vmatpush2.bf16.msra.mxu0 0
    %1140 = vmatprep.subr.bf16.mxu0 0
    %1141 = vmatpush2.bf16.msra.mxu0 0
    %1142 = vmatprep.subr.bf16.mxu0 0
    %1143 = vmatpush2.bf16.msra.mxu0 0
    %1144 = vmatprep.subr.bf16.mxu0 0
    %1145 = vmatpush2.bf16.msra.mxu0 0
    %1146 = vmatprep.mubr.bf16.mxu0 0
    %1147 = vmatmul.mubr.bf16.gmra.mxu0 %v1112
    %v1148 = vpop.f32.mrf.mxu0
    %v1149 = vadd.f32 0.0, %v1148
    %v1150 = vpop.f32.mrf.mxu0
    %v1151 = vpop.f32.mrf.mxu0
    %v1152 = vpop.f32.mrf.mxu0
    %1153 = vdwg.mxu0
    %v1154 = vadd.f32 %v1106, %v1149
    %v1155 = vtanh.pop %v1154
    %v1156 = vxor.u32 %v1154, 2147483648
    %v1157 = vmul.f32 %v1156, 1.442695
    %v1158 = vpow.pop %v1157
    %v1159 = vadd.f32 %v1158, 1.0
    %v1160 = vrcp.pop %v1159
    %v1161 = vmul.f32 1.0, %v1160
    %v1162 = vsel %vm301, %v1155, %v1161
    %v1163 = vmul.f32 %v1162, %v1017
    %1165 = vrot.lane.b32.xlu0 %v1162, 64
    %v1166 = vpop.permute.xlu0 %1165
    %v1168 = vmul.f32 %v1162, %v1166
    %1170 = vrot.lane.b32.xlu0 %v1168, 32
    %v1171 = vpop.permute.xlu0 %1170
    %v1173 = vadd.f32 %v1163, %v1171
    %v1174 = vtanh.pop %v1173
    %1176 = vrot.lane.b32.xlu0 %v1174, 64
    %v1177 = vpop.permute.xlu0 %1176
    %v1179 = vmul.f32 %v1162, %v1177
    %1181 = vrot.lane.b32.xlu0 %v1179, 32
    %v1182 = vpop.permute.xlu0 %1181
    %1185 = vrot.lane.b32.xlu0 %v1101, 64
    %v1186 = vpop.permute.xlu0 %1185
    %v1188 = vsel %vm189, %v1182, %v1186
    %v1189 = vpack.c.bf16 %v1188, %v1188
    %v1191 = vsel %vm415, %v1189, 0
    %1193 = vmatprep.subr.bf16.mxu0 0
    %1194 = vmatpush1.bf16.msra.mxu0 0
    %1195 = vmatprep.subr.bf16.mxu0 0
    %1196 = vmatpush1.bf16.msra.mxu0 0
    %1197 = vmatprep.subr.bf16.mxu0 0
    %1198 = vmatpush1.bf16.msra.mxu0 0
    %1199 = vmatprep.subr.bf16.mxu0 0
    %1200 = vmatpush1.bf16.msra.mxu0 0
    %1201 = vmatprep.subr.bf16.mxu0 0
    %1202 = vmatpush1.bf16.msra.mxu0 %v410
    %1203 = vmatprep.subr.bf16.mxu0 0
    %1204 = vmatpush1.bf16.msra.mxu0 %v409
    %1205 = vmatprep.subr.bf16.mxu0 0
    %1206 = vmatpush1.bf16.msra.mxu0 %v408
    %1207 = vmatprep.subr.bf16.mxu0 0
    %1208 = vmatpush1.bf16.msra.mxu0 %v407
    %1209 = vmatprep.subr.bf16.mxu0 0
    %1210 = vmatpush2.bf16.msra.mxu0 0
    %1211 = vmatprep.subr.bf16.mxu0 0
    %1212 = vmatpush2.bf16.msra.mxu0 0
    %1213 = vmatprep.subr.bf16.mxu0 0
    %1214 = vmatpush2.bf16.msra.mxu0 0
    %1215 = vmatprep.subr.bf16.mxu0 0
    %1216 = vmatpush2.bf16.msra.mxu0 0
    %1217 = vmatprep.subr.bf16.mxu0 0
    %1218 = vmatpush2.bf16.msra.mxu0 0
    %1219 = vmatprep.subr.bf16.mxu0 0
    %1220 = vmatpush2.bf16.msra.mxu0 0
    %1221 = vmatprep.subr.bf16.mxu0 0
    %1222 = vmatpush2.bf16.msra.mxu0 0
    %1223 = vmatprep.subr.bf16.mxu0 0
    %1224 = vmatpush2.bf16.msra.mxu0 0
    %1225 = vmatprep.mubr.bf16.mxu0 0
    %1226 = vmatmul.mubr.bf16.gmra.mxu0 %v1191
    %v1227 = vpop.f32.mrf.mxu0
    %v1228 = vadd.f32 %v295, %v1227
    %v1229 = vpop.f32.mrf.mxu0
    %v1230 = vpop.f32.mrf.mxu0
    %v1231 = vpop.f32.mrf.mxu0
    %1232 = vdwg.mxu0
    %v1233 = vtanh.pop %v1228
    %v1234 = vxor.u32 %v1228, 2147483648
    %v1235 = vmul.f32 %v1234, 1.442695
    %v1236 = vpow.pop %v1235
    %v1237 = vadd.f32 %v1236, 1.0
    %v1238 = vrcp.pop %v1237
    %v1239 = vmul.f32 1.0, %v1238
    %v1240 = vsel %vm301, %v1233, %v1239
    %v1241 = vmul.f32 %v1240, %v1095
    %1243 = vrot.lane.b32.xlu0 %v1240, 64
    %v1244 = vpop.permute.xlu0 %1243
    %v1246 = vmul.f32 %v1240, %v1244
    %1248 = vrot.lane.b32.xlu0 %v1246, 32
    %v1249 = vpop.permute.xlu0 %1248
    %v1251 = vadd.f32 %v1241, %v1249
    %v1252 = vtanh.pop %v1251
    %1254 = vrot.lane.b32.xlu0 %v1252, 64
    %v1255 = vpop.permute.xlu0 %1254
    %v1257 = vmul.f32 %v1240, %v1255
    %v1258 = vunpack.c.l.bf16 %v270
    %v1259 = vadd.f32 %v1258, %v288
    %v1260 = vpack.c.bf16 %v1179, %v1179
    %1262 = vrot.lane.b32.xlu0 %v1260, 32
    %v1263 = vpop.permute.xlu0 %1262
    %v1265 = vsel %vm189, %v1263, 0
    %1267 = vmatprep.subr.bf16.mxu0 0
    %1268 = vmatpush1.bf16.msra.mxu0 0
    %1269 = vmatprep.subr.bf16.mxu0 0
    %1270 = vmatpush1.bf16.msra.mxu0 0
    %1271 = vmatprep.subr.bf16.mxu0 0
    %1272 = vmatpush1.bf16.msra.mxu0 0
    %1273 = vmatprep.subr.bf16.mxu0 0
    %1274 = vmatpush1.bf16.msra.mxu0 0
    %1275 = vmatprep.subr.bf16.mxu0 0
    %1276 = vmatpush1.bf16.msra.mxu0 0
    %1277 = vmatprep.subr.bf16.mxu0 0
    %1278 = vmatpush1.bf16.msra.mxu0 0
    %1279 = vmatprep.subr.bf16.mxu0 0
    %1280 = vmatpush1.bf16.msra.mxu0 %v313
    %1281 = vmatprep.subr.bf16.mxu0 0
    %1282 = vmatpush1.bf16.msra.mxu0 %v312
    %1283 = vmatprep.subr.bf16.mxu0 0
    %1284 = vmatpush2.bf16.msra.mxu0 0
    %1285 = vmatprep.subr.bf16.mxu0 0
    %1286 = vmatpush2.bf16.msra.mxu0 0
    %1287 = vmatprep.subr.bf16.mxu0 0
    %1288 = vmatpush2.bf16.msra.mxu0 0
    %1289 = vmatprep.subr.bf16.mxu0 0
    %1290 = vmatpush2.bf16.msra.mxu0 0
    %1291 = vmatprep.subr.bf16.mxu0 0
    %1292 = vmatpush2.bf16.msra.mxu0 0
    %1293 = vmatprep.subr.bf16.mxu0 0
    %1294 = vmatpush2.bf16.msra.mxu0 0
    %1295 = vmatprep.subr.bf16.mxu0 0
    %1296 = vmatpush2.bf16.msra.mxu0 0
    %1297 = vmatprep.subr.bf16.mxu0 0
    %1298 = vmatpush2.bf16.msra.mxu0 0
    %1299 = vmatprep.mubr.bf16.mxu0 0
    %1300 = vmatmul.mubr.bf16.gmra.mxu0 %v1265
    %v1301 = vpop.f32.mrf.mxu0
    %v1302 = vadd.f32 0.0, %v1301
    %v1303 = vpop.f32.mrf.mxu0
    %v1304 = vpop.f32.mrf.mxu0
    %v1305 = vpop.f32.mrf.mxu0
    %1306 = vdwg.mxu0
    %v1307 = vadd.f32 %v1259, %v1302
    %v1308 = vtanh.pop %v1307
    %v1309 = vxor.u32 %v1307, 2147483648
    %v1310 = vmul.f32 %v1309, 1.442695
    %v1311 = vpow.pop %v1310
    %v1312 = vadd.f32 %v1311, 1.0
    %v1313 = vrcp.pop %v1312
    %v1314 = vmul.f32 1.0, %v1313
    %v1315 = vsel %vm301, %v1308, %v1314
    %v1316 = vmul.f32 %v1315, %v1173
    %1318 = vrot.lane.b32.xlu0 %v1315, 64
    %v1319 = vpop.permute.xlu0 %1318
    %v1321 = vmul.f32 %v1315, %v1319
    %1323 = vrot.lane.b32.xlu0 %v1321, 32
    %v1324 = vpop.permute.xlu0 %1323
    %v1326 = vadd.f32 %v1316, %v1324
    %v1327 = vtanh.pop %v1326
    %1329 = vrot.lane.b32.xlu0 %v1327, 64
    %v1330 = vpop.permute.xlu0 %1329
    %v1332 = vmul.f32 %v1315, %v1330
    %1334 = vrot.lane.b32.xlu0 %v1332, 32
    %v1335 = vpop.permute.xlu0 %1334
    %1338 = vrot.lane.b32.xlu0 %v1257, 64
    %v1339 = vpop.permute.xlu0 %1338
    %v1341 = vsel %vm189, %v1335, %v1339
    %v1342 = vpack.c.bf16 %v1341, %v1341
    %v1344 = vsel %vm415, %v1342, 0
    %1346 = vmatprep.subr.bf16.mxu0 0
    %1347 = vmatpush1.bf16.msra.mxu0 0
    %1348 = vmatprep.subr.bf16.mxu0 0
    %1349 = vmatpush1.bf16.msra.mxu0 0
    %1350 = vmatprep.subr.bf16.mxu0 0
    %1351 = vmatpush1.bf16.msra.mxu0 0
    %1352 = vmatprep.subr.bf16.mxu0 0
    %1353 = vmatpush1.bf16.msra.mxu0 0
    %1354 = vmatprep.subr.bf16.mxu0 0
    %1355 = vmatpush1.bf16.msra.mxu0 %v410
    %1356 = vmatprep.subr.bf16.mxu0 0
    %1357 = vmatpush1.bf16.msra.mxu0 %v409
    %1358 = vmatprep.subr.bf16.mxu0 0
    %1359 = vmatpush1.bf16.msra.mxu0 %v408
    %1360 = vmatprep.subr.bf16.mxu0 0
    %1361 = vmatpush1.bf16.msra.mxu0 %v407
    %1362 = vmatprep.subr.bf16.mxu0 0
    %1363 = vmatpush2.bf16.msra.mxu0 0
    %1364 = vmatprep.subr.bf16.mxu0 0
    %1365 = vmatpush2.bf16.msra.mxu0 0
    %1366 = vmatprep.subr.bf16.mxu0 0
    %1367 = vmatpush2.bf16.msra.mxu0 0
    %1368 = vmatprep.subr.bf16.mxu0 0
    %1369 = vmatpush2.bf16.msra.mxu0 0
    %1370 = vmatprep.subr.bf16.mxu0 0
    %1371 = vmatpush2.bf16.msra.mxu0 0
    %1372 = vmatprep.subr.bf16.mxu0 0
    %1373 = vmatpush2.bf16.msra.mxu0 0
    %1374 = vmatprep.subr.bf16.mxu0 0
    %1375 = vmatpush2.bf16.msra.mxu0 0
    %1376 = vmatprep.subr.bf16.mxu0 0
    %1377 = vmatpush2.bf16.msra.mxu0 0
    %1378 = vmatprep.mubr.bf16.mxu0 0
    %1379 = vmatmul.mubr.bf16.gmra.mxu0 %v1344
    %v1380 = vpop.f32.mrf.mxu0
    %v1381 = vadd.f32 %v295, %v1380
    %v1382 = vpop.f32.mrf.mxu0
    %v1383 = vpop.f32.mrf.mxu0
    %v1384 = vpop.f32.mrf.mxu0
    %1385 = vdwg.mxu0
    %v1386 = vtanh.pop %v1381
    %v1387 = vxor.u32 %v1381, 2147483648
    %v1388 = vmul.f32 %v1387, 1.442695
    %v1389 = vpow.pop %v1388
    %v1390 = vadd.f32 %v1389, 1.0
    %v1391 = vrcp.pop %v1390
    %v1392 = vmul.f32 1.0, %v1391
    %v1393 = vsel %vm301, %v1386, %v1392
    %v1394 = vmul.f32 %v1393, %v1251
    %1396 = vrot.lane.b32.xlu0 %v1393, 64
    %v1397 = vpop.permute.xlu0 %1396
    %v1399 = vmul.f32 %v1393, %v1397
    %1401 = vrot.lane.b32.xlu0 %v1399, 32
    %v1402 = vpop.permute.xlu0 %1401
    %v1404 = vadd.f32 %v1394, %v1402
    %v1405 = vtanh.pop %v1404
    %1407 = vrot.lane.b32.xlu0 %v1405, 64
    %v1408 = vpop.permute.xlu0 %1407
    %v1410 = vmul.f32 %v1393, %v1408
    %v1412 = vrot.slane %v270, 4
    %v1414 = vunpack.c.l.bf16 %v1412
    %v1415 = vadd.f32 %v1414, %v288
    %v1416 = vpack.c.bf16 %v1332, %v1332
    %1418 = vrot.lane.b32.xlu0 %v1416, 32
    %v1419 = vpop.permute.xlu0 %1418
    %v1421 = vsel %vm189, %v1419, 0
    %1423 = vmatprep.subr.bf16.mxu0 0
    %1424 = vmatpush1.bf16.msra.mxu0 0
    %1425 = vmatprep.subr.bf16.mxu0 0
    %1426 = vmatpush1.bf16.msra.mxu0 0
    %1427 = vmatprep.subr.bf16.mxu0 0
    %1428 = vmatpush1.bf16.msra.mxu0 0
    %1429 = vmatprep.subr.bf16.mxu0 0
    %1430 = vmatpush1.bf16.msra.mxu0 0
    %1431 = vmatprep.subr.bf16.mxu0 0
    %1432 = vmatpush1.bf16.msra.mxu0 0
    %1433 = vmatprep.subr.bf16.mxu0 0
    %1434 = vmatpush1.bf16.msra.mxu0 0
    %1435 = vmatprep.subr.bf16.mxu0 0
    %1436 = vmatpush1.bf16.msra.mxu0 %v313
    %1437 = vmatprep.subr.bf16.mxu0 0
    %1438 = vmatpush1.bf16.msra.mxu0 %v312
    %1439 = vmatprep.subr.bf16.mxu0 0
    %1440 = vmatpush2.bf16.msra.mxu0 0
    %1441 = vmatprep.subr.bf16.mxu0 0
    %1442 = vmatpush2.bf16.msra.mxu0 0
    %1443 = vmatprep.subr.bf16.mxu0 0
    %1444 = vmatpush2.bf16.msra.mxu0 0
    %1445 = vmatprep.subr.bf16.mxu0 0
    %1446 = vmatpush2.bf16.msra.mxu0 0
    %1447 = vmatprep.subr.bf16.mxu0 0
    %1448 = vmatpush2.bf16.msra.mxu0 0
    %1449 = vmatprep.subr.bf16.mxu0 0
    %1450 = vmatpush2.bf16.msra.mxu0 0
    %1451 = vmatprep.subr.bf16.mxu0 0
    %1452 = vmatpush2.bf16.msra.mxu0 0
    %1453 = vmatprep.subr.bf16.mxu0 0
    %1454 = vmatpush2.bf16.msra.mxu0 0
    %1455 = vmatprep.mubr.bf16.mxu0 0
    %1456 = vmatmul.mubr.bf16.gmra.mxu0 %v1421
    %v1457 = vpop.f32.mrf.mxu0
    %v1458 = vadd.f32 0.0, %v1457
    %v1459 = vpop.f32.mrf.mxu0
    %v1460 = vpop.f32.mrf.mxu0
    %v1461 = vpop.f32.mrf.mxu0
    %1462 = vdwg.mxu0
    %v1463 = vadd.f32 %v1415, %v1458
    %v1464 = vtanh.pop %v1463
    %v1465 = vxor.u32 %v1463, 2147483648
    %v1466 = vmul.f32 %v1465, 1.442695
    %v1467 = vpow.pop %v1466
    %v1468 = vadd.f32 %v1467, 1.0
    %v1469 = vrcp.pop %v1468
    %v1470 = vmul.f32 1.0, %v1469
    %v1471 = vsel %vm301, %v1464, %v1470
    %v1472 = vmul.f32 %v1471, %v1326
    %1474 = vrot.lane.b32.xlu0 %v1471, 64
    %v1475 = vpop.permute.xlu0 %1474
    %v1477 = vmul.f32 %v1471, %v1475
    %1479 = vrot.lane.b32.xlu0 %v1477, 32
    %v1480 = vpop.permute.xlu0 %1479
    %v1482 = vadd.f32 %v1472, %v1480
    %v1483 = vtanh.pop %v1482
    %1485 = vrot.lane.b32.xlu0 %v1483, 64
    %v1486 = vpop.permute.xlu0 %1485
    %v1488 = vmul.f32 %v1471, %v1486
    %1490 = vrot.lane.b32.xlu0 %v1488, 32
    %v1491 = vpop.permute.xlu0 %1490
    %1494 = vrot.lane.b32.xlu0 %v1410, 64
    %v1495 = vpop.permute.xlu0 %1494
    %v1497 = vsel %vm189, %v1491, %v1495
    %v1498 = vpack.c.bf16 %v1497, %v1497
    %v1500 = vsel %vm415, %v1498, 0
    %1502 = vmatprep.subr.bf16.mxu0 0
    %1503 = vmatpush1.bf16.msra.mxu0 0
    %1504 = vmatprep.subr.bf16.mxu0 0
    %1505 = vmatpush1.bf16.msra.mxu0 0
    %1506 = vmatprep.subr.bf16.mxu0 0
    %1507 = vmatpush1.bf16.msra.mxu0 0
    %1508 = vmatprep.subr.bf16.mxu0 0
    %1509 = vmatpush1.bf16.msra.mxu0 0
    %1510 = vmatprep.subr.bf16.mxu0 0
    %1511 = vmatpush1.bf16.msra.mxu0 %v410
    %1512 = vmatprep.subr.bf16.mxu0 0
    %1513 = vmatpush1.bf16.msra.mxu0 %v409
    %1514 = vmatprep.subr.bf16.mxu0 0
    %1515 = vmatpush1.bf16.msra.mxu0 %v408
    %1516 = vmatprep.subr.bf16.mxu0 0
    %1517 = vmatpush1.bf16.msra.mxu0 %v407
    %1518 = vmatprep.subr.bf16.mxu0 0
    %1519 = vmatpush2.bf16.msra.mxu0 0
    %1520 = vmatprep.subr.bf16.mxu0 0
    %1521 = vmatpush2.bf16.msra.mxu0 0
    %1522 = vmatprep.subr.bf16.mxu0 0
    %1523 = vmatpush2.bf16.msra.mxu0 0
    %1524 = vmatprep.subr.bf16.mxu0 0
    %1525 = vmatpush2.bf16.msra.mxu0 0
    %1526 = vmatprep.subr.bf16.mxu0 0
    %1527 = vmatpush2.bf16.msra.mxu0 0
    %1528 = vmatprep.subr.bf16.mxu0 0
    %1529 = vmatpush2.bf16.msra.mxu0 0
    %1530 = vmatprep.subr.bf16.mxu0 0
    %1531 = vmatpush2.bf16.msra.mxu0 0
    %1532 = vmatprep.subr.bf16.mxu0 0
    %1533 = vmatpush2.bf16.msra.mxu0 0
    %1534 = vmatprep.mubr.bf16.mxu0 0
    %1535 = vmatmul.mubr.bf16.gmra.mxu0 %v1500
    %v1536 = vpop.f32.mrf.mxu0
    %v1537 = vadd.f32 %v295, %v1536
    %v1538 = vpop.f32.mrf.mxu0
    %v1539 = vpop.f32.mrf.mxu0
    %v1540 = vpop.f32.mrf.mxu0
    %1541 = vdwg.mxu0
    %v1542 = vtanh.pop %v1537
    %v1543 = vxor.u32 %v1537, 2147483648
    %v1544 = vmul.f32 %v1543, 1.442695
    %v1545 = vpow.pop %v1544
    %v1546 = vadd.f32 %v1545, 1.0
    %v1547 = vrcp.pop %v1546
    %v1548 = vmul.f32 1.0, %v1547
    %v1549 = vsel %vm301, %v1542, %v1548
    %v1550 = vmul.f32 %v1549, %v1404
    %1552 = vrot.lane.b32.xlu0 %v1549, 64
    %v1553 = vpop.permute.xlu0 %1552
    %v1555 = vmul.f32 %v1549, %v1553
    %1557 = vrot.lane.b32.xlu0 %v1555, 32
    %v1558 = vpop.permute.xlu0 %1557
    %v1560 = vadd.f32 %v1550, %v1558
    %v1561 = vtanh.pop %v1560
    %1563 = vrot.lane.b32.xlu0 %v1561, 64
    %v1564 = vpop.permute.xlu0 %1563
    %v1566 = vmul.f32 %v1549, %v1564
    %1568 = vrot.lane.b32.xlu0 %v1566, 64
    %v1569 = vpop.permute.xlu0 %1568
    %1572 = vrot.lane.b32.xlu0 %v1482, 32
    %v1573 = vpop.permute.xlu0 %1572
    %1576 = vrot.lane.b32.xlu0 %v1560, 64
    %v1577 = vpop.permute.xlu0 %1576
    %v1579 = vsel %vm189, %v1491, %v1569
    %v1580 = vsel %vm415, %v1579, %v1573
    %vm1581 = vcmask 785408
    %v1582 = vsel %vm1581, %v1580, %v1577
    %v1583 = vpack.c.bf16 %v1582, %v1582
    %v1584 = vld [vmem:[%s7] sm:$0xf]
    %v1585 = vld [vmem:[%s7 + $0x4] sm:$0xf]
    %v1586 = vld [vmem:[%s7 + $0x8] sm:$0xf]
    %v1587 = vld [vmem:[%s7 + $0xc] sm:$0xf]
    %v1588 = vld [vmem:[%s7 + $0x10] sm:$0xf]
    %v1589 = vld [vmem:[%s7 + $0x14] sm:$0xf]
    %v1590 = vld [vmem:[%s7 + $0x18] sm:$0xf]
    %v1591 = vld [vmem:[%s7 + $0x1c] sm:$0xf]
    %v1592 = vld [vmem:[%s7 + $0x20] sm:$0xf]
    %v1593 = vld [vmem:[%s7 + $0x24] sm:$0xf]
    %v1594 = vld [vmem:[%s7 + $0x28] sm:$0xf]
    %v1595 = vld [vmem:[%s7 + $0x2c] sm:$0xf]
    %v1596 = vld [vmem:[%s7 + $0x30] sm:$0xf]
    %v1597 = vld [vmem:[%s7 + $0x34] sm:$0xf]
    %v1598 = vld [vmem:[%s7 + $0x38] sm:$0xf]
    %v1599 = vld [vmem:[%s7 + $0x3c] sm:$0xf]
    %v1600 = vld [vmem:[#allocation13] sm:$0x1]
    %v1602 = vlaneseq
    %v1603 = vshrl.u32 %v1602, 7
    %v1604 = vsub.s32 0, %v1603
    %v1605 = vrot.slane %v1600, %v1604
    %v1623 = vunpack.c.l.b16 %v1584
    %v1624 = vunpack.c.l.b16 %v1585
    %v1625 = vunpack.c.l.b16 %v1586
    %v1626 = vunpack.c.l.b16 %v1587
    %v1627 = vunpack.c.l.b16 %v1588
    %v1628 = vunpack.c.l.b16 %v1589
    %v1629 = vunpack.c.l.b16 %v1590
    %v1630 = vunpack.c.l.b16 %v1591
    %v1631 = vunpack.c.l.b16 %v1592
    %v1632 = vunpack.c.l.b16 %v1593
    %v1633 = vunpack.c.l.b16 %v1594
    %v1634 = vunpack.c.l.b16 %v1595
    %v1635 = vunpack.c.l.b16 %v1596
    %v1636 = vunpack.c.l.b16 %v1597
    %v1637 = vunpack.c.l.b16 %v1598
    %v1638 = vunpack.c.l.b16 %v1599
    %v1639 = vpack.c.b16 %v1624, %v1623
    %v1640 = vpack.c.b16 %v1626, %v1625
    %v1641 = vpack.c.b16 %v1628, %v1627
    %v1642 = vpack.c.b16 %v1630, %v1629
    %v1643 = vpack.c.b16 %v1632, %v1631
    %v1644 = vpack.c.b16 %v1634, %v1633
    %v1645 = vpack.c.b16 %v1636, %v1635
    %v1646 = vpack.c.b16 %v1638, %v1637
    %1655 = vmatprep.subr.bf16.mxu0 0
    %1656 = vmatpush1.bf16.msra.mxu0 %v1646
    %1657 = vmatprep.subr.bf16.mxu0 0
    %1658 = vmatpush1.bf16.msra.mxu0 %v1645
    %1659 = vmatprep.subr.bf16.mxu0 0
    %1660 = vmatpush1.bf16.msra.mxu0 %v1644
    %1661 = vmatprep.subr.bf16.mxu0 0
    %1662 = vmatpush1.bf16.msra.mxu0 %v1643
    %1663 = vmatprep.subr.bf16.mxu0 0
    %1664 = vmatpush1.bf16.msra.mxu0 %v1642
    %1665 = vmatprep.subr.bf16.mxu0 0
    %1666 = vmatpush1.bf16.msra.mxu0 %v1641
    %1667 = vmatprep.subr.bf16.mxu0 0
    %1668 = vmatpush1.bf16.msra.mxu0 %v1640
    %1669 = vmatprep.subr.bf16.mxu0 0
    %1670 = vmatpush1.bf16.msra.mxu0 %v1639
    %1671 = vmatprep.subr.bf16.mxu0 0
    %1672 = vmatpush2.bf16.msra.mxu0 0
    %1673 = vmatprep.subr.bf16.mxu0 0
    %1674 = vmatpush2.bf16.msra.mxu0 0
    %1675 = vmatprep.subr.bf16.mxu0 0
    %1676 = vmatpush2.bf16.msra.mxu0 0
    %1677 = vmatprep.subr.bf16.mxu0 0
    %1678 = vmatpush2.bf16.msra.mxu0 0
    %1679 = vmatprep.subr.bf16.mxu0 0
    %1680 = vmatpush2.bf16.msra.mxu0 0
    %1681 = vmatprep.subr.bf16.mxu0 0
    %1682 = vmatpush2.bf16.msra.mxu0 0
    %1683 = vmatprep.subr.bf16.mxu0 0
    %1684 = vmatpush2.bf16.msra.mxu0 0
    %1685 = vmatprep.subr.bf16.mxu0 0
    %1686 = vmatpush2.bf16.msra.mxu0 0
    %1687 = vmatprep.mubr.bf16.mxu0 0
    %1688 = vmatmul.mubr.bf16.gmra.mxu0 %v1583
    %v1689 = vpop.f32.mrf.mxu0
    %v1690 = vadd.f32 %v1605, %v1689
    %v1691 = vpop.f32.mrf.mxu0
    %v1692 = vpop.f32.mrf.mxu0
    %v1693 = vpop.f32.mrf.mxu0
    %1694 = vdwg.mxu0
    %v1695 = vtanh.pop %v1690
    %v1696 = vld [vmem:[#allocation2] sm:$0xff]
    %v1697 = vpack.c.bf16 %v1696, %v1696
    %v1698 = vld [vmem:[%s9] sm:$0xf]
    %v1699 = vld [vmem:[%s9 + $0x4] sm:$0xf]
    %v1700 = vld [vmem:[%s9 + $0x8] sm:$0xf]
    %v1701 = vld [vmem:[%s9 + $0xc] sm:$0xf]
    %v1702 = vld [vmem:[%s9 + $0x10] sm:$0xf]
    %v1703 = vld [vmem:[%s9 + $0x14] sm:$0xf]
    %v1704 = vld [vmem:[%s9 + $0x18] sm:$0xf]
    %v1705 = vld [vmem:[%s9 + $0x1c] sm:$0xf]
    %v1706 = vld [vmem:[%s10] sm:$0x1]
    %v1708 = vlaneseq
    %v1709 = vshrl.u32 %v1708, 7
    %v1710 = vsub.s32 0, %v1709
    %v1711 = vrot.slane %v1706, %v1710
    %v1721 = vunpack.c.l.b16 %v1698
    %v1722 = vunpack.c.l.b16 %v1699
    %v1723 = vunpack.c.l.b16 %v1700
    %v1724 = vunpack.c.l.b16 %v1701
    %v1725 = vunpack.c.l.b16 %v1702
    %v1726 = vunpack.c.l.b16 %v1703
    %v1727 = vunpack.c.l.b16 %v1704
    %v1728 = vunpack.c.l.b16 %v1705
    %v1729 = vpack.c.b16 %v1722, %v1721
    %v1730 = vpack.c.b16 %v1724, %v1723
    %v1731 = vpack.c.b16 %v1726, %v1725
    %v1732 = vpack.c.b16 %v1728, %v1727
    %v1738 = vsel %vm415, %v1697, 0
    %1740 = vmatprep.subr.bf16.mxu0 0
    %1741 = vmatpush1.bf16.msra.mxu0 0
    %1742 = vmatprep.subr.bf16.mxu0 0
    %1743 = vmatpush1.bf16.msra.mxu0 0
    %1744 = vmatprep.subr.bf16.mxu0 0
    %1745 = vmatpush1.bf16.msra.mxu0 0
    %1746 = vmatprep.subr.bf16.mxu0 0
    %1747 = vmatpush1.bf16.msra.mxu0 0
    %1748 = vmatprep.subr.bf16.mxu0 0
    %1749 = vmatpush1.bf16.msra.mxu0 %v1732
    %1750 = vmatprep.subr.bf16.mxu0 0
    %1751 = vmatpush1.bf16.msra.mxu0 %v1731
    %1752 = vmatprep.subr.bf16.mxu0 0
    %1753 = vmatpush1.bf16.msra.mxu0 %v1730
    %1754 = vmatprep.subr.bf16.mxu0 0
    %1755 = vmatpush1.bf16.msra.mxu0 %v1729
    %1756 = vmatprep.subr.bf16.mxu0 0
    %1757 = vmatpush2.bf16.msra.mxu0 0
    %1758 = vmatprep.subr.bf16.mxu0 0
    %1759 = vmatpush2.bf16.msra.mxu0 0
    %1760 = vmatprep.subr.bf16.mxu0 0
    %1761 = vmatpush2.bf16.msra.mxu0 0
    %1762 = vmatprep.subr.bf16.mxu0 0
    %1763 = vmatpush2.bf16.msra.mxu0 0
    %1764 = vmatprep.subr.bf16.mxu0 0
    %1765 = vmatpush2.bf16.msra.mxu0 0
    %1766 = vmatprep.subr.bf16.mxu0 0
    %1767 = vmatpush2.bf16.msra.mxu0 0
    %1768 = vmatprep.subr.bf16.mxu0 0
    %1769 = vmatpush2.bf16.msra.mxu0 0
    %1770 = vmatprep.subr.bf16.mxu0 0
    %1771 = vmatpush2.bf16.msra.mxu0 0
    %1772 = vmatprep.mubr.bf16.mxu0 0
    %1773 = vmatmul.mubr.bf16.gmra.mxu0 %v1738
    %v1774 = vpop.f32.mrf.mxu0
    %v1775 = vadd.f32 %v1711, %v1774
    %v1776 = vpop.f32.mrf.mxu0
    %v1777 = vpop.f32.mrf.mxu0
    %v1778 = vpop.f32.mrf.mxu0
    %1779 = vdwg.mxu0
    %v1780 = vtanh.pop %v1775
    %v1781 = vmul.f32 %v1695, %v1780
    %v1782 = vpack.c.bf16 %v1781, %v1781
    %v1783 = vld [vmem:[#allocation14] sm:$0xf]
    %v1784 = vld [vmem:[#allocation14 + $0x4] sm:$0xf]
    %v1785 = vld [vmem:[#allocation14 + $0x8] sm:$0xf]
    %v1786 = vld [vmem:[#allocation14 + $0xc] sm:$0xf]
    %v1787 = vld [vmem:[%s12] sm:$0x1]
    %v1789 = vlaneseq
    %v1790 = vshrl.u32 %v1789, 7
    %v1791 = vsub.s32 0, %v1790
    %v1792 = vrot.slane %v1787, %v1791
    %v1798 = vunpack.c.l.b16 %v1783
    %v1799 = vunpack.c.l.b16 %v1784
    %v1800 = vunpack.c.l.b16 %v1785
    %v1801 = vunpack.c.l.b16 %v1786
    %v1802 = vpack.c.b16 %v1799, %v1798
    %v1803 = vpack.c.b16 %v1801, %v1800
    %v1807 = vsel %vm189, %v1782, 0
    %1809 = vmatprep.subr.bf16.mxu0 0
    %1810 = vmatpush1.bf16.msra.mxu0 0
    %1811 = vmatprep.subr.bf16.mxu0 0
    %1812 = vmatpush1.bf16.msra.mxu0 0
    %1813 = vmatprep.subr.bf16.mxu0 0
    %1814 = vmatpush1.bf16.msra.mxu0 0
    %1815 = vmatprep.subr.bf16.mxu0 0
    %1816 = vmatpush1.bf16.msra.mxu0 0
    %1817 = vmatprep.subr.bf16.mxu0 0
    %1818 = vmatpush1.bf16.msra.mxu0 0
    %1819 = vmatprep.subr.bf16.mxu0 0
    %1820 = vmatpush1.bf16.msra.mxu0 0
    %1821 = vmatprep.subr.bf16.mxu0 0
    %1822 = vmatpush1.bf16.msra.mxu0 %v1803
    %1823 = vmatprep.subr.bf16.mxu0 0
    %1824 = vmatpush1.bf16.msra.mxu0 %v1802
    %1825 = vmatprep.subr.bf16.mxu0 0
    %1826 = vmatpush2.bf16.msra.mxu0 0
    %1827 = vmatprep.subr.bf16.mxu0 0
    %1828 = vmatpush2.bf16.msra.mxu0 0
    %1829 = vmatprep.subr.bf16.mxu0 0
    %1830 = vmatpush2.bf16.msra.mxu0 0
    %1831 = vmatprep.subr.bf16.mxu0 0
    %1832 = vmatpush2.bf16.msra.mxu0 0
    %1833 = vmatprep.subr.bf16.mxu0 0
    %1834 = vmatpush2.bf16.msra.mxu0 0
    %1835 = vmatprep.subr.bf16.mxu0 0
    %1836 = vmatpush2.bf16.msra.mxu0 0
    %1837 = vmatprep.subr.bf16.mxu0 0
    %1838 = vmatpush2.bf16.msra.mxu0 0
    %1839 = vmatprep.subr.bf16.mxu0 0
    %1840 = vmatpush2.bf16.msra.mxu0 0
    %1841 = vmatprep.mubr.bf16.mxu0 0
    %1842 = vmatmul.mubr.bf16.gmra.mxu0 %v1807
    %v1843 = vpop.f32.mrf.mxu0
    %v1844 = vadd.f32 %v1792, %v1843
    %v1845 = vpop.f32.mrf.mxu0
    %v1846 = vpop.f32.mrf.mxu0
    %v1847 = vpop.f32.mrf.mxu0
    %1848 = vdwg.mxu0
    %v1849 = vtanh.pop %v1844
    %v1850 = vpack.c.bf16 %v1849, %v1849
    %v1851 = vld [vmem:[%s13] sm:$0xf]
    %v1852 = vld [vmem:[%s13 + $0x4] sm:$0xf]
    %v1853 = vld [vmem:[%s13 + $0x8] sm:$0xf]
    %v1854 = vld [vmem:[%s13 + $0xc] sm:$0xf]
    %v1855 = vld [vmem:[%s13 + $0x10] sm:$0xf]
    %v1856 = vld [vmem:[%s13 + $0x14] sm:$0xf]
    %v1857 = vld [vmem:[%s13 + $0x18] sm:$0xf]
    %v1858 = vld [vmem:[%s13 + $0x1c] sm:$0xf]
    %v1859 = vld [vmem:[%s13 + $0x20] sm:$0xf]
    %v1860 = vld [vmem:[%s13 + $0x24] sm:$0xf]
    %v1861 = vld [vmem:[%s13 + $0x28] sm:$0xf]
    %v1862 = vld [vmem:[%s13 + $0x2c] sm:$0xf]
    %v1863 = vld [vmem:[%s13 + $0x30] sm:$0xf]
    %v1864 = vld [vmem:[%s13 + $0x34] sm:$0xf]
    %v1865 = vld [vmem:[%s13 + $0x38] sm:$0xf]
    %v1866 = vld [vmem:[%s13 + $0x3c] sm:$0xf]
    %v1867 = vld [vmem:[%s14] sm:$0x1]
    %v1869 = vlaneseq
    %v1870 = vshrl.u32 %v1869, 7
    %v1871 = vsub.s32 0, %v1870
    %v1872 = vrot.slane %v1867, %v1871
    %v1890 = vunpack.c.l.b16 %v1851
    %v1891 = vunpack.c.l.b16 %v1852
    %v1892 = vunpack.c.l.b16 %v1853
    %v1893 = vunpack.c.l.b16 %v1854
    %v1894 = vunpack.c.l.b16 %v1855
    %v1895 = vunpack.c.l.b16 %v1856
    %v1896 = vunpack.c.l.b16 %v1857
    %v1897 = vunpack.c.l.b16 %v1858
    %v1898 = vunpack.c.l.b16 %v1859
    %v1899 = vunpack.c.l.b16 %v1860
    %v1900 = vunpack.c.l.b16 %v1861
    %v1901 = vunpack.c.l.b16 %v1862
    %v1902 = vunpack.c.l.b16 %v1863
    %v1903 = vunpack.c.l.b16 %v1864
    %v1904 = vunpack.c.l.b16 %v1865
    %v1905 = vunpack.c.l.b16 %v1866
    %v1906 = vpack.c.b16 %v1891, %v1890
    %v1907 = vpack.c.b16 %v1893, %v1892
    %v1908 = vpack.c.b16 %v1895, %v1894
    %v1909 = vpack.c.b16 %v1897, %v1896
    %v1910 = vpack.c.b16 %v1899, %v1898
    %v1911 = vpack.c.b16 %v1901, %v1900
    %v1912 = vpack.c.b16 %v1903, %v1902
    %v1913 = vpack.c.b16 %v1905, %v1904
    %1922 = vmatprep.subr.bf16.mxu0 0
    %1923 = vmatpush1.bf16.msra.mxu0 %v1913
    %1924 = vmatprep.subr.bf16.mxu0 0
    %1925 = vmatpush1.bf16.msra.mxu0 %v1912
    %1926 = vmatprep.subr.bf16.mxu0 0
    %1927 = vmatpush1.bf16.msra.mxu0 %v1911
    %1928 = vmatprep.subr.bf16.mxu0 0
    %1929 = vmatpush1.bf16.msra.mxu0 %v1910
    %1930 = vmatprep.subr.bf16.mxu0 0
    %1931 = vmatpush1.bf16.msra.mxu0 %v1909
    %1932 = vmatprep.subr.bf16.mxu0 0
    %1933 = vmatpush1.bf16.msra.mxu0 %v1908
    %1934 = vmatprep.subr.bf16.mxu0 0
    %1935 = vmatpush1.bf16.msra.mxu0 %v1907
    %1936 = vmatprep.subr.bf16.mxu0 0
    %1937 = vmatpush1.bf16.msra.mxu0 %v1906
    %1938 = vmatprep.subr.bf16.mxu0 0
    %1939 = vmatpush2.bf16.msra.mxu0 0
    %1940 = vmatprep.subr.bf16.mxu0 0
    %1941 = vmatpush2.bf16.msra.mxu0 0
    %1942 = vmatprep.subr.bf16.mxu0 0
    %1943 = vmatpush2.bf16.msra.mxu0 0
    %1944 = vmatprep.subr.bf16.mxu0 0
    %1945 = vmatpush2.bf16.msra.mxu0 0
    %1946 = vmatprep.subr.bf16.mxu0 0
    %1947 = vmatpush2.bf16.msra.mxu0 0
    %1948 = vmatprep.subr.bf16.mxu0 0
    %1949 = vmatpush2.bf16.msra.mxu0 0
    %1950 = vmatprep.subr.bf16.mxu0 0
    %1951 = vmatpush2.bf16.msra.mxu0 0
    %1952 = vmatprep.subr.bf16.mxu0 0
    %1953 = vmatpush2.bf16.msra.mxu0 0
    %1954 = vmatprep.mubr.bf16.mxu0 0
    %1955 = vmatmul.mubr.bf16.gmra.mxu0 %v1850
    %v1956 = vpop.f32.mrf.mxu0
    %v1957 = vadd.f32 %v1872, %v1956
    %v1958 = vpop.f32.mrf.mxu0
    %v1959 = vpop.f32.mrf.mxu0
    %v1960 = vpop.f32.mrf.mxu0
    %1961 = vdwg.mxu0
    %1962 = vst [vmem:[#allocation16] sm:$0xff] %v1957
    // Predicated region
    $region94: #{tpu_custom_call.1} parent=1 // pred_check
      _
    $region95: #{tpu_custom_call.1} parent=1 // pred_check_branch
      %1964 = sbr.rel (0) target = $region97
    $region96: #{tpu_custom_call.1} parent=1 // pred_region
      %s1966 = ssub.s32 128, 128
      %1967 = vsyncadd [#allocation4], %s1966
      %s1969 = sshll.u32 [#allocation16], 4
      %s1970 = int_to_ptr.vmem [resolvable:$true] %s1969
      %1972 = dma.vmem_to_hbm [thread:$0]  %s1970, 128, %s15, [#allocation4]
    $region97: #{tpu_custom_call.1} parent=1 // pred_fallthru
      _
    // Predicated region
    $region98: #{tpu_custom_call.1} parent=1 // pred_check
      _
    $region99: #{tpu_custom_call.1} parent=1 // pred_check_branch
      %1974 = sbr.rel (0) target = $region101
    $region100: #{tpu_custom_call.1} parent=1 // pred_region
      %1975 = dma.done [#allocation4], 128
    $region101: #{tpu_custom_call.1} parent=1 // pred_fallthru
      _
    %1976 = vsyncpa [#allocation3], 1
    %1977 = vsyncpa [#allocation6], 1
    %1978 = vsyncpa [#allocation9], 1
    %1979 = vsyncpa [#allocation12], 1
    %1980 = vsyncpa [#allocation15], 1
    %1981 = vsyncpa [#allocation4], 1

</llo_original>
